<compile_context>
chip_gen: v5e
topology: v5e:2x2
jax: 0.10.0
libtpu: 0.0.40
codegen_flags: <defaults>
</compile_context>

<pallas_src>
import functools

import jax
import jax.numpy as jnp
from jax.experimental import pallas as pl
from jax.experimental.pallas import tpu as pltpu


# Tile sizes: sized so 2 buffers x (TM*K + TM*TN) blocks stay far inside v7x's
# 64 MiB physical VMEM and v5e's 16 MiB scoped default at realistic CARES sizes.
_TM = 512
_TN = 256
_VMEM_LIMIT = 32 * 1024 * 1024


def _pick_k_tile(k):
    # Only tile K when it divides exactly (avoids garbage accumulation from a
    # ragged reduction block); K values in this model are small anyway.
    for tk in (2048, 1024, 512):
        if k > tk and k % tk == 0:
            return tk
    return k


# ----------------------------------------------------------------------------
# Pallas kernels
# ----------------------------------------------------------------------------
def _matmul_bias_act_kernel(x_ref, w_ref, b_ref, o_ref, acc_ref, *, act):
    """o = act(x @ w + b). bf16 MXU operands, f32 accumulation in VMEM scratch."""

    @pl.when(pl.program_id(2) == 0)
    def _init():
        acc_ref[...] = jnp.zeros_like(acc_ref)

    acc_ref[...] += jnp.dot(
        x_ref[...], w_ref[...], preferred_element_type=jnp.float32
    )

    @pl.when(pl.program_id(2) == pl.num_programs(2) - 1)
    def _finalize():
        y = acc_ref[...] + b_ref[...]
        if act == "relu":
            y = jnp.maximum(y, 0.0)
        elif act == "tanh":
            y = jnp.tanh(y)
        o_ref[...] = y.astype(o_ref.dtype)


def _fc_ln_tanh_kernel(x_ref, w_ref, b_ref, g_ref, beta_ref, o_ref):
    """o = tanh(LayerNorm(x @ w + b)) — fused encoder head (f32 LN math)."""
    y = jnp.dot(x_ref[...], w_ref[...], preferred_element_type=jnp.float32)
    y = y + b_ref[...]
    mean = jnp.mean(y, axis=-1, keepdims=True)
    var = jnp.mean(jnp.square(y - mean), axis=-1, keepdims=True)
    y = (y - mean) * jax.lax.rsqrt(var + 1e-5)
    o_ref[...] = jnp.tanh(y * g_ref[...] + beta_ref[...]).astype(o_ref.dtype)


# ----------------------------------------------------------------------------
# Pallas wrappers
# ----------------------------------------------------------------------------
def matmul_bias_act(x, w, b, *, act="none", out_dtype=jnp.float32):
    """x: [M, K], w: [K, N], b: [N] -> act(x @ w + b) in [M, N]."""
    m, k = x.shape
    k2, n = w.shape
    assert k == k2 and b.shape == (n,)

    x = x.astype(jnp.bfloat16)
    w = w.astype(jnp.bfloat16)
    b2 = b.astype(jnp.float32).reshape(1, n)

    tm = min(_TM, m)
    tn = min(_TN, n)
    tk = _pick_k_tile(k)
    grid = (pl.cdiv(m, tm), pl.cdiv(n, tn), k // tk)

    out_bytes = m * n * jnp.dtype(out_dtype).itemsize
    cost = pl.CostEstimate(
        flops=2 * m * k * n,
        transcendentals=0,
        bytes_accessed=(m * k + k * n) * 2 + out_bytes + n * 4,
    )

    return pl.pallas_call(
        functools.partial(_matmul_bias_act_kernel, act=act),
        out_shape=jax.ShapeDtypeStruct((m, n), out_dtype),
        grid=grid,
        in_specs=[
            pl.BlockSpec((tm, tk), lambda i, j, kk: (i, kk)),
            pl.BlockSpec((tk, tn), lambda i, j, kk: (kk, j)),   # VMEM-resident weights
            pl.BlockSpec((1, tn), lambda i, j, kk: (0, j)),
        ],
        out_specs=pl.BlockSpec((tm, tn), lambda i, j, kk: (i, j)),
        scratch_shapes=[pltpu.VMEM((tm, tn), jnp.float32)],
        compiler_params=pltpu.CompilerParams(
            dimension_semantics=("parallel", "parallel", "arbitrary"),
            vmem_limit_bytes=_VMEM_LIMIT,
        ),
        cost_estimate=cost,
    )(x, w, b2)


def fc_ln_tanh(x, w, b, gamma, beta):
    """x: [M, K], w: [K, N] -> tanh(LayerNorm(x @ w + b)) in [M, N] (f32)."""
    m, k = x.shape
    _, n = w.shape
    x = x.astype(jnp.bfloat16)
    w = w.astype(jnp.bfloat16)

    tm = min(_TM, m)
    grid = (pl.cdiv(m, tm),)
    cost = pl.CostEstimate(
        flops=2 * m * k * n + 10 * m * n,
        transcendentals=m * n,
        bytes_accessed=(m * k + k * n) * 2 + (m * n + 3 * n) * 4,
    )

    return pl.pallas_call(
        _fc_ln_tanh_kernel,
        out_shape=jax.ShapeDtypeStruct((m, n), jnp.float32),
        grid=grid,
        in_specs=[
            pl.BlockSpec((tm, k), lambda i: (i, 0)),
            pl.BlockSpec((k, n), lambda i: (0, 0)),
            pl.BlockSpec((1, n), lambda i: (0, 0)),
            pl.BlockSpec((1, n), lambda i: (0, 0)),
            pl.BlockSpec((1, n), lambda i: (0, 0)),
        ],
        out_specs=pl.BlockSpec((tm, n), lambda i: (i, 0)),
        compiler_params=pltpu.CompilerParams(
            dimension_semantics=("parallel",),
            vmem_limit_bytes=_VMEM_LIMIT,
        ),
        cost_estimate=cost,
    )(
        x,
        w,
        b.astype(jnp.float32).reshape(1, n),
        gamma.astype(jnp.float32).reshape(1, n),
        beta.astype(jnp.float32).reshape(1, n),
    )


# ----------------------------------------------------------------------------
# Conv layers: im2col (XLA glue) feeding the tiled Pallas matmul kernel
# ----------------------------------------------------------------------------
def _im2col(x_nhwc, k, stride):
    n, h, w, c = x_nhwc.shape
    ho = (h - k) // stride + 1
    wo = (w - k) // stride + 1
    taps = []
    for di in range(k):
        for dj in range(k):
            taps.append(
                x_nhwc[
                    :,
                    di : di + stride * (ho - 1) + 1 : stride,
                    dj : dj + stride * (wo - 1) + 1 : stride,
                    :,
                ]
            )
    return jnp.concatenate(taps, axis=-1), ho, wo  # [N, Ho, Wo, k*k*C]


def conv2d(x_nhwc, w_mat, b, *, ksize, stride, act, out_dtype):
    """Conv2d (no padding) with weights pre-reshaped to [k*k*C_in, C_out]."""
    n = x_nhwc.shape[0]
    c_out = w_mat.shape[1]
    patches, ho, wo = _im2col(x_nhwc, ksize, stride)
    out = matmul_bias_act(
        patches.reshape(n * ho * wo, -1), w_mat, b, act=act, out_dtype=out_dtype
    )
    return out.reshape(n, ho, wo, c_out)


def conv_transpose2d_s2(x_nhwc, w_packed, b4, c_out, *, act, out_dtype):
    """ConvTranspose2d(k=3, stride=2, padding=0, output_padding=1) via
    sub-pixel (4-phase) decomposition: pad(1) -> 2x2-tap matmul -> pixel shuffle."""
    n, h, w, _ = x_nhwc.shape
    xp = jnp.pad(x_nhwc, ((0, 0), (1, 1), (1, 1), (0, 0)))
    y = conv2d(xp, w_packed, b4, ksize=2, stride=1, act=act, out_dtype=out_dtype)
    ho, wo = h + 1, w + 1
    y = y.reshape(n, ho, wo, 2, 2, c_out)          # (n, a, b, ry, rx, co)
    y = jnp.transpose(y, (0, 1, 3, 2, 4, 5))       # (n, a, ry, b, rx, co)
    return y.reshape(n, 2 * ho, 2 * wo, c_out)     # out[2a+ry, 2b+rx] = phase(ry,rx)


# ----------------------------------------------------------------------------
# Weight re-packing helpers (done once at init)
# ----------------------------------------------------------------------------
def _conv_w_to_mat(w_oihw):
    co, ci, kh, kw = w_oihw.shape
    return jnp.transpose(w_oihw, (2, 3, 1, 0)).reshape(kh * kw * ci, co)


def _pack_convT_s2_subpixel(w_iohw):
    """Pack ConvTranspose2d [C_in, C_out, 3, 3] into [4*C_in, 4*C_out] for the
    sub-pixel decomposition (rows = (dy,dx,ci) im2col taps of the pad-1 input,
    cols = (ry,rx,co) output phases)."""
    c_in, c_out, k, _ = w_iohw.shape
    assert k == 3

    def kidx(d, r):  # tap offset d in {0,1}, output phase r in {0,1}
        if r == 0:
            return 2 - 2 * d
        return 1 if d == 1 else None  # phase 1 only touches kernel row/col 1

    w4 = jnp.zeros((2, 2, c_in, 2, 2, c_out), w_iohw.dtype)
    for dy in range(2):
        for dx in range(2):
            for ry in range(2):
                for rx in range(2):
                    ky, kx = kidx(dy, ry), kidx(dx, rx)
                    if ky is None or kx is None:
                        continue
                    w4 = w4.at[dy, dx, :, ry, rx, :].set(w_iohw[:, :, ky, kx])
    return w4.reshape(4 * c_in, 4 * c_out)


# ----------------------------------------------------------------------------
# Autoencoder
# ----------------------------------------------------------------------------
class PallasAutoencoder:
    NUM_FILTERS = 32

    def __init__(self, observation_size, latent_dim, key):
        c, h, w = observation_size
        self.observation_size = observation_size
        self.latent_dim = latent_dim
        nf = self.NUM_FILTERS

        # spatial sizes after the two encoder convs (k=3, s=2 then s=1, no pad)
        h1, w1 = (h - 3) // 2 + 1, (w - 3) // 2 + 1
        h2, w2 = h1 - 2, w1 - 2
        self.feat_hw = (h2, w2)
        flat = nf * h2 * w2

        ks = jax.random.split(key, 6)

        def init(k_, shape, fan_in):
            return jax.random.normal(k_, shape, jnp.float32) / jnp.sqrt(float(fan_in))

        # ---- torch-layout parameters -------------------------------------
        conv1_w = init(ks[0], (nf, c, 3, 3), c * 9)            # Conv2d OIHW
        conv2_w = init(ks[1], (nf, nf, 3, 3), nf * 9)
        enc_fc_w = init(ks[2], (flat, latent_dim), flat)       # [in, out]
        dec_fc_w = init(ks[3], (latent_dim, flat), latent_dim)
        deconv1_w = init(ks[4], (nf, nf, 3, 3), nf * 9)        # ConvT [in, out, kh, kw]
        deconv2_w = init(ks[5], (nf, c, 3, 3), nf * 9)

        # ---- fold into matmul-ready (NHWC) layouts, weights in bf16 -------
        self.conv1_wmat = _conv_w_to_mat(conv1_w).astype(jnp.bfloat16)
        self.conv1_b = jnp.zeros((nf,), jnp.float32)
        self.conv2_wmat = _conv_w_to_mat(conv2_w).astype(jnp.bfloat16)
        self.conv2_b = jnp.zeros((nf,), jnp.float32)

        # fold NCHW-flatten -> NHWC-flatten permutation into the FC weights
        enc_fold = jnp.transpose(
            enc_fc_w.reshape(nf, h2, w2, latent_dim), (1, 2, 0, 3)
        ).reshape(flat, latent_dim)
        self.enc_fc_wmat = enc_fold.astype(jnp.bfloat16)
        self.enc_fc_b = jnp.zeros((latent_dim,), jnp.float32)
        self.ln_gamma = jnp.ones((latent_dim,), jnp.float32)
        self.ln_beta = jnp.zeros((latent_dim,), jnp.float32)

        dec_fold = jnp.transpose(
            dec_fc_w.reshape(latent_dim, nf, h2, w2), (0, 2, 3, 1)
        ).reshape(latent_dim, flat)
        self.dec_fc_wmat = dec_fold.astype(jnp.bfloat16)
        dec_fc_b = jnp.zeros((flat,), jnp.float32)
        self.dec_fc_b = jnp.transpose(
            dec_fc_b.reshape(nf, h2, w2), (1, 2, 0)
        ).reshape(flat)

        # stride-1 ConvTranspose == conv with flipped kernel on a pad-2 input
        deconv1_conv_w = jnp.transpose(deconv1_w[:, :, ::-1, ::-1], (1, 0, 2, 3))
        self.deconv1_wmat = _conv_w_to_mat(deconv1_conv_w).astype(jnp.bfloat16)
        self.deconv1_b = jnp.zeros((nf,), jnp.float32)

        # stride-2 ConvTranspose packed for the sub-pixel decomposition
        self.deconv2_wmat = _pack_convT_s2_subpixel(deconv2_w).astype(jnp.bfloat16)
        self.deconv2_b4 = jnp.tile(jnp.zeros((c,), jnp.float32), 4)  # per-phase bias

    # -----------------------------------------------------------------------
    def encode(self, x_nchw):
        x = jnp.transpose(x_nchw, (0, 2, 3, 1)).astype(jnp.bfloat16)  # NCHW -> NHWC
        h = conv2d(x, self.conv1_wmat, self.conv1_b,
                   ksize=3, stride=2, act="relu", out_dtype=jnp.bfloat16)
        h = conv2d(h, self.conv2_wmat, self.conv2_b,
                   ksize=3, stride=1, act="relu", out_dtype=jnp.bfloat16)
        n = h.shape[0]
        # NHWC flatten is free; NCHW permutation already folded into enc_fc_wmat
        z = fc_ln_tanh(h.reshape(n, -1), self.enc_fc_wmat, self.enc_fc_b,
                       self.ln_gamma, self.ln_beta)
        return z

    def decode(self, z):
        nf = self.NUM_FILTERS
        c = self.observation_size[0]
        h2, w2 = self.feat_hw
        n = z.shape[0]

        h = matmul_bias_act(z, self.dec_fc_wmat, self.dec_fc_b,
                            act="relu", out_dtype=jnp.bfloat16)
        h = h.reshape(n, h2, w2, nf)  # directly NHWC (permutation folded into weights)

        # ConvTranspose2d(32,32,3,stride=1): pad-2 + flipped-kernel conv
        hp = jnp.pad(h, ((0, 0), (2, 2), (2, 2), (0, 0)))
        h = conv2d(hp, self.deconv1_wmat, self.deconv1_b,
                   ksize=3, stride=1, act="relu", out_dtype=jnp.bfloat16)

        # ConvTranspose2d(32,C,3,stride=2,output_padding=1): sub-pixel decomposition
        r = conv_transpose2d_s2(h, self.deconv2_wmat, self.deconv2_b4, c,
                                act="none", out_dtype=jnp.float32)
        return jnp.transpose(r, (0, 3, 1, 2))  # NHWC -> NCHW

    def forward(self, observation, detach_cnn=False, detach_output=False):
        z = self.encode(observation)
        if detach_cnn:
            z = jax.lax.stop_gradient(z)
        recon = self.decode(z)
        if detach_output:
            recon = jax.lax.stop_gradient(recon)
        # TODO(synk): loss_function / update_autoencoder (training-time) are not part
        # of the forward hot path and are not implemented here.
        return recon, z


if __name__ == "__main__":
    key = jax.random.PRNGKey(0)
    k_param, k_obs = jax.random.split(key)

    observation_size = (4, 16, 16)  # (C, H, W)
    latent_dim = 32
    batch = 2

    model = PallasAutoencoder(observation_size, latent_dim, k_param)
    obs = jax.random.normal(k_obs, (batch,) + observation_size, jnp.float32)

    recon, z = jax.jit(model.forward)(obs)
    jax.block_until_ready((recon, z))

    assert recon.shape == (batch,) + observation_size, recon.shape
    assert z.shape == (batch, latent_dim), z.shape
    assert bool(jnp.all(jnp.isfinite(recon))) and bool(jnp.all(jnp.isfinite(z)))
    print("KERNEL_OK")
</pallas_src>

<mosaic_0001>
module attributes {stable_mosaic.version = 11 : i64} {
  func.func @_matmul_bias_act_kernel(%arg0: i32, %arg1: i32, %arg2: i32, %arg3: memref<98x36xbf16, #tpu.memory_space<vmem>>, %arg4: memref<36x32xbf16, #tpu.memory_space<vmem>>, %arg5: memref<1x32xf32, #tpu.memory_space<vmem>>, %arg6: memref<98x32xbf16, #tpu.memory_space<vmem>>, %arg7: memref<98x32xf32, #tpu.memory_space<vmem>>) attributes {dimension_semantics = [#tpu.dimension_semantics<parallel>, #tpu.dimension_semantics<parallel>, #tpu.dimension_semantics<arbitrary>], iteration_bounds = array<i64: 1, 1, 1>, scalar_prefetch = 0 : i64, scratch_operands = 1 : i64, tpu.core_type = #tpu.core_type<tc>, window_params = [{transform_indices = @transform_0, window_bounds = array<i64: 98, 36>}, {transform_indices = @transform_1, window_bounds = array<i64: 36, 32>}, {transform_indices = @transform_2, window_bounds = array<i64: 1, 32>}, {transform_indices = @transform_3, window_bounds = array<i64: 98, 32>}]} {
    %c0_i32 = arith.constant 0 : i32
    %0 = arith.cmpi eq, %arg2, %c0_i32 : i32
    %1 = arith.extui %0 : i1 to i32
    %c0_i32_0 = arith.constant 0 : i32
    %2 = arith.cmpi ne, %1, %c0_i32_0 : i32
    scf.if %2 {
      %cst_10 = arith.constant 0.000000e+00 : f32
      %12 = vector.broadcast %cst_10 : f32 to vector<98x32xf32>
      %c0_11 = arith.constant 0 : index
      %c0_12 = arith.constant 0 : index
      %13 = vector.load %arg7[%c0_11, %c0_12] : memref<98x32xf32, #tpu.memory_space<vmem>>, vector<98x32xf32>
      tpu.vector_store %arg7[%c0_11, %c0_12], %12 {strides = array<i32>} : memref<98x32xf32, #tpu.memory_space<vmem>>, vector<98x32xf32>,
    } else {
    }
    %c0 = arith.constant 0 : index
    %c0_1 = arith.constant 0 : index
    %3 = vector.load %arg7[%c0, %c0_1] : memref<98x32xf32, #tpu.memory_space<vmem>>, vector<98x32xf32>
    %c0_2 = arith.constant 0 : index
    %c0_3 = arith.constant 0 : index
    %4 = vector.load %arg3[%c0_2, %c0_3] : memref<98x36xbf16, #tpu.memory_space<vmem>>, vector<98x36xbf16>
    %c0_4 = arith.constant 0 : index
    %c0_5 = arith.constant 0 : index
    %5 = vector.load %arg4[%c0_4, %c0_5] : memref<36x32xbf16, #tpu.memory_space<vmem>>, vector<36x32xbf16>
    %cst = arith.constant dense<0.000000e+00> : vector<98x32xf32>
    %6 = tpu.matmul %4, %5, %cst {dimension_numbers = #tpu.dot_dimension_numbers<[1], [0], [0], [1], [0, 0, 1, 1], [], []>} : vector<98x36xbf16>, vector<36x32xbf16>, vector<98x32xf32> -> vector<98x32xf32>
    %7 = arith.addf %3, %6 : vector<98x32xf32>
    %c0_6 = arith.constant 0 : index
    %c0_7 = arith.constant 0 : index
    %8 = vector.load %arg7[%c0_6, %c0_7] : memref<98x32xf32, #tpu.memory_space<vmem>>, vector<98x32xf32>
    tpu.vector_store %arg7[%c0_6, %c0_7], %7 {strides = array<i32>} : memref<98x32xf32, #tpu.memory_space<vmem>>, vector<98x32xf32>,
    %c0_i32_8 = arith.constant 0 : i32
    %9 = arith.cmpi eq, %arg2, %c0_i32_8 : i32
    %10 = arith.extui %9 : i1 to i32
    %c0_i32_9 = arith.constant 0 : i32
    %11 = arith.cmpi ne, %10, %c0_i32_9 : i32
    scf.if %11 {
      %c0_10 = arith.constant 0 : index
      %c0_11 = arith.constant 0 : index
      %12 = vector.load %arg7[%c0_10, %c0_11] : memref<98x32xf32, #tpu.memory_space<vmem>>, vector<98x32xf32>
      %c0_12 = arith.constant 0 : index
      %c0_13 = arith.constant 0 : index
      %13 = vector.load %arg5[%c0_12, %c0_13] : memref<1x32xf32, #tpu.memory_space<vmem>>, vector<1x32xf32>
      %14 = vector.broadcast %13 : vector<1x32xf32> to vector<98x32xf32>
      %15 = arith.addf %12, %14 : vector<98x32xf32>
      %cst_14 = arith.constant 0.000000e+00 : f32
      %16 = vector.broadcast %cst_14 : f32 to vector<98x32xf32>
      %17 = arith.maximumf %15, %16 : vector<98x32xf32>
      %18 = arith.truncf %17 : vector<98x32xf32> to vector<98x32xbf16>
      %c0_15 = arith.constant 0 : index
      %c0_16 = arith.constant 0 : index
      %19 = vector.load %arg6[%c0_15, %c0_16] : memref<98x32xbf16, #tpu.memory_space<vmem>>, vector<98x32xbf16>
      tpu.vector_store %arg6[%c0_15, %c0_16], %18 {strides = array<i32>} : memref<98x32xbf16, #tpu.memory_space<vmem>>, vector<98x32xbf16>,
    } else {
    }
    return
  }
  func.func @transform_0(%arg0: i32, %arg1: i32, %arg2: i32) -> (i32, i32) {
    %c0_i32 = arith.constant 0 : i32
    return %arg0, %arg2 : i32, i32
  }
  func.func @transform_1(%arg0: i32, %arg1: i32, %arg2: i32) -> (i32, i32) {
    %c0_i32 = arith.constant 0 : i32
    return %arg2, %arg1 : i32, i32
  }
  func.func @transform_2(%arg0: i32, %arg1: i32, %arg2: i32) -> (i32, i32) {
    %c0_i32 = arith.constant 0 : i32
    %c0_i32_0 = arith.constant 0 : i32
    return %c0_i32, %arg1 : i32, i32
  }
  func.func @transform_3(%arg0: i32, %arg1: i32, %arg2: i32) -> (i32, i32) {
    %c0_i32 = arith.constant 0 : i32
    return %arg0, %arg1 : i32, i32
  }
}

module attributes {stable_mosaic.version = 11 : i64} {
  func.func @_matmul_bias_act_kernel(%arg0: i32, %arg1: i32, %arg2: i32, %arg3: memref<50x288xbf16, #tpu.memory_space<vmem>>, %arg4: memref<288x32xbf16, #tpu.memory_space<vmem>>, %arg5: memref<1x32xf32, #tpu.memory_space<vmem>>, %arg6: memref<50x32xbf16, #tpu.memory_space<vmem>>, %arg7: memref<50x32xf32, #tpu.memory_space<vmem>>) attributes {dimension_semantics = [#tpu.dimension_semantics<parallel>, #tpu.dimension_semantics<parallel>, #tpu.dimension_semantics<arbitrary>], iteration_bounds = array<i64: 1, 1, 1>, scalar_prefetch = 0 : i64, scratch_operands = 1 : i64, tpu.core_type = #tpu.core_type<tc>, window_params = [{transform_indices = @transform_0, window_bounds = array<i64: 50, 288>}, {transform_indices = @transform_1, window_bounds = array<i64: 288, 32>}, {transform_indices = @transform_2, window_bounds = array<i64: 1, 32>}, {transform_indices = @transform_3, window_bounds = array<i64: 50, 32>}]} {
    %c0_i32 = arith.constant 0 : i32
    %0 = arith.cmpi eq, %arg2, %c0_i32 : i32
    %1 = arith.extui %0 : i1 to i32
    %c0_i32_0 = arith.constant 0 : i32
    %2 = arith.cmpi ne, %1, %c0_i32_0 : i32
    scf.if %2 {
      %cst_10 = arith.constant 0.000000e+00 : f32
      %12 = vector.broadcast %cst_10 : f32 to vector<50x32xf32>
      %c0_11 = arith.constant 0 : index
      %c0_12 = arith.constant 0 : index
      %13 = vector.load %arg7[%c0_11, %c0_12] : memref<50x32xf32, #tpu.memory_space<vmem>>, vector<50x32xf32>
      tpu.vector_store %arg7[%c0_11, %c0_12], %12 {strides = array<i32>} : memref<50x32xf32, #tpu.memory_space<vmem>>, vector<50x32xf32>,
    } else {
    }
    %c0 = arith.constant 0 : index
    %c0_1 = arith.constant 0 : index
    %3 = vector.load %arg7[%c0, %c0_1] : memref<50x32xf32, #tpu.memory_space<vmem>>, vector<50x32xf32>
    %c0_2 = arith.constant 0 : index
    %c0_3 = arith.constant 0 : index
    %4 = vector.load %arg3[%c0_2, %c0_3] : memref<50x288xbf16, #tpu.memory_space<vmem>>, vector<50x288xbf16>
    %c0_4 = arith.constant 0 : index
    %c0_5 = arith.constant 0 : index
    %5 = vector.load %arg4[%c0_4, %c0_5] : memref<288x32xbf16, #tpu.memory_space<vmem>>, vector<288x32xbf16>
    %cst = arith.constant dense<0.000000e+00> : vector<50x32xf32>
    %6 = tpu.matmul %4, %5, %cst {dimension_numbers = #tpu.dot_dimension_numbers<[1], [0], [0], [1], [0, 0, 1, 1], [], []>} : vector<50x288xbf16>, vector<288x32xbf16>, vector<50x32xf32> -> vector<50x32xf32>
    %7 = arith.addf %3, %6 : vector<50x32xf32>
    %c0_6 = arith.constant 0 : index
    %c0_7 = arith.constant 0 : index
    %8 = vector.load %arg7[%c0_6, %c0_7] : memref<50x32xf32, #tpu.memory_space<vmem>>, vector<50x32xf32>
    tpu.vector_store %arg7[%c0_6, %c0_7], %7 {strides = array<i32>} : memref<50x32xf32, #tpu.memory_space<vmem>>, vector<50x32xf32>,
    %c0_i32_8 = arith.constant 0 : i32
    %9 = arith.cmpi eq, %arg2, %c0_i32_8 : i32
    %10 = arith.extui %9 : i1 to i32
    %c0_i32_9 = arith.constant 0 : i32
    %11 = arith.cmpi ne, %10, %c0_i32_9 : i32
    scf.if %11 {
      %c0_10 = arith.constant 0 : index
      %c0_11 = arith.constant 0 : index
      %12 = vector.load %arg7[%c0_10, %c0_11] : memref<50x32xf32, #tpu.memory_space<vmem>>, vector<50x32xf32>
      %c0_12 = arith.constant 0 : index
      %c0_13 = arith.constant 0 : index
      %13 = vector.load %arg5[%c0_12, %c0_13] : memref<1x32xf32, #tpu.memory_space<vmem>>, vector<1x32xf32>
      %14 = vector.broadcast %13 : vector<1x32xf32> to vector<50x32xf32>
      %15 = arith.addf %12, %14 : vector<50x32xf32>
      %cst_14 = arith.constant 0.000000e+00 : f32
      %16 = vector.broadcast %cst_14 : f32 to vector<50x32xf32>
      %17 = arith.maximumf %15, %16 : vector<50x32xf32>
      %18 = arith.truncf %17 : vector<50x32xf32> to vector<50x32xbf16>
      %c0_15 = arith.constant 0 : index
      %c0_16 = arith.constant 0 : index
      %19 = vector.load %arg6[%c0_15, %c0_16] : memref<50x32xbf16, #tpu.memory_space<vmem>>, vector<50x32xbf16>
      tpu.vector_store %arg6[%c0_15, %c0_16], %18 {strides = array<i32>} : memref<50x32xbf16, #tpu.memory_space<vmem>>, vector<50x32xbf16>,
    } else {
    }
    return
  }
  func.func @transform_0(%arg0: i32, %arg1: i32, %arg2: i32) -> (i32, i32) {
    %c0_i32 = arith.constant 0 : i32
    return %arg0, %arg2 : i32, i32
  }
  func.func @transform_1(%arg0: i32, %arg1: i32, %arg2: i32) -> (i32, i32) {
    %c0_i32 = arith.constant 0 : i32
    return %arg2, %arg1 : i32, i32
  }
  func.func @transform_2(%arg0: i32, %arg1: i32, %arg2: i32) -> (i32, i32) {
    %c0_i32 = arith.constant 0 : i32
    %c0_i32_0 = arith.constant 0 : i32
    return %c0_i32, %arg1 : i32, i32
  }
  func.func @transform_3(%arg0: i32, %arg1: i32, %arg2: i32) -> (i32, i32) {
    %c0_i32 = arith.constant 0 : i32
    return %arg0, %arg1 : i32, i32
  }
}

module attributes {stable_mosaic.version = 11 : i64} {
  func.func @_fc_ln_tanh_kernel(%arg0: i32, %arg1: memref<2x800xbf16, #tpu.memory_space<vmem>>, %arg2: memref<800x32xbf16, #tpu.memory_space<vmem>>, %arg3: memref<1x32xf32, #tpu.memory_space<vmem>>, %arg4: memref<1x32xf32, #tpu.memory_space<vmem>>, %arg5: memref<1x32xf32, #tpu.memory_space<vmem>>, %arg6: memref<2x32xf32, #tpu.memory_space<vmem>>) attributes {dimension_semantics = [#tpu.dimension_semantics<parallel>], iteration_bounds = array<i64: 1>, scalar_prefetch = 0 : i64, scratch_operands = 0 : i64, tpu.core_type = #tpu.core_type<tc>, window_params = [{transform_indices = @transform_0, window_bounds = array<i64: 2, 800>}, {pipeline_mode = #tpu.pipeline_mode<synchronous>, transform_indices = @transform_1, window_bounds = array<i64: 800, 32>}, {pipeline_mode = #tpu.pipeline_mode<synchronous>, transform_indices = @transform_2, window_bounds = array<i64: 1, 32>}, {pipeline_mode = #tpu.pipeline_mode<synchronous>, transform_indices = @transform_3, window_bounds = array<i64: 1, 32>}, {pipeline_mode = #tpu.pipeline_mode<synchronous>, transform_indices = @transform_4, window_bounds = array<i64: 1, 32>}, {transform_indices = @transform_5, window_bounds = array<i64: 2, 32>}]} {
    %c0 = arith.constant 0 : index
    %c0_0 = arith.constant 0 : index
    %0 = vector.load %arg1[%c0, %c0_0] : memref<2x800xbf16, #tpu.memory_space<vmem>>, vector<2x800xbf16>
    %c0_1 = arith.constant 0 : index
    %c0_2 = arith.constant 0 : index
    %1 = vector.load %arg2[%c0_1, %c0_2] : memref<800x32xbf16, #tpu.memory_space<vmem>>, vector<800x32xbf16>
    %cst = arith.constant dense<0.000000e+00> : vector<2x32xf32>
    %2 = tpu.matmul %0, %1, %cst {dimension_numbers = #tpu.dot_dimension_numbers<[1], [0], [0], [1], [0, 0, 1, 1], [], []>} : vector<2x800xbf16>, vector<800x32xbf16>, vector<2x32xf32> -> vector<2x32xf32>
    %c0_3 = arith.constant 0 : index
    %c0_4 = arith.constant 0 : index
    %3 = vector.load %arg3[%c0_3, %c0_4] : memref<1x32xf32, #tpu.memory_space<vmem>>, vector<1x32xf32>
    %4 = vector.broadcast %3 : vector<1x32xf32> to vector<2x32xf32>
    %5 = arith.addf %2, %4 : vector<2x32xf32>
    %cst_5 = arith.constant dense<0.000000e+00> : vector<2xf32>
    %6 = vector.multi_reduction <add>, %5, %cst_5 [1] : vector<2x32xf32> to vector<2xf32>
    %7 = vector.shape_cast %6 : vector<2xf32> to vector<2x1xf32>
    %cst_6 = arith.constant 3.200000e+01 : f32
    %8 = vector.broadcast %cst_6 : f32 to vector<2x1xf32>
    %9 = arith.divf %7, %8 : vector<2x1xf32>
    %10 = vector.broadcast %9 : vector<2x1xf32> to vector<2x32xf32>
    %11 = arith.subf %5, %10 : vector<2x32xf32>
    %12 = arith.mulf %11, %11 : vector<2x32xf32>
    %cst_7 = arith.constant dense<0.000000e+00> : vector<2xf32>
    %13 = vector.multi_reduction <add>, %12, %cst_7 [1] : vector<2x32xf32> to vector<2xf32>
    %14 = vector.shape_cast %13 : vector<2xf32> to vector<2x1xf32>
    %cst_8 = arith.constant 3.200000e+01 : f32
    %15 = vector.broadcast %cst_8 : f32 to vector<2x1xf32>
    %16 = arith.divf %14, %15 : vector<2x1xf32>
    %17 = vector.broadcast %9 : vector<2x1xf32> to vector<2x32xf32>
    %18 = arith.subf %5, %17 : vector<2x32xf32>
    %cst_9 = arith.constant 9.99999974E-6 : f32
    %19 = vector.broadcast %cst_9 : f32 to vector<2x1xf32>
    %20 = arith.addf %16, %19 : vector<2x1xf32>
    %21 = math.rsqrt %20 : vector<2x1xf32>
    %22 = vector.broadcast %21 : vector<2x1xf32> to vector<2x32xf32>
    %23 = arith.mulf %18, %22 : vector<2x32xf32>
    %c0_10 = arith.constant 0 : index
    %c0_11 = arith.constant 0 : index
    %24 = vector.load %arg4[%c0_10, %c0_11] : memref<1x32xf32, #tpu.memory_space<vmem>>, vector<1x32xf32>
    %25 = vector.broadcast %24 : vector<1x32xf32> to vector<2x32xf32>
    %26 = arith.mulf %23, %25 : vector<2x32xf32>
    %c0_12 = arith.constant 0 : index
    %c0_13 = arith.constant 0 : index
    %27 = vector.load %arg5[%c0_12, %c0_13] : memref<1x32xf32, #tpu.memory_space<vmem>>, vector<1x32xf32>
    %28 = vector.broadcast %27 : vector<1x32xf32> to vector<2x32xf32>
    %29 = arith.addf %26, %28 : vector<2x32xf32>
    %30 = math.tanh %29 : vector<2x32xf32>
    %c0_14 = arith.constant 0 : index
    %c0_15 = arith.constant 0 : index
    %31 = vector.load %arg6[%c0_14, %c0_15] : memref<2x32xf32, #tpu.memory_space<vmem>>, vector<2x32xf32>
    tpu.vector_store %arg6[%c0_14, %c0_15], %30 {strides = array<i32>} : memref<2x32xf32, #tpu.memory_space<vmem>>, vector<2x32xf32>,
    return
  }
  func.func @transform_0(%arg0: i32) -> (i32, i32) {
    %c0_i32 = arith.constant 0 : i32
    %c0_i32_0 = arith.constant 0 : i32
    return %arg0, %c0_i32 : i32, i32
  }
  func.func @transform_1(%arg0: i32) -> (i32, i32) {
    %c0_i32 = arith.constant 0 : i32
    %c0_i32_0 = arith.constant 0 : i32
    %c0_i32_1 = arith.constant 0 : i32
    return %c0_i32, %c0_i32_0 : i32, i32
  }
  func.func @transform_2(%arg0: i32) -> (i32, i32) {
    %c0_i32 = arith.constant 0 : i32
    %c0_i32_0 = arith.constant 0 : i32
    %c0_i32_1 = arith.constant 0 : i32
    return %c0_i32, %c0_i32_0 : i32, i32
  }
  func.func @transform_3(%arg0: i32) -> (i32, i32) {
    %c0_i32 = arith.constant 0 : i32
    %c0_i32_0 = arith.constant 0 : i32
    %c0_i32_1 = arith.constant 0 : i32
    return %c0_i32, %c0_i32_0 : i32, i32
  }
  func.func @transform_4(%arg0: i32) -> (i32, i32) {
    %c0_i32 = arith.constant 0 : i32
    %c0_i32_0 = arith.constant 0 : i32
    %c0_i32_1 = arith.constant 0 : i32
    return %c0_i32, %c0_i32_0 : i32, i32
  }
  func.func @transform_5(%arg0: i32) -> (i32, i32) {
    %c0_i32 = arith.constant 0 : i32
    %c0_i32_0 = arith.constant 0 : i32
    return %arg0, %c0_i32 : i32, i32
  }
}

module attributes {stable_mosaic.version = 11 : i64} {
  func.func @_matmul_bias_act_kernel(%arg0: i32, %arg1: i32, %arg2: i32, %arg3: memref<2x32xbf16, #tpu.memory_space<vmem>>, %arg4: memref<32x256xbf16, #tpu.memory_space<vmem>>, %arg5: memref<1x256xf32, #tpu.memory_space<vmem>>, %arg6: memref<2x256xbf16, #tpu.memory_space<vmem>>, %arg7: memref<2x256xf32, #tpu.memory_space<vmem>>) attributes {dimension_semantics = [#tpu.dimension_semantics<parallel>, #tpu.dimension_semantics<parallel>, #tpu.dimension_semantics<arbitrary>], iteration_bounds = array<i64: 1, 4, 1>, scalar_prefetch = 0 : i64, scratch_operands = 1 : i64, tpu.core_type = #tpu.core_type<tc>, window_params = [{transform_indices = @transform_0, window_bounds = array<i64: 2, 32>}, {transform_indices = @transform_1, window_bounds = array<i64: 32, 256>}, {transform_indices = @transform_2, window_bounds = array<i64: 1, 256>}, {transform_indices = @transform_3, window_bounds = array<i64: 2, 256>}]} {
    %c0_i32 = arith.constant 0 : i32
    %0 = arith.cmpi eq, %arg2, %c0_i32 : i32
    %1 = arith.extui %0 : i1 to i32
    %c0_i32_0 = arith.constant 0 : i32
    %2 = arith.cmpi ne, %1, %c0_i32_0 : i32
    scf.if %2 {
      %cst_10 = arith.constant 0.000000e+00 : f32
      %12 = vector.broadcast %cst_10 : f32 to vector<2x256xf32>
      %c0_11 = arith.constant 0 : index
      %c0_12 = arith.constant 0 : index
      %13 = vector.load %arg7[%c0_11, %c0_12] : memref<2x256xf32, #tpu.memory_space<vmem>>, vector<2x256xf32>
      tpu.vector_store %arg7[%c0_11, %c0_12], %12 {strides = array<i32>} : memref<2x256xf32, #tpu.memory_space<vmem>>, vector<2x256xf32>,
    } else {
    }
    %c0 = arith.constant 0 : index
    %c0_1 = arith.constant 0 : index
    %3 = vector.load %arg7[%c0, %c0_1] : memref<2x256xf32, #tpu.memory_space<vmem>>, vector<2x256xf32>
    %c0_2 = arith.constant 0 : index
    %c0_3 = arith.constant 0 : index
    %4 = vector.load %arg3[%c0_2, %c0_3] : memref<2x32xbf16, #tpu.memory_space<vmem>>, vector<2x32xbf16>
    %c0_4 = arith.constant 0 : index
    %c0_5 = arith.constant 0 : index
    %5 = vector.load %arg4[%c0_4, %c0_5] : memref<32x256xbf16, #tpu.memory_space<vmem>>, vector<32x256xbf16>
    %cst = arith.constant dense<0.000000e+00> : vector<2x256xf32>
    %6 = tpu.matmul %4, %5, %cst {dimension_numbers = #tpu.dot_dimension_numbers<[1], [0], [0], [1], [0, 0, 1, 1], [], []>} : vector<2x32xbf16>, vector<32x256xbf16>, vector<2x256xf32> -> vector<2x256xf32>
    %7 = arith.addf %3, %6 : vector<2x256xf32>
    %c0_6 = arith.constant 0 : index
    %c0_7 = arith.constant 0 : index
    %8 = vector.load %arg7[%c0_6, %c0_7] : memref<2x256xf32, #tpu.memory_space<vmem>>, vector<2x256xf32>
    tpu.vector_store %arg7[%c0_6, %c0_7], %7 {strides = array<i32>} : memref<2x256xf32, #tpu.memory_space<vmem>>, vector<2x256xf32>,
    %c0_i32_8 = arith.constant 0 : i32
    %9 = arith.cmpi eq, %arg2, %c0_i32_8 : i32
    %10 = arith.extui %9 : i1 to i32
    %c0_i32_9 = arith.constant 0 : i32
    %11 = arith.cmpi ne, %10, %c0_i32_9 : i32
    scf.if %11 {
      %c0_10 = arith.constant 0 : index
      %c0_11 = arith.constant 0 : index
      %12 = vector.load %arg7[%c0_10, %c0_11] : memref<2x256xf32, #tpu.memory_space<vmem>>, vector<2x256xf32>
      %c0_12 = arith.constant 0 : index
      %c0_13 = arith.constant 0 : index
      %13 = vector.load %arg5[%c0_12, %c0_13] : memref<1x256xf32, #tpu.memory_space<vmem>>, vector<1x256xf32>
      %14 = vector.broadcast %13 : vector<1x256xf32> to vector<2x256xf32>
      %15 = arith.addf %12, %14 : vector<2x256xf32>
      %cst_14 = arith.constant 0.000000e+00 : f32
      %16 = vector.broadcast %cst_14 : f32 to vector<2x256xf32>
      %17 = arith.maximumf %15, %16 : vector<2x256xf32>
      %18 = arith.truncf %17 : vector<2x256xf32> to vector<2x256xbf16>
      %c0_15 = arith.constant 0 : index
      %c0_16 = arith.constant 0 : index
      %19 = vector.load %arg6[%c0_15, %c0_16] : memref<2x256xbf16, #tpu.memory_space<vmem>>, vector<2x256xbf16>
      tpu.vector_store %arg6[%c0_15, %c0_16], %18 {strides = array<i32>} : memref<2x256xbf16, #tpu.memory_space<vmem>>, vector<2x256xbf16>,
    } else {
    }
    return
  }
  func.func @transform_0(%arg0: i32, %arg1: i32, %arg2: i32) -> (i32, i32) {
    %c0_i32 = arith.constant 0 : i32
    return %arg0, %arg2 : i32, i32
  }
  func.func @transform_1(%arg0: i32, %arg1: i32, %arg2: i32) -> (i32, i32) {
    %c0_i32 = arith.constant 0 : i32
    return %arg2, %arg1 : i32, i32
  }
  func.func @transform_2(%arg0: i32, %arg1: i32, %arg2: i32) -> (i32, i32) {
    %c0_i32 = arith.constant 0 : i32
    %c0_i32_0 = arith.constant 0 : i32
    return %c0_i32, %arg1 : i32, i32
  }
  func.func @transform_3(%arg0: i32, %arg1: i32, %arg2: i32) -> (i32, i32) {
    %c0_i32 = arith.constant 0 : i32
    return %arg0, %arg1 : i32, i32
  }
}

module attributes {stable_mosaic.version = 11 : i64} {
  func.func @_matmul_bias_act_kernel(%arg0: i32, %arg1: i32, %arg2: i32, %arg3: memref<98x288xbf16, #tpu.memory_space<vmem>>, %arg4: memref<288x32xbf16, #tpu.memory_space<vmem>>, %arg5: memref<1x32xf32, #tpu.memory_space<vmem>>, %arg6: memref<98x32xbf16, #tpu.memory_space<vmem>>, %arg7: memref<98x32xf32, #tpu.memory_space<vmem>>) attributes {dimension_semantics = [#tpu.dimension_semantics<parallel>, #tpu.dimension_semantics<parallel>, #tpu.dimension_semantics<arbitrary>], iteration_bounds = array<i64: 1, 1, 1>, scalar_prefetch = 0 : i64, scratch_operands = 1 : i64, tpu.core_type = #tpu.core_type<tc>, window_params = [{transform_indices = @transform_0, window_bounds = array<i64: 98, 288>}, {transform_indices = @transform_1, window_bounds = array<i64: 288, 32>}, {transform_indices = @transform_2, window_bounds = array<i64: 1, 32>}, {transform_indices = @transform_3, window_bounds = array<i64: 98, 32>}]} {
    %c0_i32 = arith.constant 0 : i32
    %0 = arith.cmpi eq, %arg2, %c0_i32 : i32
    %1 = arith.extui %0 : i1 to i32
    %c0_i32_0 = arith.constant 0 : i32
    %2 = arith.cmpi ne, %1, %c0_i32_0 : i32
    scf.if %2 {
      %cst_10 = arith.constant 0.000000e+00 : f32
      %12 = vector.broadcast %cst_10 : f32 to vector<98x32xf32>
      %c0_11 = arith.constant 0 : index
      %c0_12 = arith.constant 0 : index
      %13 = vector.load %arg7[%c0_11, %c0_12] : memref<98x32xf32, #tpu.memory_space<vmem>>, vector<98x32xf32>
      tpu.vector_store %arg7[%c0_11, %c0_12], %12 {strides = array<i32>} : memref<98x32xf32, #tpu.memory_space<vmem>>, vector<98x32xf32>,
    } else {
    }
    %c0 = arith.constant 0 : index
    %c0_1 = arith.constant 0 : index
    %3 = vector.load %arg7[%c0, %c0_1] : memref<98x32xf32, #tpu.memory_space<vmem>>, vector<98x32xf32>
    %c0_2 = arith.constant 0 : index
    %c0_3 = arith.constant 0 : index
    %4 = vector.load %arg3[%c0_2, %c0_3] : memref<98x288xbf16, #tpu.memory_space<vmem>>, vector<98x288xbf16>
    %c0_4 = arith.constant 0 : index
    %c0_5 = arith.constant 0 : index
    %5 = vector.load %arg4[%c0_4, %c0_5] : memref<288x32xbf16, #tpu.memory_space<vmem>>, vector<288x32xbf16>
    %cst = arith.constant dense<0.000000e+00> : vector<98x32xf32>
    %6 = tpu.matmul %4, %5, %cst {dimension_numbers = #tpu.dot_dimension_numbers<[1], [0], [0], [1], [0, 0, 1, 1], [], []>} : vector<98x288xbf16>, vector<288x32xbf16>, vector<98x32xf32> -> vector<98x32xf32>
    %7 = arith.addf %3, %6 : vector<98x32xf32>
    %c0_6 = arith.constant 0 : index
    %c0_7 = arith.constant 0 : index
    %8 = vector.load %arg7[%c0_6, %c0_7] : memref<98x32xf32, #tpu.memory_space<vmem>>, vector<98x32xf32>
    tpu.vector_store %arg7[%c0_6, %c0_7], %7 {strides = array<i32>} : memref<98x32xf32, #tpu.memory_space<vmem>>, vector<98x32xf32>,
    %c0_i32_8 = arith.constant 0 : i32
    %9 = arith.cmpi eq, %arg2, %c0_i32_8 : i32
    %10 = arith.extui %9 : i1 to i32
    %c0_i32_9 = arith.constant 0 : i32
    %11 = arith.cmpi ne, %10, %c0_i32_9 : i32
    scf.if %11 {
      %c0_10 = arith.constant 0 : index
      %c0_11 = arith.constant 0 : index
      %12 = vector.load %arg7[%c0_10, %c0_11] : memref<98x32xf32, #tpu.memory_space<vmem>>, vector<98x32xf32>
      %c0_12 = arith.constant 0 : index
      %c0_13 = arith.constant 0 : index
      %13 = vector.load %arg5[%c0_12, %c0_13] : memref<1x32xf32, #tpu.memory_space<vmem>>, vector<1x32xf32>
      %14 = vector.broadcast %13 : vector<1x32xf32> to vector<98x32xf32>
      %15 = arith.addf %12, %14 : vector<98x32xf32>
      %cst_14 = arith.constant 0.000000e+00 : f32
      %16 = vector.broadcast %cst_14 : f32 to vector<98x32xf32>
      %17 = arith.maximumf %15, %16 : vector<98x32xf32>
      %18 = arith.truncf %17 : vector<98x32xf32> to vector<98x32xbf16>
      %c0_15 = arith.constant 0 : index
      %c0_16 = arith.constant 0 : index
      %19 = vector.load %arg6[%c0_15, %c0_16] : memref<98x32xbf16, #tpu.memory_space<vmem>>, vector<98x32xbf16>
      tpu.vector_store %arg6[%c0_15, %c0_16], %18 {strides = array<i32>} : memref<98x32xbf16, #tpu.memory_space<vmem>>, vector<98x32xbf16>,
    } else {
    }
    return
  }
  func.func @transform_0(%arg0: i32, %arg1: i32, %arg2: i32) -> (i32, i32) {
    %c0_i32 = arith.constant 0 : i32
    return %arg0, %arg2 : i32, i32
  }
  func.func @transform_1(%arg0: i32, %arg1: i32, %arg2: i32) -> (i32, i32) {
    %c0_i32 = arith.constant 0 : i32
    return %arg2, %arg1 : i32, i32
  }
  func.func @transform_2(%arg0: i32, %arg1: i32, %arg2: i32) -> (i32, i32) {
    %c0_i32 = arith.constant 0 : i32
    %c0_i32_0 = arith.constant 0 : i32
    return %c0_i32, %arg1 : i32, i32
  }
  func.func @transform_3(%arg0: i32, %arg1: i32, %arg2: i32) -> (i32, i32) {
    %c0_i32 = arith.constant 0 : i32
    return %arg0, %arg1 : i32, i32
  }
}

module attributes {stable_mosaic.version = 11 : i64} {
  func.func @_matmul_bias_act_kernel(%arg0: i32, %arg1: i32, %arg2: i32, %arg3: memref<128x128xbf16, #tpu.memory_space<vmem>>, %arg4: memref<128x16xbf16, #tpu.memory_space<vmem>>, %arg5: memref<1x16xf32, #tpu.memory_space<vmem>>, %arg6: memref<128x16xf32, #tpu.memory_space<vmem>>, %arg7: memref<128x16xf32, #tpu.memory_space<vmem>>) attributes {dimension_semantics = [#tpu.dimension_semantics<parallel>, #tpu.dimension_semantics<parallel>, #tpu.dimension_semantics<arbitrary>], iteration_bounds = array<i64: 1, 1, 1>, scalar_prefetch = 0 : i64, scratch_operands = 1 : i64, tpu.core_type = #tpu.core_type<tc>, window_params = [{transform_indices = @transform_0, window_bounds = array<i64: 128, 128>}, {transform_indices = @transform_1, window_bounds = array<i64: 128, 16>}, {transform_indices = @transform_2, window_bounds = array<i64: 1, 16>}, {transform_indices = @transform_3, window_bounds = array<i64: 128, 16>}]} {
    %c0_i32 = arith.constant 0 : i32
    %0 = arith.cmpi eq, %arg2, %c0_i32 : i32
    %1 = arith.extui %0 : i1 to i32
    %c0_i32_0 = arith.constant 0 : i32
    %2 = arith.cmpi ne, %1, %c0_i32_0 : i32
    scf.if %2 {
      %cst_10 = arith.constant 0.000000e+00 : f32
      %12 = vector.broadcast %cst_10 : f32 to vector<128x16xf32>
      %c0_11 = arith.constant 0 : index
      %c0_12 = arith.constant 0 : index
      %13 = vector.load %arg7[%c0_11, %c0_12] : memref<128x16xf32, #tpu.memory_space<vmem>>, vector<128x16xf32>
      tpu.vector_store %arg7[%c0_11, %c0_12], %12 {strides = array<i32>} : memref<128x16xf32, #tpu.memory_space<vmem>>, vector<128x16xf32>,
    } else {
    }
    %c0 = arith.constant 0 : index
    %c0_1 = arith.constant 0 : index
    %3 = vector.load %arg7[%c0, %c0_1] : memref<128x16xf32, #tpu.memory_space<vmem>>, vector<128x16xf32>
    %c0_2 = arith.constant 0 : index
    %c0_3 = arith.constant 0 : index
    %4 = vector.load %arg3[%c0_2, %c0_3] : memref<128x128xbf16, #tpu.memory_space<vmem>>, vector<128x128xbf16>
    %c0_4 = arith.constant 0 : index
    %c0_5 = arith.constant 0 : index
    %5 = vector.load %arg4[%c0_4, %c0_5] : memref<128x16xbf16, #tpu.memory_space<vmem>>, vector<128x16xbf16>
    %cst = arith.constant dense<0.000000e+00> : vector<128x16xf32>
    %6 = tpu.matmul %4, %5, %cst {dimension_numbers = #tpu.dot_dimension_numbers<[1], [0], [0], [1], [0, 0, 1, 1], [], []>} : vector<128x128xbf16>, vector<128x16xbf16>, vector<128x16xf32> -> vector<128x16xf32>
    %7 = arith.addf %3, %6 : vector<128x16xf32>
    %c0_6 = arith.constant 0 : index
    %c0_7 = arith.constant 0 : index
    %8 = vector.load %arg7[%c0_6, %c0_7] : memref<128x16xf32, #tpu.memory_space<vmem>>, vector<128x16xf32>
    tpu.vector_store %arg7[%c0_6, %c0_7], %7 {strides = array<i32>} : memref<128x16xf32, #tpu.memory_space<vmem>>, vector<128x16xf32>,
    %c0_i32_8 = arith.constant 0 : i32
    %9 = arith.cmpi eq, %arg2, %c0_i32_8 : i32
    %10 = arith.extui %9 : i1 to i32
    %c0_i32_9 = arith.constant 0 : i32
    %11 = arith.cmpi ne, %10, %c0_i32_9 : i32
    scf.if %11 {
      %c0_10 = arith.constant 0 : index
      %c0_11 = arith.constant 0 : index
      %12 = vector.load %arg7[%c0_10, %c0_11] : memref<128x16xf32, #tpu.memory_space<vmem>>, vector<128x16xf32>
      %c0_12 = arith.constant 0 : index
      %c0_13 = arith.constant 0 : index
      %13 = vector.load %arg5[%c0_12, %c0_13] : memref<1x16xf32, #tpu.memory_space<vmem>>, vector<1x16xf32>
      %14 = vector.broadcast %13 : vector<1x16xf32> to vector<128x16xf32>
      %15 = arith.addf %12, %14 : vector<128x16xf32>
      %c0_14 = arith.constant 0 : index
      %c0_15 = arith.constant 0 : index
      %16 = vector.load %arg6[%c0_14, %c0_15] : memref<128x16xf32, #tpu.memory_space<vmem>>, vector<128x16xf32>
      tpu.vector_store %arg6[%c0_14, %c0_15], %15 {strides = array<i32>} : memref<128x16xf32, #tpu.memory_space<vmem>>, vector<128x16xf32>,
    } else {
    }
    return
  }
  func.func @transform_0(%arg0: i32, %arg1: i32, %arg2: i32) -> (i32, i32) {
    %c0_i32 = arith.constant 0 : i32
    return %arg0, %arg2 : i32, i32
  }
  func.func @transform_1(%arg0: i32, %arg1: i32, %arg2: i32) -> (i32, i32) {
    %c0_i32 = arith.constant 0 : i32
    return %arg2, %arg1 : i32, i32
  }
  func.func @transform_2(%arg0: i32, %arg1: i32, %arg2: i32) -> (i32, i32) {
    %c0_i32 = arith.constant 0 : i32
    %c0_i32_0 = arith.constant 0 : i32
    return %c0_i32, %arg1 : i32, i32
  }
  func.func @transform_3(%arg0: i32, %arg1: i32, %arg2: i32) -> (i32, i32) {
    %c0_i32 = arith.constant 0 : i32
    return %arg0, %arg1 : i32, i32
  }
}

</mosaic_0001>

<llo_original>
// kernel: forward.6
$region0: #{forward.6}
  #allocation0 [shape = 'u32[]', space=smem, size = 0x4, offset = 0x4, fixed_abs, tag = 'smem constant byte address 0x4 - core index']
  #allocation1 [shape = 'u32[72,128]{1,0:T(1,128)}', space=vmem, size = 0x9000, scoped, tag = 'internal scratch']
  #allocation2 [shape = 'f32[98,32]{1,0:T(8,128)}', space=vmem, size = 0xd000, scoped, tag = 'scratch operand']
  %s0 = inlined_call_operand.vmem [shape: bf16[98,36], index: 0, kind: input, shape index: {}]
  %s1 = inlined_call_operand.vmem [shape: bf16[36,32], index: 1, kind: input, shape index: {}]
  %s2 = inlined_call_operand.vmem [shape: f32[1,32], index: 2, kind: input, shape index: {}]
  %s3 = inlined_call_operand.vmem [shape: bf16[98,32], index: 3, kind: output, shape index: {}]
  %s4 = sld [smem:[#allocation0]]
  $region30: #{forward.6} parent=0
    _
  %s6 = ssub.s32 1, %s4
  %s7 = scalar_select 0, %s6, %s4
  // Predicated region
  $region2: #{forward.6} parent=0 // pred_check
    _
  $region3: #{forward.6} parent=0 // pred_check_branch
    %9 = sbr.rel (0) target = $region5
  $region4: #{forward.6} parent=0 // pred_region
    _
  $region5: #{forward.6} parent=0 // pred_fallthru
    _
  // Predicated region
  $region6: #{forward.6} parent=0 // pred_check
    _
  $region7: #{forward.6} parent=0 // pred_check_branch
    %11 = sbr.rel (0) target = $region9
  $region8: #{forward.6} parent=0 // pred_region
    _
  $region9: #{forward.6} parent=0 // pred_fallthru
    _
  // Predicated region
  $region10: #{forward.6} parent=0 // pred_check
    _
  $region11: #{forward.6} parent=0 // pred_check_branch
    %13 = sbr.rel (0) target = $region13
  $region12: #{forward.6} parent=0 // pred_region
    _
  $region13: #{forward.6} parent=0 // pred_fallthru
    _
  %p15 = scmp.eq.s32.totalorder 0, 0
  // Predicated region
  $region14: #{forward.6} parent=0 // pred_check
    %p16 = pneg %p15
  $region15: #{forward.6} parent=0 // pred_check_branch
    %18 = sbr.rel (%p16) target = $region17
  $region16: #{forward.6} parent=0 // pred_region
    %vm19 = vcmask 261120
    %20 = vst.msk [vmem:[#allocation2] sm:$0xff] %vm19, 0.0
    %21 = vst.msk [vmem:[#allocation2 + $0x8] sm:$0xff] %vm19, 0.0
    %22 = vst.msk [vmem:[#allocation2 + $0x10] sm:$0xff] %vm19, 0.0
    %23 = vst.msk [vmem:[#allocation2 + $0x18] sm:$0xff] %vm19, 0.0
    %24 = vst.msk [vmem:[#allocation2 + $0x20] sm:$0xff] %vm19, 0.0
    %25 = vst.msk [vmem:[#allocation2 + $0x28] sm:$0xff] %vm19, 0.0
    %26 = vst.msk [vmem:[#allocation2 + $0x30] sm:$0xff] %vm19, 0.0
    %27 = vst.msk [vmem:[#allocation2 + $0x38] sm:$0xff] %vm19, 0.0
    %28 = vst.msk [vmem:[#allocation2 + $0x40] sm:$0xff] %vm19, 0.0
    %29 = vst.msk [vmem:[#allocation2 + $0x48] sm:$0xff] %vm19, 0.0
    %30 = vst.msk [vmem:[#allocation2 + $0x50] sm:$0xff] %vm19, 0.0
    %31 = vst.msk [vmem:[#allocation2 + $0x58] sm:$0xff] %vm19, 0.0
    %vm32 = vcmask 254976
    %33 = vst.msk [vmem:[#allocation2 + $0x60] sm:$0x3] %vm32, 0.0
  $region17: #{forward.6} parent=0 // pred_fallthru
    _
  %v34 = vld [vmem:[#allocation2] sm:$0xff]
  %v35 = vld [vmem:[#allocation2 + $0x8] sm:$0xff]
  %v36 = vld [vmem:[#allocation2 + $0x10] sm:$0xff]
  %v37 = vld [vmem:[#allocation2 + $0x18] sm:$0xff]
  %v38 = vld [vmem:[#allocation2 + $0x20] sm:$0xff]
  %v39 = vld [vmem:[#allocation2 + $0x28] sm:$0xff]
  %v40 = vld [vmem:[#allocation2 + $0x30] sm:$0xff]
  %v41 = vld [vmem:[#allocation2 + $0x38] sm:$0xff]
  %v42 = vld [vmem:[#allocation2 + $0x40] sm:$0xff]
  %v43 = vld [vmem:[#allocation2 + $0x48] sm:$0xff]
  %v44 = vld [vmem:[#allocation2 + $0x50] sm:$0xff]
  %v45 = vld [vmem:[#allocation2 + $0x58] sm:$0xff]
  %v46 = vld [vmem:[#allocation2 + $0x60] sm:$0x3]
  %v47 = vld [vmem:[%s0] sm:$0xf]
  %v48 = vld [vmem:[%s0 + $0x4] sm:$0xf]
  %v49 = vld [vmem:[%s0 + $0x8] sm:$0xf]
  %v50 = vld [vmem:[%s0 + $0xc] sm:$0xf]
  %v51 = vld [vmem:[%s0 + $0x10] sm:$0xf]
  %v52 = vld [vmem:[%s0 + $0x14] sm:$0xf]
  %v53 = vld [vmem:[%s0 + $0x18] sm:$0xf]
  %v54 = vld [vmem:[%s0 + $0x1c] sm:$0xf]
  %v55 = vld [vmem:[%s0 + $0x20] sm:$0xf]
  %v56 = vld [vmem:[%s0 + $0x24] sm:$0xf]
  %v57 = vld [vmem:[%s0 + $0x28] sm:$0xf]
  %v58 = vld [vmem:[%s0 + $0x2c] sm:$0xf]
  %v59 = vld [vmem:[%s0 + $0x30] sm:$0x1]
  %v60 = vld [vmem:[%s1] sm:$0xf]
  %v61 = vld [vmem:[%s1 + $0x4] sm:$0xf]
  %v62 = vld [vmem:[%s1 + $0x8] sm:$0xf]
  %v63 = vld [vmem:[%s1 + $0xc] sm:$0xf]
  %v64 = vld [vmem:[%s1 + $0x10] sm:$0x3]
  %v78 = vunpack.c.l.b16 %v47
  %v79 = vunpack.c.l.b16 %v48
  %v80 = vunpack.c.l.b16 %v49
  %v81 = vunpack.c.l.b16 %v50
  %v82 = vunpack.c.l.b16 %v51
  %v83 = vunpack.c.l.b16 %v52
  %v84 = vunpack.c.l.b16 %v53
  %v85 = vunpack.c.l.b16 %v54
  %v86 = vunpack.c.l.b16 %v55
  %v87 = vunpack.c.l.b16 %v56
  %v88 = vunpack.c.l.b16 %v57
  %v89 = vunpack.c.l.b16 %v58
  %v90 = vunpack.c.l.b16 %v59
  %v91 = vpack.c.b16 %v79, %v78
  %v92 = vpack.c.b16 %v81, %v80
  %v93 = vpack.c.b16 %v83, %v82
  %v94 = vpack.c.b16 %v85, %v84
  %v95 = vpack.c.b16 %v87, %v86
  %v96 = vpack.c.b16 %v89, %v88
  %v97 = vpack.c.b16 %v90, %v90
  %v103 = vunpack.c.l.b16 %v60
  %v104 = vunpack.c.l.b16 %v61
  %v105 = vunpack.c.l.b16 %v62
  %v106 = vunpack.c.l.b16 %v63
  %v107 = vunpack.c.l.b16 %v64
  %v108 = vpack.c.b16 %v104, %v103
  %v109 = vpack.c.b16 %v106, %v105
  %v110 = vpack.c.b16 %v107, %v107
  %vm113 = vcmask 293888
  %v115 = vsel %vm113, %v91, 0
  %v118 = vsel %vm113, %v92, 0
  %v121 = vsel %vm113, %v93, 0
  %v124 = vsel %vm113, %v94, 0
  %v127 = vsel %vm113, %v95, 0
  %v130 = vsel %vm113, %v96, 0
  %v133 = vsel %vm113, %v97, 0
  %vm135 = vcmask 1041408
  %v137 = vsel %vm135, %v110, 0
  %139 = vmatpush.bf16.msra.mxu0 0
  %140 = vmatpush.bf16.msra.mxu0 0
  %141 = vmatpush.bf16.msra.mxu0 0
  %142 = vmatpush.bf16.msra.mxu0 0
  %143 = vmatpush.bf16.msra.mxu0 0
  %144 = vmatpush.bf16.msra.mxu0 %v137
  %145 = vmatpush.bf16.msra.mxu0 %v109
  %146 = vmatpush.bf16.msra.mxu0 %v108
  %147 = vmatmul.bf16.gmra.mxu0 %v115
  %v148 = vpop.f32.mrf.mxu0
  %v149 = vadd.f32 0.0, %v148
  %v150 = vpop.f32.mrf.mxu0
  %v151 = vadd.f32 0.0, %v150
  %152 = vmatmul.bf16.gmra.mxu0 %v118
  %v153 = vpop.f32.mrf.mxu0
  %v154 = vadd.f32 0.0, %v153
  %v155 = vpop.f32.mrf.mxu0
  %v156 = vadd.f32 0.0, %v155
  %157 = vmatmul.bf16.gmra.mxu0 %v121
  %v158 = vpop.f32.mrf.mxu0
  %v159 = vadd.f32 0.0, %v158
  %v160 = vpop.f32.mrf.mxu0
  %v161 = vadd.f32 0.0, %v160
  %162 = vmatmul.bf16.gmra.mxu0 %v124
  %v163 = vpop.f32.mrf.mxu0
  %v164 = vadd.f32 0.0, %v163
  %v165 = vpop.f32.mrf.mxu0
  %v166 = vadd.f32 0.0, %v165
  %167 = vmatmul.bf16.gmra.mxu0 %v127
  %v168 = vpop.f32.mrf.mxu0
  %v169 = vadd.f32 0.0, %v168
  %v170 = vpop.f32.mrf.mxu0
  %v171 = vadd.f32 0.0, %v170
  %172 = vmatmul.bf16.gmra.mxu0 %v130
  %v173 = vpop.f32.mrf.mxu0
  %v174 = vadd.f32 0.0, %v173
  %v175 = vpop.f32.mrf.mxu0
  %v176 = vadd.f32 0.0, %v175
  %177 = vmatmul.bf16.gmra.mxu0 %v133
  %v178 = vpop.f32.mrf.mxu0
  %v179 = vadd.f32 0.0, %v178
  %v180 = vpop.f32.mrf.mxu0
  %181 = vdwg.mxu0
  %v182 = vadd.f32 %v34, %v149
  %v183 = vadd.f32 %v35, %v151
  %v184 = vadd.f32 %v36, %v154
  %v185 = vadd.f32 %v37, %v156
  %v186 = vadd.f32 %v38, %v159
  %v187 = vadd.f32 %v39, %v161
  %v188 = vadd.f32 %v40, %v164
  %v189 = vadd.f32 %v41, %v166
  %v190 = vadd.f32 %v42, %v169
  %v191 = vadd.f32 %v43, %v171
  %v192 = vadd.f32 %v44, %v174
  %v193 = vadd.f32 %v45, %v176
  %v194 = vadd.f32 %v46, %v179
  %vm195 = vcmask 261120
  %196 = vst.msk [vmem:[#allocation2] sm:$0xff] %vm195, %v182
  %197 = vst.msk [vmem:[#allocation2 + $0x8] sm:$0xff] %vm195, %v183
  %198 = vst.msk [vmem:[#allocation2 + $0x10] sm:$0xff] %vm195, %v184
  %199 = vst.msk [vmem:[#allocation2 + $0x18] sm:$0xff] %vm195, %v185
  %200 = vst.msk [vmem:[#allocation2 + $0x20] sm:$0xff] %vm195, %v186
  %201 = vst.msk [vmem:[#allocation2 + $0x28] sm:$0xff] %vm195, %v187
  %202 = vst.msk [vmem:[#allocation2 + $0x30] sm:$0xff] %vm195, %v188
  %203 = vst.msk [vmem:[#allocation2 + $0x38] sm:$0xff] %vm195, %v189
  %204 = vst.msk [vmem:[#allocation2 + $0x40] sm:$0xff] %vm195, %v190
  %205 = vst.msk [vmem:[#allocation2 + $0x48] sm:$0xff] %vm195, %v191
  %206 = vst.msk [vmem:[#allocation2 + $0x50] sm:$0xff] %vm195, %v192
  %207 = vst.msk [vmem:[#allocation2 + $0x58] sm:$0xff] %vm195, %v193
  %vm208 = vcmask 254976
  %209 = vst.msk [vmem:[#allocation2 + $0x60] sm:$0x3] %vm208, %v194
  // Predicated region
  $region18: #{forward.6} parent=0 // pred_check
    %p210 = pneg %p15
  $region19: #{forward.6} parent=0 // pred_check_branch
    %212 = sbr.rel (%p210) target = $region21
  $region20: #{forward.6} parent=0 // pred_region
    %v213 = vld [vmem:[#allocation2] sm:$0xff]
    %v214 = vld [vmem:[#allocation2 + $0x8] sm:$0xff]
    %v215 = vld [vmem:[#allocation2 + $0x10] sm:$0xff]
    %v216 = vld [vmem:[#allocation2 + $0x18] sm:$0xff]
    %v217 = vld [vmem:[#allocation2 + $0x20] sm:$0xff]
    %v218 = vld [vmem:[#allocation2 + $0x28] sm:$0xff]
    %v219 = vld [vmem:[#allocation2 + $0x30] sm:$0xff]
    %v220 = vld [vmem:[#allocation2 + $0x38] sm:$0xff]
    %v221 = vld [vmem:[#allocation2 + $0x40] sm:$0xff]
    %v222 = vld [vmem:[#allocation2 + $0x48] sm:$0xff]
    %v223 = vld [vmem:[#allocation2 + $0x50] sm:$0xff]
    %v224 = vld [vmem:[#allocation2 + $0x58] sm:$0xff]
    %v225 = vld [vmem:[#allocation2 + $0x60] sm:$0x3]
    %v226 = vld [vmem:[%s2] sm:$0x1]
    %v228 = vperm.slane %v226, 0
    %v230 = vadd.f32 %v213, %v228
    %v231 = vadd.f32 %v214, %v228
    %v232 = vadd.f32 %v215, %v228
    %v233 = vadd.f32 %v216, %v228
    %v234 = vadd.f32 %v217, %v228
    %v235 = vadd.f32 %v218, %v228
    %v236 = vadd.f32 %v219, %v228
    %v237 = vadd.f32 %v220, %v228
    %v238 = vadd.f32 %v221, %v228
    %v239 = vadd.f32 %v222, %v228
    %v240 = vadd.f32 %v223, %v228
    %v241 = vadd.f32 %v224, %v228
    %v242 = vadd.f32 %v225, %v228
    %v243 = vmax.f32 %v230, 0.0
    %v244 = vmax.f32 %v231, 0.0
    %v245 = vmax.f32 %v232, 0.0
    %v246 = vmax.f32 %v233, 0.0
    %v247 = vmax.f32 %v234, 0.0
    %v248 = vmax.f32 %v235, 0.0
    %v249 = vmax.f32 %v236, 0.0
    %v250 = vmax.f32 %v237, 0.0
    %v251 = vmax.f32 %v238, 0.0
    %v252 = vmax.f32 %v239, 0.0
    %v253 = vmax.f32 %v240, 0.0
    %v254 = vmax.f32 %v241, 0.0
    %v255 = vmax.f32 %v242, 0.0
    %v256 = vpack.c.bf16 %v243, %v243
    %v257 = vpack.c.bf16 %v244, %v244
    %v258 = vpack.c.bf16 %v245, %v245
    %v259 = vpack.c.bf16 %v246, %v246
    %v260 = vpack.c.bf16 %v247, %v247
    %v261 = vpack.c.bf16 %v248, %v248
    %v262 = vpack.c.bf16 %v249, %v249
    %v263 = vpack.c.bf16 %v250, %v250
    %v264 = vpack.c.bf16 %v251, %v251
    %v265 = vpack.c.bf16 %v252, %v252
    %v266 = vpack.c.bf16 %v253, %v253
    %v267 = vpack.c.bf16 %v254, %v254
    %v268 = vpack.c.bf16 %v255, %v255
    %vm269 = vcmask 257024
    %270 = vst.msk [vmem:[%s3] sm:$0xf] %vm269, %v256
    %271 = vst.msk [vmem:[%s3 + $0x4] sm:$0xf] %vm269, %v257
    %272 = vst.msk [vmem:[%s3 + $0x8] sm:$0xf] %vm269, %v258
    %273 = vst.msk [vmem:[%s3 + $0xc] sm:$0xf] %vm269, %v259
    %274 = vst.msk [vmem:[%s3 + $0x10] sm:$0xf] %vm269, %v260
    %275 = vst.msk [vmem:[%s3 + $0x14] sm:$0xf] %vm269, %v261
    %276 = vst.msk [vmem:[%s3 + $0x18] sm:$0xf] %vm269, %v262
    %277 = vst.msk [vmem:[%s3 + $0x1c] sm:$0xf] %vm269, %v263
    %278 = vst.msk [vmem:[%s3 + $0x20] sm:$0xf] %vm269, %v264
    %279 = vst.msk [vmem:[%s3 + $0x24] sm:$0xf] %vm269, %v265
    %280 = vst.msk [vmem:[%s3 + $0x28] sm:$0xf] %vm269, %v266
    %281 = vst.msk [vmem:[%s3 + $0x2c] sm:$0xf] %vm269, %v267
    %vm282 = vcmask 253952
    %283 = vst.msk [vmem:[%s3 + $0x30] sm:$0x1] %vm282, %v268
  $region21: #{forward.6} parent=0 // pred_fallthru
    _
  // Predicated region
  $region22: #{forward.6} parent=0 // pred_check
    _
  $region23: #{forward.6} parent=0 // pred_check_branch
    %285 = sbr.rel (0) target = $region25
  $region24: #{forward.6} parent=0 // pred_region
    _
  $region25: #{forward.6} parent=0 // pred_fallthru
    _
  // Predicated region
  $region26: #{forward.6} parent=0 // pred_check
    _
  $region27: #{forward.6} parent=0 // pred_check_branch
    %287 = sbr.rel (0) target = $region29
  $region28: #{forward.6} parent=0 // pred_region
    _
  $region29: #{forward.6} parent=0 // pred_fallthru
    _

// kernel: forward.7
$region0: #{forward.7}
  #allocation0 [shape = 'u32[]', space=smem, size = 0x4, offset = 0x4, fixed_abs, tag = 'smem constant byte address 0x4 - core index']
  #allocation1 [shape = 'u32[72,128]{1,0:T(1,128)}', space=vmem, size = 0x9000, scoped, tag = 'internal scratch']
  #allocation2 [shape = 'f32[50,32]{1,0:T(8,128)}', space=vmem, size = 0x7000, scoped, tag = 'scratch operand']
  %s0 = inlined_call_operand.vmem [shape: bf16[50,288], index: 0, kind: input, shape index: {}]
  %s1 = inlined_call_operand.vmem [shape: bf16[288,32], index: 1, kind: input, shape index: {}]
  %s2 = inlined_call_operand.vmem [shape: f32[1,32], index: 2, kind: input, shape index: {}]
  %s3 = inlined_call_operand.vmem [shape: bf16[50,32], index: 3, kind: output, shape index: {}]
  %s4 = sld [smem:[#allocation0]]
  $region30: #{forward.7} parent=0
    _
  %s6 = ssub.s32 1, %s4
  %s7 = scalar_select 0, %s6, %s4
  // Predicated region
  $region2: #{forward.7} parent=0 // pred_check
    _
  $region3: #{forward.7} parent=0 // pred_check_branch
    %9 = sbr.rel (0) target = $region5
  $region4: #{forward.7} parent=0 // pred_region
    _
  $region5: #{forward.7} parent=0 // pred_fallthru
    _
  // Predicated region
  $region6: #{forward.7} parent=0 // pred_check
    _
  $region7: #{forward.7} parent=0 // pred_check_branch
    %11 = sbr.rel (0) target = $region9
  $region8: #{forward.7} parent=0 // pred_region
    _
  $region9: #{forward.7} parent=0 // pred_fallthru
    _
  // Predicated region
  $region10: #{forward.7} parent=0 // pred_check
    _
  $region11: #{forward.7} parent=0 // pred_check_branch
    %13 = sbr.rel (0) target = $region13
  $region12: #{forward.7} parent=0 // pred_region
    _
  $region13: #{forward.7} parent=0 // pred_fallthru
    _
  %p15 = scmp.eq.s32.totalorder 0, 0
  // Predicated region
  $region14: #{forward.7} parent=0 // pred_check
    %p16 = pneg %p15
  $region15: #{forward.7} parent=0 // pred_check_branch
    %18 = sbr.rel (%p16) target = $region17
  $region16: #{forward.7} parent=0 // pred_region
    %vm19 = vcmask 261120
    %20 = vst.msk [vmem:[#allocation2] sm:$0xff] %vm19, 0.0
    %21 = vst.msk [vmem:[#allocation2 + $0x8] sm:$0xff] %vm19, 0.0
    %22 = vst.msk [vmem:[#allocation2 + $0x10] sm:$0xff] %vm19, 0.0
    %23 = vst.msk [vmem:[#allocation2 + $0x18] sm:$0xff] %vm19, 0.0
    %24 = vst.msk [vmem:[#allocation2 + $0x20] sm:$0xff] %vm19, 0.0
    %25 = vst.msk [vmem:[#allocation2 + $0x28] sm:$0xff] %vm19, 0.0
    %vm26 = vcmask 254976
    %27 = vst.msk [vmem:[#allocation2 + $0x30] sm:$0x3] %vm26, 0.0
  $region17: #{forward.7} parent=0 // pred_fallthru
    _
  %v28 = vld [vmem:[#allocation2] sm:$0xff]
  %v29 = vld [vmem:[#allocation2 + $0x8] sm:$0xff]
  %v30 = vld [vmem:[#allocation2 + $0x10] sm:$0xff]
  %v31 = vld [vmem:[#allocation2 + $0x18] sm:$0xff]
  %v32 = vld [vmem:[#allocation2 + $0x20] sm:$0xff]
  %v33 = vld [vmem:[#allocation2 + $0x28] sm:$0xff]
  %v34 = vld [vmem:[#allocation2 + $0x30] sm:$0x3]
  %v35 = vld [vmem:[%s0] sm:$0xff]
  %v36 = vld [vmem:[%s0 + $0x8] sm:$0xf]
  %v37 = vld [vmem:[%s0 + $0xc] sm:$0xff]
  %v38 = vld [vmem:[%s0 + $0x14] sm:$0xf]
  %v39 = vld [vmem:[%s0 + $0x18] sm:$0xff]
  %v40 = vld [vmem:[%s0 + $0x20] sm:$0xf]
  %v41 = vld [vmem:[%s0 + $0x24] sm:$0xff]
  %v42 = vld [vmem:[%s0 + $0x2c] sm:$0xf]
  %v43 = vld [vmem:[%s0 + $0x30] sm:$0xff]
  %v44 = vld [vmem:[%s0 + $0x38] sm:$0xf]
  %v45 = vld [vmem:[%s0 + $0x3c] sm:$0xff]
  %v46 = vld [vmem:[%s0 + $0x44] sm:$0xf]
  %v47 = vld [vmem:[%s0 + $0x48] sm:$0x11]
  %v48 = vld [vmem:[%s0 + $0x50] sm:$0x1]
  %v49 = vld [vmem:[%s1] sm:$0xf]
  %v50 = vld [vmem:[%s1 + $0x4] sm:$0xf]
  %v51 = vld [vmem:[%s1 + $0x8] sm:$0xf]
  %v52 = vld [vmem:[%s1 + $0xc] sm:$0xf]
  %v53 = vld [vmem:[%s1 + $0x10] sm:$0xf]
  %v54 = vld [vmem:[%s1 + $0x14] sm:$0xf]
  %v55 = vld [vmem:[%s1 + $0x18] sm:$0xf]
  %v56 = vld [vmem:[%s1 + $0x1c] sm:$0xf]
  %v57 = vld [vmem:[%s1 + $0x20] sm:$0xf]
  %v58 = vld [vmem:[%s1 + $0x24] sm:$0xf]
  %v59 = vld [vmem:[%s1 + $0x28] sm:$0xf]
  %v60 = vld [vmem:[%s1 + $0x2c] sm:$0xf]
  %v61 = vld [vmem:[%s1 + $0x30] sm:$0xf]
  %v62 = vld [vmem:[%s1 + $0x34] sm:$0xf]
  %v63 = vld [vmem:[%s1 + $0x38] sm:$0xf]
  %v64 = vld [vmem:[%s1 + $0x3c] sm:$0xf]
  %v65 = vld [vmem:[%s1 + $0x40] sm:$0xf]
  %v66 = vld [vmem:[%s1 + $0x44] sm:$0xf]
  %v67 = vld [vmem:[%s1 + $0x48] sm:$0xf]
  %v68 = vld [vmem:[%s1 + $0x4c] sm:$0xf]
  %v69 = vld [vmem:[%s1 + $0x50] sm:$0xf]
  %v70 = vld [vmem:[%s1 + $0x54] sm:$0xf]
  %v71 = vld [vmem:[%s1 + $0x58] sm:$0xf]
  %v72 = vld [vmem:[%s1 + $0x5c] sm:$0xf]
  %v73 = vld [vmem:[%s1 + $0x60] sm:$0xf]
  %v74 = vld [vmem:[%s1 + $0x64] sm:$0xf]
  %v75 = vld [vmem:[%s1 + $0x68] sm:$0xf]
  %v76 = vld [vmem:[%s1 + $0x6c] sm:$0xf]
  %v77 = vld [vmem:[%s1 + $0x70] sm:$0xf]
  %v78 = vld [vmem:[%s1 + $0x74] sm:$0xf]
  %v79 = vld [vmem:[%s1 + $0x78] sm:$0xf]
  %v80 = vld [vmem:[%s1 + $0x7c] sm:$0xf]
  %v81 = vld [vmem:[%s1 + $0x80] sm:$0xf]
  %v82 = vld [vmem:[%s1 + $0x84] sm:$0xf]
  %v83 = vld [vmem:[%s1 + $0x88] sm:$0xf]
  %v84 = vld [vmem:[%s1 + $0x8c] sm:$0xf]
  %v99 = vunpack.c.l.b16 %v35
  %v100 = vunpack.c.h.b16 %v35
  %v101 = vunpack.c.l.b16 %v36
  %v102 = vunpack.c.l.b16 %v37
  %v103 = vunpack.c.h.b16 %v37
  %v104 = vunpack.c.l.b16 %v38
  %v105 = vunpack.c.l.b16 %v39
  %v106 = vunpack.c.h.b16 %v39
  %v107 = vunpack.c.l.b16 %v40
  %v108 = vunpack.c.l.b16 %v41
  %v109 = vunpack.c.h.b16 %v41
  %v110 = vunpack.c.l.b16 %v42
  %v111 = vunpack.c.l.b16 %v43
  %v112 = vunpack.c.h.b16 %v43
  %v113 = vunpack.c.l.b16 %v44
  %v114 = vunpack.c.l.b16 %v45
  %v115 = vunpack.c.h.b16 %v45
  %v116 = vunpack.c.l.b16 %v46
  %v117 = vunpack.c.l.b16 %v47
  %v118 = vunpack.c.h.b16 %v47
  %v119 = vunpack.c.l.b16 %v48
  %v120 = vpack.c.b16 %v102, %v99
  %v121 = vpack.c.b16 %v103, %v100
  %v122 = vpack.c.b16 %v104, %v101
  %v123 = vpack.c.b16 %v108, %v105
  %v124 = vpack.c.b16 %v109, %v106
  %v125 = vpack.c.b16 %v110, %v107
  %v126 = vpack.c.b16 %v114, %v111
  %v127 = vpack.c.b16 %v115, %v112
  %v128 = vpack.c.b16 %v116, %v113
  %v129 = vpack.c.b16 %v117, %v117
  %v130 = vpack.c.b16 %v118, %v118
  %v131 = vpack.c.b16 %v119, %v119
  %v176 = vunpack.c.l.b16 %v49
  %v177 = vunpack.c.l.b16 %v50
  %v178 = vunpack.c.l.b16 %v51
  %v179 = vunpack.c.l.b16 %v52
  %v180 = vunpack.c.l.b16 %v53
  %v181 = vunpack.c.l.b16 %v54
  %v182 = vunpack.c.l.b16 %v55
  %v183 = vunpack.c.l.b16 %v56
  %v184 = vunpack.c.l.b16 %v57
  %v185 = vunpack.c.l.b16 %v58
  %v186 = vunpack.c.l.b16 %v59
  %v187 = vunpack.c.l.b16 %v60
  %v188 = vunpack.c.l.b16 %v61
  %v189 = vunpack.c.l.b16 %v62
  %v190 = vunpack.c.l.b16 %v63
  %v191 = vunpack.c.l.b16 %v64
  %v192 = vunpack.c.l.b16 %v65
  %v193 = vunpack.c.l.b16 %v66
  %v194 = vunpack.c.l.b16 %v67
  %v195 = vunpack.c.l.b16 %v68
  %v196 = vunpack.c.l.b16 %v69
  %v197 = vunpack.c.l.b16 %v70
  %v198 = vunpack.c.l.b16 %v71
  %v199 = vunpack.c.l.b16 %v72
  %v200 = vunpack.c.l.b16 %v73
  %v201 = vunpack.c.l.b16 %v74
  %v202 = vunpack.c.l.b16 %v75
  %v203 = vunpack.c.l.b16 %v76
  %v204 = vunpack.c.l.b16 %v77
  %v205 = vunpack.c.l.b16 %v78
  %v206 = vunpack.c.l.b16 %v79
  %v207 = vunpack.c.l.b16 %v80
  %v208 = vunpack.c.l.b16 %v81
  %v209 = vunpack.c.l.b16 %v82
  %v210 = vunpack.c.l.b16 %v83
  %v211 = vunpack.c.l.b16 %v84
  %v212 = vpack.c.b16 %v177, %v176
  %v213 = vpack.c.b16 %v179, %v178
  %v214 = vpack.c.b16 %v181, %v180
  %v215 = vpack.c.b16 %v183, %v182
  %v216 = vpack.c.b16 %v185, %v184
  %v217 = vpack.c.b16 %v187, %v186
  %v218 = vpack.c.b16 %v189, %v188
  %v219 = vpack.c.b16 %v191, %v190
  %v220 = vpack.c.b16 %v193, %v192
  %v221 = vpack.c.b16 %v195, %v194
  %v222 = vpack.c.b16 %v197, %v196
  %v223 = vpack.c.b16 %v199, %v198
  %v224 = vpack.c.b16 %v201, %v200
  %v225 = vpack.c.b16 %v203, %v202
  %v226 = vpack.c.b16 %v205, %v204
  %v227 = vpack.c.b16 %v207, %v206
  %v228 = vpack.c.b16 %v209, %v208
  %v229 = vpack.c.b16 %v211, %v210
  %vm248 = vcmask 261120
  %v250 = vsel %vm248, %v122, 0
  %v253 = vsel %vm248, %v125, 0
  %v256 = vsel %vm248, %v128, 0
  %v259 = vsel %vm248, %v131, 0
  %261 = vmatpush.bf16.msra.mxu0 %v219
  %262 = vmatpush.bf16.msra.mxu0 %v218
  %263 = vmatpush.bf16.msra.mxu0 %v217
  %264 = vmatpush.bf16.msra.mxu0 %v216
  %265 = vmatpush.bf16.msra.mxu0 %v215
  %266 = vmatpush.bf16.msra.mxu0 %v214
  %267 = vmatpush.bf16.msra.mxu0 %v213
  %268 = vmatpush.bf16.msra.mxu0 %v212
  %269 = vmatmul.bf16.gmra.mxu0 %v120
  %v270 = vpop.f32.mrf.mxu0
  %v271 = vadd.f32 0.0, %v270
  %v272 = vpop.f32.mrf.mxu0
  %v273 = vadd.f32 0.0, %v272
  %274 = vmatmul.bf16.gmra.mxu0 %v123
  %v275 = vpop.f32.mrf.mxu0
  %v276 = vadd.f32 0.0, %v275
  %v277 = vpop.f32.mrf.mxu0
  %v278 = vadd.f32 0.0, %v277
  %279 = vmatmul.bf16.gmra.mxu0 %v126
  %v280 = vpop.f32.mrf.mxu0
  %v281 = vadd.f32 0.0, %v280
  %v282 = vpop.f32.mrf.mxu0
  %v283 = vadd.f32 0.0, %v282
  %284 = vmatmul.bf16.gmra.mxu0 %v129
  %v285 = vpop.f32.mrf.mxu0
  %v286 = vadd.f32 0.0, %v285
  %v287 = vpop.f32.mrf.mxu0
  %288 = vdwg.mxu0
  %289 = vmatpush.bf16.msra.mxu0 %v227
  %290 = vmatpush.bf16.msra.mxu0 %v226
  %291 = vmatpush.bf16.msra.mxu0 %v225
  %292 = vmatpush.bf16.msra.mxu0 %v224
  %293 = vmatpush.bf16.msra.mxu0 %v223
  %294 = vmatpush.bf16.msra.mxu0 %v222
  %295 = vmatpush.bf16.msra.mxu0 %v221
  %296 = vmatpush.bf16.msra.mxu0 %v220
  %297 = vmatmul.bf16.gmra.mxu0 %v121
  %v298 = vpop.f32.mrf.mxu0
  %v299 = vadd.f32 %v271, %v298
  %v300 = vpop.f32.mrf.mxu0
  %v301 = vadd.f32 %v273, %v300
  %302 = vmatmul.bf16.gmra.mxu0 %v124
  %v303 = vpop.f32.mrf.mxu0
  %v304 = vadd.f32 %v276, %v303
  %v305 = vpop.f32.mrf.mxu0
  %v306 = vadd.f32 %v278, %v305
  %307 = vmatmul.bf16.gmra.mxu0 %v127
  %v308 = vpop.f32.mrf.mxu0
  %v309 = vadd.f32 %v281, %v308
  %v310 = vpop.f32.mrf.mxu0
  %v311 = vadd.f32 %v283, %v310
  %312 = vmatmul.bf16.gmra.mxu0 %v130
  %v313 = vpop.f32.mrf.mxu0
  %v314 = vadd.f32 %v286, %v313
  %v315 = vpop.f32.mrf.mxu0
  %316 = vdwg.mxu0
  %317 = vmatpush.bf16.msra.mxu0 0
  %318 = vmatpush.bf16.msra.mxu0 0
  %319 = vmatpush.bf16.msra.mxu0 0
  %320 = vmatpush.bf16.msra.mxu0 0
  %321 = vmatpush.bf16.msra.mxu0 0
  %322 = vmatpush.bf16.msra.mxu0 0
  %323 = vmatpush.bf16.msra.mxu0 %v229
  %324 = vmatpush.bf16.msra.mxu0 %v228
  %325 = vmatmul.bf16.gmra.mxu0 %v250
  %v326 = vpop.f32.mrf.mxu0
  %v327 = vadd.f32 %v299, %v326
  %v328 = vpop.f32.mrf.mxu0
  %v329 = vadd.f32 %v301, %v328
  %330 = vmatmul.bf16.gmra.mxu0 %v253
  %v331 = vpop.f32.mrf.mxu0
  %v332 = vadd.f32 %v304, %v331
  %v333 = vpop.f32.mrf.mxu0
  %v334 = vadd.f32 %v306, %v333
  %335 = vmatmul.bf16.gmra.mxu0 %v256
  %v336 = vpop.f32.mrf.mxu0
  %v337 = vadd.f32 %v309, %v336
  %v338 = vpop.f32.mrf.mxu0
  %v339 = vadd.f32 %v311, %v338
  %340 = vmatmul.bf16.gmra.mxu0 %v259
  %v341 = vpop.f32.mrf.mxu0
  %v342 = vadd.f32 %v314, %v341
  %v343 = vpop.f32.mrf.mxu0
  %344 = vdwg.mxu0
  %v345 = vadd.f32 %v28, %v327
  %v346 = vadd.f32 %v29, %v329
  %v347 = vadd.f32 %v30, %v332
  %v348 = vadd.f32 %v31, %v334
  %v349 = vadd.f32 %v32, %v337
  %v350 = vadd.f32 %v33, %v339
  %v351 = vadd.f32 %v34, %v342
  %352 = vst.msk [vmem:[#allocation2] sm:$0xff] %vm248, %v345
  %353 = vst.msk [vmem:[#allocation2 + $0x8] sm:$0xff] %vm248, %v346
  %354 = vst.msk [vmem:[#allocation2 + $0x10] sm:$0xff] %vm248, %v347
  %355 = vst.msk [vmem:[#allocation2 + $0x18] sm:$0xff] %vm248, %v348
  %356 = vst.msk [vmem:[#allocation2 + $0x20] sm:$0xff] %vm248, %v349
  %357 = vst.msk [vmem:[#allocation2 + $0x28] sm:$0xff] %vm248, %v350
  %vm358 = vcmask 254976
  %359 = vst.msk [vmem:[#allocation2 + $0x30] sm:$0x3] %vm358, %v351
  // Predicated region
  $region18: #{forward.7} parent=0 // pred_check
    %p360 = pneg %p15
  $region19: #{forward.7} parent=0 // pred_check_branch
    %362 = sbr.rel (%p360) target = $region21
  $region20: #{forward.7} parent=0 // pred_region
    %v363 = vld [vmem:[#allocation2] sm:$0xff]
    %v364 = vld [vmem:[#allocation2 + $0x8] sm:$0xff]
    %v365 = vld [vmem:[#allocation2 + $0x10] sm:$0xff]
    %v366 = vld [vmem:[#allocation2 + $0x18] sm:$0xff]
    %v367 = vld [vmem:[#allocation2 + $0x20] sm:$0xff]
    %v368 = vld [vmem:[#allocation2 + $0x28] sm:$0xff]
    %v369 = vld [vmem:[#allocation2 + $0x30] sm:$0x3]
    %v370 = vld [vmem:[%s2] sm:$0x1]
    %v372 = vperm.slane %v370, 0
    %v374 = vadd.f32 %v363, %v372
    %v375 = vadd.f32 %v364, %v372
    %v376 = vadd.f32 %v365, %v372
    %v377 = vadd.f32 %v366, %v372
    %v378 = vadd.f32 %v367, %v372
    %v379 = vadd.f32 %v368, %v372
    %v380 = vadd.f32 %v369, %v372
    %v381 = vmax.f32 %v374, 0.0
    %v382 = vmax.f32 %v375, 0.0
    %v383 = vmax.f32 %v376, 0.0
    %v384 = vmax.f32 %v377, 0.0
    %v385 = vmax.f32 %v378, 0.0
    %v386 = vmax.f32 %v379, 0.0
    %v387 = vmax.f32 %v380, 0.0
    %v388 = vpack.c.bf16 %v381, %v381
    %v389 = vpack.c.bf16 %v382, %v382
    %v390 = vpack.c.bf16 %v383, %v383
    %v391 = vpack.c.bf16 %v384, %v384
    %v392 = vpack.c.bf16 %v385, %v385
    %v393 = vpack.c.bf16 %v386, %v386
    %v394 = vpack.c.bf16 %v387, %v387
    %vm395 = vcmask 257024
    %396 = vst.msk [vmem:[%s3] sm:$0xf] %vm395, %v388
    %397 = vst.msk [vmem:[%s3 + $0x4] sm:$0xf] %vm395, %v389
    %398 = vst.msk [vmem:[%s3 + $0x8] sm:$0xf] %vm395, %v390
    %399 = vst.msk [vmem:[%s3 + $0xc] sm:$0xf] %vm395, %v391
    %400 = vst.msk [vmem:[%s3 + $0x10] sm:$0xf] %vm395, %v392
    %401 = vst.msk [vmem:[%s3 + $0x14] sm:$0xf] %vm395, %v393
    %vm402 = vcmask 253952
    %403 = vst.msk [vmem:[%s3 + $0x18] sm:$0x1] %vm402, %v394
  $region21: #{forward.7} parent=0 // pred_fallthru
    _
  // Predicated region
  $region22: #{forward.7} parent=0 // pred_check
    _
  $region23: #{forward.7} parent=0 // pred_check_branch
    %405 = sbr.rel (0) target = $region25
  $region24: #{forward.7} parent=0 // pred_region
    _
  $region25: #{forward.7} parent=0 // pred_fallthru
    _
  // Predicated region
  $region26: #{forward.7} parent=0 // pred_check
    _
  $region27: #{forward.7} parent=0 // pred_check_branch
    %407 = sbr.rel (0) target = $region29
  $region28: #{forward.7} parent=0 // pred_region
    _
  $region29: #{forward.7} parent=0 // pred_fallthru
    _

// kernel: forward.9
$region0: #{forward.9}
  #allocation0 [shape = 'u32[]', space=smem, size = 0x4, offset = 0x4, fixed_abs, tag = 'smem constant byte address 0x4 - core index']
  #allocation1 [shape = 'u32[72,128]{1,0:T(1,128)}', space=vmem, size = 0x9000, scoped, tag = 'internal scratch']
  #allocation2 [shape = 'f32[2,256]{1,0:T(2,128)}', space=vmem, size = 0x800, scoped, tag = 'scratch operand']
  %s0 = inlined_call_operand.vmem [shape: bf16[2,32], index: 0, kind: input, shape index: {}]
  %s1 = inlined_call_operand.vmem [shape: bf16[32,800], index: 1, kind: input, shape index: {}]
  %s2 = inlined_call_operand.vmem [shape: f32[1,800], index: 2, kind: input, shape index: {}]
  %s3 = inlined_call_operand.vmem [shape: bf16[2,800], index: 3, kind: output, shape index: {}]
  %s4 = sld [smem:[#allocation0]]
  $region181: #{forward.9} parent=0
    _
  %s6 = ssub.s32 1, %s4
  %s7 = scalar_select 0, %s6, %s4
  $region1: #{forward.9} parent=0
    #allocation3 [shape = 'u8[32768]{0}', space=vmem, size = 0x8000, scoped, tag = 'input window, operand 1']
    #allocation4 [shape = 'u8[2048]{0}', space=vmem, size = 0x800, scoped, tag = 'output window, operand 0']
    loop: start=0, step=1, limit=6
    $region2: #{forward.9} parent=1 // loop_pre_header
      _
    $region3: #{forward.9} parent=1 // loop_header
      %s9 = sphi 0, %s13
      %p10 = scmp.ge.s32.totalorder %s9, 6
      %s16 = sphi 0, %s35
      %s17 = sphi 0, %s31
      %s18 = sphi 0, %s27
      %s19 = sphi 0, %s16
      %s20 = sphi 0, %s17
      %s21 = sphi 0, %s18
      %s22 = sphi 0, %s19
      %s23 = sphi 0, %s20
      %s24 = sphi 0, %s21
      %s40 = sphi 0, %s42
      %s43 = sphi 0, %s40
      %s44 = sphi 0, %s43
      %s60 = sphi 0, %s44
      %s68 = sphi 0, %s70
      %s71 = sphi 0, %s68
      %s72 = sphi 0, %s71
      %s88 = sphi 0, %s72
      %s94 = sphi 0, %s96
      %s97 = sphi 0, %s94
      %s98 = sphi 0, %s97
      %s114 = sphi 0, %s98
      %s122 = sphi 0, %s124
      %s125 = sphi 0, %s122
      %s126 = sphi 0, %s125
      %s142 = sphi 0, %s126
    $region4: #{forward.9} parent=1 // loop_header_branch
      %12 = sbr.rel (%p10) target = $region8
    $region5: #{forward.9} parent=1 // loop_body
      %s14 = ssub.s32 %s9, 1
      %s15 = ssub.s32 %s9, 2
      %s25 = sadd.s32 1, %s18
      %p26 = scmp.ge.s32.totalorder %s25, 1
      %s27 = scalar_select %p26, 0, %s25
      %s28 = sadd.s32 1, %s17
      %s29 = scalar_select %p26, %s28, %s17
      %p30 = scmp.ge.s32.totalorder %s29, 4
      %s31 = scalar_select %p30, 0, %s29
      %s32 = sadd.s32 1, %s16
      %s33 = scalar_select %p30, %s32, %s16
      %p34 = scmp.ge.s32.totalorder %s33, 1
      %s35 = scalar_select %p34, 0, %s33
      %s36 = ssub.s32 %s16, %s35
      %s37 = ssub.s32 %s18, %s27
      %s38 = sor.u32 %s36, %s37
      %p39 = scmp.eq.s32.totalorder %s38, 0
      %s41 = sadd.s32 %s40, 1
      %s42 = scalar_select %p39, %s40, %s41
      %p45 = pneg %p39
      %p46 = scmp.eq.s32.totalorder %s9, 3
      %p47 = por %p45, %p46
      %p48 = scmp.ne.s32.totalorder %s40, %s43
      %p49 = scmp.eq.s32.totalorder %s9, 0
      %p50 = por %p48, %p49
      %p51 = scmp.ne.s32.totalorder %s40, %s43
      %p52 = scmp.eq.s32.totalorder %s14, 3
      %p53 = por %p51, %p52
      %p54 = scmp.ne.s32.totalorder %s43, %s44
      %p55 = scmp.eq.s32.totalorder %s14, 0
      %p56 = por %p54, %p55
      %p57 = scmp.ne.s32.totalorder %s43, %s44
      %p58 = scmp.eq.s32.totalorder %s15, 3
      %p59 = por %p57, %p58
      %p61 = scmp.ne.s32.totalorder %s44, %s60
      %p62 = scmp.eq.s32.totalorder %s15, 0
      %p63 = por %p61, %p62
      %s64 = ssub.s32 %s18, %s27
      %s65 = ssub.s32 %s17, %s31
      %s66 = sor.u32 %s64, %s65
      %p67 = scmp.eq.s32.totalorder %s66, 0
      %s69 = sadd.s32 %s68, 1
      %s70 = scalar_select %p67, %s68, %s69
      %p73 = pneg %p67
      %p74 = scmp.eq.s32.totalorder %s9, 3
      %p75 = por %p73, %p74
      %p76 = scmp.ne.s32.totalorder %s68, %s71
      %p77 = scmp.eq.s32.totalorder %s9, 0
      %p78 = por %p76, %p77
      %p79 = scmp.ne.s32.totalorder %s68, %s71
      %p80 = scmp.eq.s32.totalorder %s14, 3
      %p81 = por %p79, %p80
      %p82 = scmp.ne.s32.totalorder %s71, %s72
      %p83 = scmp.eq.s32.totalorder %s14, 0
      %p84 = por %p82, %p83
      %p85 = scmp.ne.s32.totalorder %s71, %s72
      %p86 = scmp.eq.s32.totalorder %s15, 3
      %p87 = por %p85, %p86
      %p89 = scmp.ne.s32.totalorder %s72, %s88
      %p90 = scmp.eq.s32.totalorder %s15, 0
      %p91 = por %p89, %p90
      %s92 = ssub.s32 %s17, %s31
      %p93 = scmp.eq.s32.totalorder %s92, 0
      %s95 = sadd.s32 %s94, 1
      %s96 = scalar_select %p93, %s94, %s95
      %p99 = pneg %p93
      %p100 = scmp.eq.s32.totalorder %s9, 3
      %p101 = por %p99, %p100
      %p102 = scmp.ne.s32.totalorder %s94, %s97
      %p103 = scmp.eq.s32.totalorder %s9, 0
      %p104 = por %p102, %p103
      %p105 = scmp.ne.s32.totalorder %s94, %s97
      %p106 = scmp.eq.s32.totalorder %s14, 3
      %p107 = por %p105, %p106
      %p108 = scmp.ne.s32.totalorder %s97, %s98
      %p109 = scmp.eq.s32.totalorder %s14, 0
      %p110 = por %p108, %p109
      %p111 = scmp.ne.s32.totalorder %s97, %s98
      %p112 = scmp.eq.s32.totalorder %s15, 3
      %p113 = por %p111, %p112
      %p115 = scmp.ne.s32.totalorder %s98, %s114
      %p116 = scmp.eq.s32.totalorder %s15, 0
      %p117 = por %p115, %p116
      %s118 = ssub.s32 %s16, %s35
      %s119 = ssub.s32 %s17, %s31
      %s120 = sor.u32 %s118, %s119
      %p121 = scmp.eq.s32.totalorder %s120, 0
      %s123 = sadd.s32 %s122, 1
      %s124 = scalar_select %p121, %s122, %s123
      %p127 = pneg %p121
      %p128 = scmp.eq.s32.totalorder %s9, 3
      %p129 = por %p127, %p128
      %p130 = scmp.ne.s32.totalorder %s122, %s125
      %p131 = scmp.eq.s32.totalorder %s9, 0
      %p132 = por %p130, %p131
      %p133 = scmp.ne.s32.totalorder %s122, %s125
      %p134 = scmp.eq.s32.totalorder %s14, 3
      %p135 = por %p133, %p134
      %p136 = scmp.ne.s32.totalorder %s125, %s126
      %p137 = scmp.eq.s32.totalorder %s14, 0
      %p138 = por %p136, %p137
      %p139 = scmp.ne.s32.totalorder %s125, %s126
      %p140 = scmp.eq.s32.totalorder %s15, 3
      %p141 = por %p139, %p140
      %p143 = scmp.ne.s32.totalorder %s126, %s142
      %p144 = scmp.eq.s32.totalorder %s15, 0
      %p145 = por %p143, %p144
      %p146 = scmp.le.s32.totalorder 1, %s9
      %p147 = scmp.lt.s32.totalorder %s9, 5
      %p148 = pnand %p146, %p147
      %p149 = pneg %p148
      // Predicated region
      $region9: #{forward.9} parent=5 // pred_check
        _
      $region10: #{forward.9} parent=5 // pred_check_branch
        %151 = sbr.rel (%p148) target = $region12
      $region11: #{forward.9} parent=5 // pred_region
        %s152 = ssub.s32 %s9, 1
        // Predicated region
        $region13: #{forward.9} parent=11 // pred_check
          %p153 = pneg %p56
        $region14: #{forward.9} parent=11 // pred_check_branch
          %155 = sbr.rel (%p153) target = $region16
        $region15: #{forward.9} parent=11 // pred_region
          %p156 = scmp.lt.s32.totalorder %s19, 0
          %s157 = scalar_select %p156, %s19, 0
          %p158 = scmp.lt.s32.totalorder %s21, 0
          %s159 = scalar_select %p158, %s21, 0
          %s160 = sadd.s32 %s159, %s157
          %s161 = scalar_lea.vmem %s0, %s160
        $region16: #{forward.9} parent=11 // pred_fallthru
          _
      $region12: #{forward.9} parent=5 // pred_fallthru
        _
      %p162 = scmp.lt.s32.totalorder %s9, 4
      // Predicated region
      $region17: #{forward.9} parent=5 // pred_check
        %p163 = pneg %p162
      $region18: #{forward.9} parent=5 // pred_check_branch
        %165 = sbr.rel (%p163) target = $region20
      $region19: #{forward.9} parent=5 // pred_region
        // Predicated region
        $region21: #{forward.9} parent=19 // pred_check
          %p166 = pneg %p78
        $region22: #{forward.9} parent=19 // pred_check_branch
          %168 = sbr.rel (%p166) target = $region24
        $region23: #{forward.9} parent=19 // pred_region
          %s169 = sand.u32 %s68, 1
          %s170 = sand.u32 %s68, 1
          %s171 = smul.addr %s170, 32
          %s172 = scalar_lea.vmem [#allocation3], %s171
          %s173 = smul.u32 4, %s18
          %s174 = smul.u32 2, %s17
          %s175 = ssub.s32 7, %s174
          %p176 = scmp.lt.s32.totalorder %s175, 2
          %s177 = scalar_select %p176, %s175, 2
          %s178 = smul.u32 16, %s177
          %p179 = scmp.ne.s32.totalorder 0, %s178
          %s180 = smul.addr %s173, 7
          %s181 = sadd.s32 %s174, %s180
          %s182 = smul.addr %s181, 4
          %s183 = scalar_lea.vmem %s1, %s182
          %s184 = smul.u32 %s177, 4
          // Predicated region
          $region25: #{forward.9} parent=23 // pred_check
            %p185 = pneg %p179
          $region26: #{forward.9} parent=23 // pred_check_branch
            %187 = sbr.rel (%p185) target = $region28
          $region27: #{forward.9} parent=23 // pred_region
            %p188 = scmp.lt.u32.totalorder %s184, 8
            %p189 = pneg %p188
            // Predicated region
            $region29: #{forward.9} parent=27 // pred_check
              _
            $region30: #{forward.9} parent=27 // pred_check_branch
              %191 = sbr.rel (%p188) target = $region32
            $region31: #{forward.9} parent=27 // pred_region
              %s213 = sand.u32 %s184, 7
              %p214 = scmp.eq.s32.totalorder %s213, 0
              // Predicated region
              $region44: #{forward.9} parent=31 // pred_check
                %p215 = pneg %p214
              $region45: #{forward.9} parent=31 // pred_check_branch
                %217 = sbr.rel (%p215) target = $region47
              $region46: #{forward.9} parent=31 // pred_region
                %s218 = sshrl.u32 %s184, 3
                %s219 = sshrl.u32 %s218, 3
                // While loop
                $region48: #{forward.9} parent=46 // loop_pre_header
                  _
                $region49: #{forward.9} parent=46 // loop_header
                  %s221 = sphi 0, %s223
                  %p222 = scmp.ge.s32.totalorder %s221, %s219
                  %s226 = sphi 0, %s295
                  %s227 = sphi %s183, %s298
                  %s228 = sphi %s172, %s299
                $region50: #{forward.9} parent=46 // loop_header_branch
                  %225 = sbr.rel (%p222) target = $region54
                $region51: #{forward.9} parent=46 // loop_body
                  %v229 = vld [vmem:[%s227] sm:$0xff]
                  %230 = vst [vmem:[%s228] sm:$0xff] %v229
                  %v231 = vld [vmem:[%s227 + $0x8] sm:$0xff]
                  %232 = vst [vmem:[%s228 + $0x8] sm:$0xff] %v231
                  %v233 = vld [vmem:[%s227 + $0x10] sm:$0xff]
                  %234 = vst [vmem:[%s228 + $0x10] sm:$0xff] %v233
                  %v235 = vld [vmem:[%s227 + $0x18] sm:$0xff]
                  %236 = vst [vmem:[%s228 + $0x18] sm:$0xff] %v235
                  %v237 = vld [vmem:[%s227 + $0x20] sm:$0xff]
                  %238 = vst [vmem:[%s228 + $0x20] sm:$0xff] %v237
                  %v239 = vld [vmem:[%s227 + $0x28] sm:$0xff]
                  %240 = vst [vmem:[%s228 + $0x28] sm:$0xff] %v239
                  %v241 = vld [vmem:[%s227 + $0x30] sm:$0xff]
                  %242 = vst [vmem:[%s228 + $0x30] sm:$0xff] %v241
                  %v243 = vld [vmem:[%s227 + $0x38] sm:$0xff]
                  %244 = vst [vmem:[%s228 + $0x38] sm:$0xff] %v243
                  %v245 = vld [vmem:[%s227 + $0x1c] sm:$0xff]
                  %246 = vst [vmem:[%s228 + $0x8] sm:$0xff] %v245
                  %v247 = vld [vmem:[%s227 + $0x24] sm:$0xff]
                  %248 = vst [vmem:[%s228 + $0x10] sm:$0xff] %v247
                  %v249 = vld [vmem:[%s227 + $0x2c] sm:$0xff]
                  %250 = vst [vmem:[%s228 + $0x18] sm:$0xff] %v249
                  %v251 = vld [vmem:[%s227 + $0x34] sm:$0xff]
                  %252 = vst [vmem:[%s228 + $0x20] sm:$0xff] %v251
                  %v253 = vld [vmem:[%s227 + $0x3c] sm:$0xff]
                  %254 = vst [vmem:[%s228 + $0x28] sm:$0xff] %v253
                  %v255 = vld [vmem:[%s227 + $0x44] sm:$0xff]
                  %256 = vst [vmem:[%s228 + $0x30] sm:$0xff] %v255
                  %v257 = vld [vmem:[%s227 + $0x4c] sm:$0xff]
                  %258 = vst [vmem:[%s228 + $0x38] sm:$0xff] %v257
                  %v259 = vld [vmem:[%s227 + $0x54] sm:$0xff]
                  %260 = vst [vmem:[%s228 + $0x40] sm:$0xff] %v259
                  %v261 = vld [vmem:[%s227 + $0x38] sm:$0xff]
                  %262 = vst [vmem:[%s228 + $0x10] sm:$0xff] %v261
                  %v263 = vld [vmem:[%s227 + $0x40] sm:$0xff]
                  %264 = vst [vmem:[%s228 + $0x18] sm:$0xff] %v263
                  %v265 = vld [vmem:[%s227 + $0x48] sm:$0xff]
                  %266 = vst [vmem:[%s228 + $0x20] sm:$0xff] %v265
                  %v267 = vld [vmem:[%s227 + $0x50] sm:$0xff]
                  %268 = vst [vmem:[%s228 + $0x28] sm:$0xff] %v267
                  %v269 = vld [vmem:[%s227 + $0x58] sm:$0xff]
                  %270 = vst [vmem:[%s228 + $0x30] sm:$0xff] %v269
                  %v271 = vld [vmem:[%s227 + $0x60] sm:$0xff]
                  %272 = vst [vmem:[%s228 + $0x38] sm:$0xff] %v271
                  %v273 = vld [vmem:[%s227 + $0x68] sm:$0xff]
                  %274 = vst [vmem:[%s228 + $0x40] sm:$0xff] %v273
                  %v275 = vld [vmem:[%s227 + $0x70] sm:$0xff]
                  %276 = vst [vmem:[%s228 + $0x48] sm:$0xff] %v275
                  %v277 = vld [vmem:[%s227 + $0x54] sm:$0xff]
                  %278 = vst [vmem:[%s228 + $0x18] sm:$0xff] %v277
                  %v279 = vld [vmem:[%s227 + $0x5c] sm:$0xff]
                  %280 = vst [vmem:[%s228 + $0x20] sm:$0xff] %v279
                  %v281 = vld [vmem:[%s227 + $0x64] sm:$0xff]
                  %282 = vst [vmem:[%s228 + $0x28] sm:$0xff] %v281
                  %v283 = vld [vmem:[%s227 + $0x6c] sm:$0xff]
                  %284 = vst [vmem:[%s228 + $0x30] sm:$0xff] %v283
                  %v285 = vld [vmem:[%s227 + $0x74] sm:$0xff]
                  %286 = vst [vmem:[%s228 + $0x38] sm:$0xff] %v285
                  %v287 = vld [vmem:[%s227 + $0x7c] sm:$0xff]
                  %288 = vst [vmem:[%s228 + $0x40] sm:$0xff] %v287
                  %v289 = vld [vmem:[%s227 + $0x84] sm:$0xff]
                  %290 = vst [vmem:[%s228 + $0x48] sm:$0xff] %v289
                  %v291 = vld [vmem:[%s227 + $0x8c] sm:$0xff]
                  %292 = vst [vmem:[%s228 + $0x50] sm:$0xff] %v291
                  %s293 = sadd.s32 1, %s226
                  %p294 = scmp.ge.s32.totalorder %s293, %s219
                  %s295 = scalar_select %p294, 0, %s293
                  %s296 = smul.u32 %s295, 64
                  %s297 = smul.u32 %s295, 64
                  %s298 = scalar_lea.vmem %s183, %s296
                  %s299 = scalar_lea.vmem %s172, %s297 [#allocation3]
                $region52: #{forward.9} parent=46 // loop_footer
                  %s223 = sadd.s32 %s221, 1
                $region53: #{forward.9} parent=46 // loop_footer_branch
                  %220 = sbr.rel target = $region49
                $region54: #{forward.9} parent=46 // loop_exit
                  _
                %s300 = sshrl.u32 %s218, 3
                %s301 = sand.u32 %s218, 7
                %s302 = smul.u32 %s300, 8
                %s303 = smul.u32 8, %s302
                %s304 = scalar_lea.vmem %s183, %s303
                %s305 = smul.u32 8, %s302
                %s306 = scalar_lea.vmem %s172, %s305 [#allocation3]
                // While loop
                $region55: #{forward.9} parent=46 // loop_pre_header
                  _
                $region56: #{forward.9} parent=46 // loop_header
                  %s308 = sphi 0, %s310
                  %p309 = scmp.ge.s32.totalorder %s308, %s301
                  %s313 = sphi 0, %s326
                  %s314 = sphi %s304, %s329
                  %s315 = sphi %s306, %s330
                $region57: #{forward.9} parent=46 // loop_header_branch
                  %312 = sbr.rel (%p309) target = $region61
                $region58: #{forward.9} parent=46 // loop_body
                  %v316 = vld [vmem:[%s314] sm:$0xff]
                  %317 = vst [vmem:[%s315] sm:$0xff] %v316
                  %v318 = vld [vmem:[%s314 + $0x1c] sm:$0xff]
                  %319 = vst [vmem:[%s315 + $0x8] sm:$0xff] %v318
                  %v320 = vld [vmem:[%s314 + $0x38] sm:$0xff]
                  %321 = vst [vmem:[%s315 + $0x10] sm:$0xff] %v320
                  %v322 = vld [vmem:[%s314 + $0x54] sm:$0xff]
                  %323 = vst [vmem:[%s315 + $0x18] sm:$0xff] %v322
                  %s324 = sadd.s32 1, %s313
                  %p325 = scmp.ge.s32.totalorder %s324, %s301
                  %s326 = scalar_select %p325, 0, %s324
                  %s327 = smul.u32 %s326, 8
                  %s328 = smul.u32 %s326, 8
                  %s329 = scalar_lea.vmem %s304, %s327
                  %s330 = scalar_lea.vmem %s306, %s328 [#allocation3]
                $region59: #{forward.9} parent=46 // loop_footer
                  %s310 = sadd.s32 %s308, 1
                $region60: #{forward.9} parent=46 // loop_footer_branch
                  %307 = sbr.rel target = $region56
                $region61: #{forward.9} parent=46 // loop_exit
                  _
              $region47: #{forward.9} parent=31 // pred_fallthru
                _
              %p331 = pneg %p214
              // Predicated region
              $region62: #{forward.9} parent=31 // pred_check
                _
              $region63: #{forward.9} parent=31 // pred_check_branch
                %333 = sbr.rel (%p214) target = $region65
              $region64: #{forward.9} parent=31 // pred_region
                %s334 = sand.u32 %s184, 7
                %s335 = ssub.s32 %s184, %s334
                %s336 = scalar_lea.vmem %s183, %s335
                %s337 = ssub.s32 %s184, %s334
                %s338 = scalar_lea.vmem %s172, %s337 [#allocation3]
                %s339 = sshrl.u32 %s184, 3
                %s340 = sshrl.u32 %s339, 3
                // While loop
                $region66: #{forward.9} parent=64 // loop_pre_header
                  _
                $region67: #{forward.9} parent=64 // loop_header
                  %s342 = sphi 0, %s344
                  %p343 = scmp.ge.s32.totalorder %s342, %s340
                  %s347 = sphi 0, %s416
                  %s348 = sphi %s183, %s419
                  %s349 = sphi %s172, %s420
                $region68: #{forward.9} parent=64 // loop_header_branch
                  %346 = sbr.rel (%p343) target = $region72
                $region69: #{forward.9} parent=64 // loop_body
                  %v350 = vld [vmem:[%s348] sm:$0xff]
                  %351 = vst [vmem:[%s349] sm:$0xff] %v350
                  %v352 = vld [vmem:[%s348 + $0x8] sm:$0xff]
                  %353 = vst [vmem:[%s349 + $0x8] sm:$0xff] %v352
                  %v354 = vld [vmem:[%s348 + $0x10] sm:$0xff]
                  %355 = vst [vmem:[%s349 + $0x10] sm:$0xff] %v354
                  %v356 = vld [vmem:[%s348 + $0x18] sm:$0xff]
                  %357 = vst [vmem:[%s349 + $0x18] sm:$0xff] %v356
                  %v358 = vld [vmem:[%s348 + $0x20] sm:$0xff]
                  %359 = vst [vmem:[%s349 + $0x20] sm:$0xff] %v358
                  %v360 = vld [vmem:[%s348 + $0x28] sm:$0xff]
                  %361 = vst [vmem:[%s349 + $0x28] sm:$0xff] %v360
                  %v362 = vld [vmem:[%s348 + $0x30] sm:$0xff]
                  %363 = vst [vmem:[%s349 + $0x30] sm:$0xff] %v362
                  %v364 = vld [vmem:[%s348 + $0x38] sm:$0xff]
                  %365 = vst [vmem:[%s349 + $0x38] sm:$0xff] %v364
                  %v366 = vld [vmem:[%s348 + $0x1c] sm:$0xff]
                  %367 = vst [vmem:[%s349 + $0x8] sm:$0xff] %v366
                  %v368 = vld [vmem:[%s348 + $0x24] sm:$0xff]
                  %369 = vst [vmem:[%s349 + $0x10] sm:$0xff] %v368
                  %v370 = vld [vmem:[%s348 + $0x2c] sm:$0xff]
                  %371 = vst [vmem:[%s349 + $0x18] sm:$0xff] %v370
                  %v372 = vld [vmem:[%s348 + $0x34] sm:$0xff]
                  %373 = vst [vmem:[%s349 + $0x20] sm:$0xff] %v372
                  %v374 = vld [vmem:[%s348 + $0x3c] sm:$0xff]
                  %375 = vst [vmem:[%s349 + $0x28] sm:$0xff] %v374
                  %v376 = vld [vmem:[%s348 + $0x44] sm:$0xff]
                  %377 = vst [vmem:[%s349 + $0x30] sm:$0xff] %v376
                  %v378 = vld [vmem:[%s348 + $0x4c] sm:$0xff]
                  %379 = vst [vmem:[%s349 + $0x38] sm:$0xff] %v378
                  %v380 = vld [vmem:[%s348 + $0x54] sm:$0xff]
                  %381 = vst [vmem:[%s349 + $0x40] sm:$0xff] %v380
                  %v382 = vld [vmem:[%s348 + $0x38] sm:$0xff]
                  %383 = vst [vmem:[%s349 + $0x10] sm:$0xff] %v382
                  %v384 = vld [vmem:[%s348 + $0x40] sm:$0xff]
                  %385 = vst [vmem:[%s349 + $0x18] sm:$0xff] %v384
                  %v386 = vld [vmem:[%s348 + $0x48] sm:$0xff]
                  %387 = vst [vmem:[%s349 + $0x20] sm:$0xff] %v386
                  %v388 = vld [vmem:[%s348 + $0x50] sm:$0xff]
                  %389 = vst [vmem:[%s349 + $0x28] sm:$0xff] %v388
                  %v390 = vld [vmem:[%s348 + $0x58] sm:$0xff]
                  %391 = vst [vmem:[%s349 + $0x30] sm:$0xff] %v390
                  %v392 = vld [vmem:[%s348 + $0x60] sm:$0xff]
                  %393 = vst [vmem:[%s349 + $0x38] sm:$0xff] %v392
                  %v394 = vld [vmem:[%s348 + $0x68] sm:$0xff]
                  %395 = vst [vmem:[%s349 + $0x40] sm:$0xff] %v394
                  %v396 = vld [vmem:[%s348 + $0x70] sm:$0xff]
                  %397 = vst [vmem:[%s349 + $0x48] sm:$0xff] %v396
                  %v398 = vld [vmem:[%s348 + $0x54] sm:$0xff]
                  %399 = vst [vmem:[%s349 + $0x18] sm:$0xff] %v398
                  %v400 = vld [vmem:[%s348 + $0x5c] sm:$0xff]
                  %401 = vst [vmem:[%s349 + $0x20] sm:$0xff] %v400
                  %v402 = vld [vmem:[%s348 + $0x64] sm:$0xff]
                  %403 = vst [vmem:[%s349 + $0x28] sm:$0xff] %v402
                  %v404 = vld [vmem:[%s348 + $0x6c] sm:$0xff]
                  %405 = vst [vmem:[%s349 + $0x30] sm:$0xff] %v404
                  %v406 = vld [vmem:[%s348 + $0x74] sm:$0xff]
                  %407 = vst [vmem:[%s349 + $0x38] sm:$0xff] %v406
                  %v408 = vld [vmem:[%s348 + $0x7c] sm:$0xff]
                  %409 = vst [vmem:[%s349 + $0x40] sm:$0xff] %v408
                  %v410 = vld [vmem:[%s348 + $0x84] sm:$0xff]
                  %411 = vst [vmem:[%s349 + $0x48] sm:$0xff] %v410
                  %v412 = vld [vmem:[%s348 + $0x8c] sm:$0xff]
                  %413 = vst [vmem:[%s349 + $0x50] sm:$0xff] %v412
                  %s414 = sadd.s32 1, %s347
                  %p415 = scmp.ge.s32.totalorder %s414, %s340
                  %s416 = scalar_select %p415, 0, %s414
                  %s417 = smul.u32 %s416, 64
                  %s418 = smul.u32 %s416, 64
                  %s419 = scalar_lea.vmem %s183, %s417
                  %s420 = scalar_lea.vmem %s172, %s418 [#allocation3]
                $region70: #{forward.9} parent=64 // loop_footer
                  %s344 = sadd.s32 %s342, 1
                $region71: #{forward.9} parent=64 // loop_footer_branch
                  %341 = sbr.rel target = $region67
                $region72: #{forward.9} parent=64 // loop_exit
                  _
                %s421 = sshrl.u32 %s339, 3
                %s422 = sand.u32 %s339, 7
                %s423 = smul.u32 %s421, 8
                %s424 = smul.u32 8, %s423
                %s425 = scalar_lea.vmem %s183, %s424
                %s426 = smul.u32 8, %s423
                %s427 = scalar_lea.vmem %s172, %s426 [#allocation3]
                // While loop
                $region73: #{forward.9} parent=64 // loop_pre_header
                  _
                $region74: #{forward.9} parent=64 // loop_header
                  %s429 = sphi 0, %s431
                  %p430 = scmp.ge.s32.totalorder %s429, %s422
                  %s434 = sphi 0, %s447
                  %s435 = sphi %s425, %s450
                  %s436 = sphi %s427, %s451
                $region75: #{forward.9} parent=64 // loop_header_branch
                  %433 = sbr.rel (%p430) target = $region79
                $region76: #{forward.9} parent=64 // loop_body
                  %v437 = vld [vmem:[%s435] sm:$0xff]
                  %438 = vst [vmem:[%s436] sm:$0xff] %v437
                  %v439 = vld [vmem:[%s435 + $0x1c] sm:$0xff]
                  %440 = vst [vmem:[%s436 + $0x8] sm:$0xff] %v439
                  %v441 = vld [vmem:[%s435 + $0x38] sm:$0xff]
                  %442 = vst [vmem:[%s436 + $0x10] sm:$0xff] %v441
                  %v443 = vld [vmem:[%s435 + $0x54] sm:$0xff]
                  %444 = vst [vmem:[%s436 + $0x18] sm:$0xff] %v443
                  %s445 = sadd.s32 1, %s434
                  %p446 = scmp.ge.s32.totalorder %s445, %s422
                  %s447 = scalar_select %p446, 0, %s445
                  %s448 = smul.u32 %s447, 8
                  %s449 = smul.u32 %s447, 8
                  %s450 = scalar_lea.vmem %s425, %s448
                  %s451 = scalar_lea.vmem %s427, %s449 [#allocation3]
                $region77: #{forward.9} parent=64 // loop_footer
                  %s431 = sadd.s32 %s429, 1
                $region78: #{forward.9} parent=64 // loop_footer_branch
                  %428 = sbr.rel target = $region74
                $region79: #{forward.9} parent=64 // loop_exit
                  _
                %s452 = sshll.u32 1, %s334
                %s453 = ssub.s32 %s452, 1
                loop: start=0, step=1, limit=1
                $region80: #{forward.9} parent=64 // loop_pre_header
                  _
                $region81: #{forward.9} parent=64 // loop_header
                  %s455 = sphi 0, %s459
                  %p456 = scmp.ge.s32.totalorder %s455, 1
                  %s460 = sphi %s336, %s336
                  %s461 = sphi %s338, %s338
                $region82: #{forward.9} parent=64 // loop_header_branch
                  %458 = sbr.rel (%p456) target = $region86
                $region83: #{forward.9} parent=64 // loop_body
                  %v462 = vld [vmem:[%s460] sm:%s453]
                  %463 = vst [vmem:[%s461] sm:%s453] %v462
                  %v464 = vld [vmem:[%s460 + $0x1c] sm:%s453]
                  %465 = vst [vmem:[%s461 + $0x8] sm:%s453] %v464
                  %v466 = vld [vmem:[%s460 + $0x38] sm:%s453]
                  %467 = vst [vmem:[%s461 + $0x10] sm:%s453] %v466
                  %v468 = vld [vmem:[%s460 + $0x54] sm:%s453]
                  %469 = vst [vmem:[%s461 + $0x18] sm:%s453] %v468
                $region84: #{forward.9} parent=64 // loop_footer
                  %s459 = sadd.s32 1, %s455
                $region85: #{forward.9} parent=64 // loop_footer_branch
                  %454 = sbr.rel target = $region81
                $region86: #{forward.9} parent=64 // loop_exit
                  _
              $region65: #{forward.9} parent=31 // pred_fallthru
                _
            $region32: #{forward.9} parent=27 // pred_fallthru
              _
            // Predicated region
            $region33: #{forward.9} parent=27 // pred_check
              %p192 = pneg %p188
            $region34: #{forward.9} parent=27 // pred_check_branch
              %194 = sbr.rel (%p192) target = $region36
            $region35: #{forward.9} parent=27 // pred_region
              %s195 = sshll.u32 1, %s184
              %s196 = ssub.s32 %s195, 1
              loop: start=0, step=1, limit=1
              $region37: #{forward.9} parent=35 // loop_pre_header
                _
              $region38: #{forward.9} parent=35 // loop_header
                %s198 = sphi 0, %s202
                %p199 = scmp.ge.s32.totalorder %s198, 1
                %s203 = sphi %s183, %s183
                %s204 = sphi %s172, %s172
              $region39: #{forward.9} parent=35 // loop_header_branch
                %201 = sbr.rel (%p199) target = $region43
              $region40: #{forward.9} parent=35 // loop_body
                %v205 = vld [vmem:[%s203] sm:%s196]
                %206 = vst [vmem:[%s204] sm:%s196] %v205
                %v207 = vld [vmem:[%s203 + $0x1c] sm:%s196]
                %208 = vst [vmem:[%s204 + $0x8] sm:%s196] %v207
                %v209 = vld [vmem:[%s203 + $0x38] sm:%s196]
                %210 = vst [vmem:[%s204 + $0x10] sm:%s196] %v209
                %v211 = vld [vmem:[%s203 + $0x54] sm:%s196]
                %212 = vst [vmem:[%s204 + $0x18] sm:%s196] %v211
              $region41: #{forward.9} parent=35 // loop_footer
                %s202 = sadd.s32 1, %s198
              $region42: #{forward.9} parent=35 // loop_footer_branch
                %197 = sbr.rel target = $region38
              $region43: #{forward.9} parent=35 // loop_exit
                _
            $region36: #{forward.9} parent=27 // pred_fallthru
              _
          $region28: #{forward.9} parent=23 // pred_fallthru
            _
          %470 = vnop
        $region24: #{forward.9} parent=19 // pred_fallthru
          _
        // Predicated region
        $region87: #{forward.9} parent=19 // pred_check
          %p471 = pneg %p104
        $region88: #{forward.9} parent=19 // pred_check_branch
          %473 = sbr.rel (%p471) target = $region90
        $region89: #{forward.9} parent=19 // pred_region
          %s474 = smul.u32 2, %s17
          %s475 = ssub.s32 7, %s474
          %p476 = scmp.lt.s32.totalorder %s475, 2
          %s477 = scalar_select %p476, %s475, 2
          %p478 = scmp.lt.s32.totalorder %s474, 6
          %s479 = scalar_select %p478, %s474, 6
          %s480 = scalar_lea.vmem %s2, %s479
          %s481 = smul.u32 2, %s17
          %s482 = ssub.s32 7, %s481
          %p483 = scmp.lt.s32.totalorder %s482, 2
          %s484 = scalar_select %p483, %s482, 2
        $region90: #{forward.9} parent=19 // pred_fallthru
          _
      $region20: #{forward.9} parent=5 // pred_fallthru
        _
      %p485 = scmp.le.s32.totalorder 1, %s9
      %p486 = scmp.lt.s32.totalorder %s9, 5
      %p487 = pnand %p485, %p486
      %p488 = pneg %p487
      // Predicated region
      $region91: #{forward.9} parent=5 // pred_check
        _
      $region92: #{forward.9} parent=5 // pred_check_branch
        %490 = sbr.rel (%p487) target = $region94
      $region93: #{forward.9} parent=5 // pred_region
        %s491 = ssub.s32 %s9, 1
        %s492 = sand.u32 %s71, 1
        %s493 = sand.u32 %s71, 1
        %s494 = smul.addr %s493, 32
        %s495 = scalar_lea.vmem [#allocation3], %s494
        // Predicated region
        $region95: #{forward.9} parent=93 // pred_check
          %p496 = pneg %p84
        $region96: #{forward.9} parent=93 // pred_check_branch
          %498 = sbr.rel (%p496) target = $region98
        $region97: #{forward.9} parent=93 // pred_region
          _
        $region98: #{forward.9} parent=93 // pred_fallthru
          _
        %p499 = scmp.lt.s32.totalorder %s19, 0
        %s500 = scalar_select %p499, %s19, 0
        %p501 = scmp.lt.s32.totalorder %s21, 0
        %s502 = scalar_select %p501, %s21, 0
        %s503 = sadd.s32 %s502, %s500
        %s504 = scalar_lea.vmem %s0, %s503
        %p505 = pneg %p56
        %p506 = pneg %p53
        %s507 = sand.u32 %s71, 1
        %s508 = sand.u32 %s71, 1
        %s509 = smul.addr %s508, 32
        %s510 = scalar_lea.vmem [#allocation3], %s509
        %p511 = pneg %p84
        %p512 = pneg %p81
        %s513 = smul.u32 2, %s20
        %s514 = ssub.s32 7, %s513
        %p515 = scmp.lt.s32.totalorder %s514, 2
        %s516 = scalar_select %p515, %s514, 2
        %p517 = scmp.lt.s32.totalorder %s513, 6
        %s518 = scalar_select %p517, %s513, 6
        %s519 = scalar_lea.vmem %s2, %s518
        %p520 = pneg %p110
        %p521 = pneg %p107
        %p522 = pneg %p138
        %p523 = pneg %p135
        %s524 = sand.u32 %s125, 1
        %s525 = sand.u32 %s125, 1
        %s526 = smul.addr %s525, 2
        %s527 = scalar_lea.vmem [#allocation4], %s526
        %p528 = scmp.lt.s32.totalorder %s19, 0
        %s529 = scalar_select %p528, %s19, 0
        %p530 = scmp.lt.s32.totalorder %s21, 0
        %s531 = scalar_select %p530, %s21, 0
        %s532 = sadd.s32 %s531, %s529
        %s533 = scalar_lea.vmem %s0, %s532
        %s534 = smul.u32 4, %s21
        %s535 = smul.u32 2, %s20
        %s536 = ssub.s32 7, %s535
        %p537 = scmp.lt.s32.totalorder %s536, 2
        %s538 = scalar_select %p537, %s536, 2
        %s539 = smul.u32 16, %s538
        %s540 = smul.u32 2, %s20
        %s541 = ssub.s32 7, %s540
        %p542 = scmp.lt.s32.totalorder %s541, 2
        %s543 = scalar_select %p542, %s541, 2
        %p544 = scmp.lt.s32.totalorder %s540, 6
        %s545 = scalar_select %p544, %s540, 6
        %s546 = scalar_lea.vmem %s2, %s545
        %s547 = smul.u32 2, %s20
        %s548 = ssub.s32 7, %s547
        %p549 = scmp.lt.s32.totalorder %s548, 2
        %s550 = scalar_select %p549, %s548, 2
        %s551 = smul.u32 2, %s20
        %s552 = ssub.s32 7, %s551
        %p553 = scmp.lt.s32.totalorder %s552, 2
        %s554 = scalar_select %p553, %s552, 2
        %p556 = scmp.eq.s32.totalorder %s21, 0
        // Predicated region
        $region99: #{forward.9} parent=93 // pred_check
          %p557 = pneg %p556
        $region100: #{forward.9} parent=93 // pred_check_branch
          %559 = sbr.rel (%p557) target = $region102
        $region101: #{forward.9} parent=93 // pred_region
          %560 = vst [vmem:[#allocation2] sm:$0xf] 0.0
        $region102: #{forward.9} parent=93 // pred_fallthru
          _
        %v561 = vld [vmem:[#allocation2] sm:$0xf]
        %v562 = vld [vmem:[%s533] sm:$0x1]
        %v563 = vld [vmem:[%s495] sm:$0xff]
        %v564 = vld [vmem:[%s495 + $0x8] sm:$0xff]
        %v565 = vld [vmem:[%s495 + $0x10] sm:$0xff]
        %v566 = vld [vmem:[%s495 + $0x18] sm:$0xff]
        %v571 = vunpack.c.l.b16 %v563
        %v572 = vunpack.c.h.b16 %v563
        %v573 = vunpack.c.l.b16 %v564
        %v574 = vunpack.c.h.b16 %v564
        %v575 = vunpack.c.l.b16 %v565
        %v576 = vunpack.c.h.b16 %v565
        %v577 = vunpack.c.l.b16 %v566
        %v578 = vunpack.c.h.b16 %v566
        %v579 = vpack.c.b16 %v573, %v571
        %v580 = vpack.c.b16 %v574, %v572
        %v581 = vpack.c.b16 %v577, %v575
        %v582 = vpack.c.b16 %v578, %v576
        %vm587 = vcmask 261120
        %v589 = vsel %vm587, %v562, 0
        %591 = vmatpush.bf16.msra.mxu0 0
        %592 = vmatpush.bf16.msra.mxu0 0
        %593 = vmatpush.bf16.msra.mxu0 0
        %594 = vmatpush.bf16.msra.mxu0 0
        %595 = vmatpush.bf16.msra.mxu0 0
        %596 = vmatpush.bf16.msra.mxu0 0
        %597 = vmatpush.bf16.msra.mxu0 %v581
        %598 = vmatpush.bf16.msra.mxu0 %v579
        %599 = vmatmul.bf16.gmra.mxu0 %v589
        %v600 = vpop.f32.mrf.mxu0
        %v601 = vadd.f32 0.0, %v600
        %v602 = vpop.f32.mrf.mxu0
        %603 = vdwg.mxu0
        %604 = vmatpush.bf16.msra.mxu0 0
        %605 = vmatpush.bf16.msra.mxu0 0
        %606 = vmatpush.bf16.msra.mxu0 0
        %607 = vmatpush.bf16.msra.mxu0 0
        %608 = vmatpush.bf16.msra.mxu0 0
        %609 = vmatpush.bf16.msra.mxu0 0
        %610 = vmatpush.bf16.msra.mxu0 %v582
        %611 = vmatpush.bf16.msra.mxu0 %v580
        %612 = vmatmul.bf16.gmra.mxu0 %v589
        %v613 = vpop.f32.mrf.mxu0
        %v614 = vadd.f32 0.0, %v613
        %v615 = vpop.f32.mrf.mxu0
        %616 = vdwg.mxu0
        %v619 = vrot.slane %v614, 6
        %vm620 = vcmask 1041408
        %v621 = vsel %vm620, %v601, %v619
        %v623 = vadd.f32 %v561, %v621
        %624 = vst [vmem:[#allocation2] sm:$0xf] %v623
        // Predicated region
        $region103: #{forward.9} parent=93 // pred_check
          %p625 = pneg %p556
        $region104: #{forward.9} parent=93 // pred_check_branch
          %627 = sbr.rel (%p625) target = $region106
        $region105: #{forward.9} parent=93 // pred_region
          %v628 = vld [vmem:[#allocation2] sm:$0xf]
          %v629 = vld [vmem:[%s546] sm:$0x3]
          %v631 = vperm.slane %v629, 0
          %v632 = vperm.slane %v629, 1
          %v633 = vrot.slane %v632, 6
          %v634 = vsel %vm620, %v631, %v633
          %v636 = vadd.f32 %v628, %v634
          %v637 = vmax.f32 %v636, 0.0
          %639 = vst [vmem:[#allocation1] ss:$4 sm:$0xff] %v637
          %v640 = vld.sshfl [vmem:[#allocation1] sm:$0xff pattern:$0x73625140]
          %v641 = vld.sshfl [vmem:[#allocation1 + $0x8] sm:$0xff pattern:$0x73625140]
          %v644 = vpack.c.bf16 %v641, %v640
          %v646 = vrot.slane %v644, 3
          %vm647 = vcmask 1040384
          %v650 = vsel %vm647, %v644, %v646
          %652 = vst [vmem:[%s527] sm:$0x3] %v650
        $region106: #{forward.9} parent=93 // pred_fallthru
          _
        %s653 = sand.u32 %s125, 1
        %s654 = sand.u32 %s125, 1
        %s655 = smul.addr %s654, 2
        %s656 = scalar_lea.vmem [#allocation4], %s655
        // Predicated region
        $region107: #{forward.9} parent=93 // pred_check
          %p657 = pneg %p135
        $region108: #{forward.9} parent=93 // pred_check_branch
          %659 = sbr.rel (%p657) target = $region110
        $region109: #{forward.9} parent=93 // pred_region
          %s660 = smul.u32 2, %s20
          %s661 = ssub.s32 7, %s660
          %p662 = scmp.lt.s32.totalorder %s661, 2
          %s663 = scalar_select %p662, %s661, 2
          %p664 = scmp.ne.s32.totalorder 0, %s663
          %s665 = smul.addr %s19, 7
          %s666 = sadd.s32 %s660, %s665
          %s667 = scalar_lea.vmem %s3, %s666
          // Predicated region
          $region111: #{forward.9} parent=109 // pred_check
            %p668 = pneg %p664
          $region112: #{forward.9} parent=109 // pred_check_branch
            %670 = sbr.rel (%p668) target = $region114
          $region113: #{forward.9} parent=109 // pred_region
            %p671 = scmp.lt.u32.totalorder %s663, 8
            %p672 = pneg %p671
            // Predicated region
            $region115: #{forward.9} parent=113 // pred_check
              _
            $region116: #{forward.9} parent=113 // pred_check_branch
              %674 = sbr.rel (%p671) target = $region118
            $region117: #{forward.9} parent=113 // pred_region
              %s690 = sand.u32 %s663, 7
              %p691 = scmp.eq.s32.totalorder %s690, 0
              // Predicated region
              $region130: #{forward.9} parent=117 // pred_check
                %p692 = pneg %p691
              $region131: #{forward.9} parent=117 // pred_check_branch
                %694 = sbr.rel (%p692) target = $region133
              $region132: #{forward.9} parent=117 // pred_region
                %s695 = sshrl.u32 %s663, 3
                %s696 = sshrl.u32 %s695, 5
                // While loop
                $region134: #{forward.9} parent=132 // loop_pre_header
                  _
                $region135: #{forward.9} parent=132 // loop_header
                  %s698 = sphi 0, %s700
                  %p699 = scmp.ge.s32.totalorder %s698, %s696
                  %s703 = sphi 0, %s772
                  %s704 = sphi %s656, %s775
                  %s705 = sphi %s667, %s776
                $region136: #{forward.9} parent=132 // loop_header_branch
                  %702 = sbr.rel (%p699) target = $region140
                $region137: #{forward.9} parent=132 // loop_body
                  %v706 = vld [vmem:[%s704] sm:$0xff]
                  %707 = vst [vmem:[%s705] sm:$0xff] %v706
                  %v708 = vld [vmem:[%s704 + $0x8] sm:$0xff]
                  %709 = vst [vmem:[%s705 + $0x8] sm:$0xff] %v708
                  %v710 = vld [vmem:[%s704 + $0x10] sm:$0xff]
                  %711 = vst [vmem:[%s705 + $0x10] sm:$0xff] %v710
                  %v712 = vld [vmem:[%s704 + $0x18] sm:$0xff]
                  %713 = vst [vmem:[%s705 + $0x18] sm:$0xff] %v712
                  %v714 = vld [vmem:[%s704 + $0x20] sm:$0xff]
                  %715 = vst [vmem:[%s705 + $0x20] sm:$0xff] %v714
                  %v716 = vld [vmem:[%s704 + $0x28] sm:$0xff]
                  %717 = vst [vmem:[%s705 + $0x28] sm:$0xff] %v716
                  %v718 = vld [vmem:[%s704 + $0x30] sm:$0xff]
                  %719 = vst [vmem:[%s705 + $0x30] sm:$0xff] %v718
                  %v720 = vld [vmem:[%s704 + $0x38] sm:$0xff]
                  %721 = vst [vmem:[%s705 + $0x38] sm:$0xff] %v720
                  %v722 = vld [vmem:[%s704 + $0x40] sm:$0xff]
                  %723 = vst [vmem:[%s705 + $0x40] sm:$0xff] %v722
                  %v724 = vld [vmem:[%s704 + $0x48] sm:$0xff]
                  %725 = vst [vmem:[%s705 + $0x48] sm:$0xff] %v724
                  %v726 = vld [vmem:[%s704 + $0x50] sm:$0xff]
                  %727 = vst [vmem:[%s705 + $0x50] sm:$0xff] %v726
                  %v728 = vld [vmem:[%s704 + $0x58] sm:$0xff]
                  %729 = vst [vmem:[%s705 + $0x58] sm:$0xff] %v728
                  %v730 = vld [vmem:[%s704 + $0x60] sm:$0xff]
                  %731 = vst [vmem:[%s705 + $0x60] sm:$0xff] %v730
                  %v732 = vld [vmem:[%s704 + $0x68] sm:$0xff]
                  %733 = vst [vmem:[%s705 + $0x68] sm:$0xff] %v732
                  %v734 = vld [vmem:[%s704 + $0x70] sm:$0xff]
                  %735 = vst [vmem:[%s705 + $0x70] sm:$0xff] %v734
                  %v736 = vld [vmem:[%s704 + $0x78] sm:$0xff]
                  %737 = vst [vmem:[%s705 + $0x78] sm:$0xff] %v736
                  %v738 = vld [vmem:[%s704 + $0x80] sm:$0xff]
                  %739 = vst [vmem:[%s705 + $0x80] sm:$0xff] %v738
                  %v740 = vld [vmem:[%s704 + $0x88] sm:$0xff]
                  %741 = vst [vmem:[%s705 + $0x88] sm:$0xff] %v740
                  %v742 = vld [vmem:[%s704 + $0x90] sm:$0xff]
                  %743 = vst [vmem:[%s705 + $0x90] sm:$0xff] %v742
                  %v744 = vld [vmem:[%s704 + $0x98] sm:$0xff]
                  %745 = vst [vmem:[%s705 + $0x98] sm:$0xff] %v744
                  %v746 = vld [vmem:[%s704 + $0xa0] sm:$0xff]
                  %747 = vst [vmem:[%s705 + $0xa0] sm:$0xff] %v746
                  %v748 = vld [vmem:[%s704 + $0xa8] sm:$0xff]
                  %749 = vst [vmem:[%s705 + $0xa8] sm:$0xff] %v748
                  %v750 = vld [vmem:[%s704 + $0xb0] sm:$0xff]
                  %751 = vst [vmem:[%s705 + $0xb0] sm:$0xff] %v750
                  %v752 = vld [vmem:[%s704 + $0xb8] sm:$0xff]
                  %753 = vst [vmem:[%s705 + $0xb8] sm:$0xff] %v752
                  %v754 = vld [vmem:[%s704 + $0xc0] sm:$0xff]
                  %755 = vst [vmem:[%s705 + $0xc0] sm:$0xff] %v754
                  %v756 = vld [vmem:[%s704 + $0xc8] sm:$0xff]
                  %757 = vst [vmem:[%s705 + $0xc8] sm:$0xff] %v756
                  %v758 = vld [vmem:[%s704 + $0xd0] sm:$0xff]
                  %759 = vst [vmem:[%s705 + $0xd0] sm:$0xff] %v758
                  %v760 = vld [vmem:[%s704 + $0xd8] sm:$0xff]
                  %761 = vst [vmem:[%s705 + $0xd8] sm:$0xff] %v760
                  %v762 = vld [vmem:[%s704 + $0xe0] sm:$0xff]
                  %763 = vst [vmem:[%s705 + $0xe0] sm:$0xff] %v762
                  %v764 = vld [vmem:[%s704 + $0xe8] sm:$0xff]
                  %765 = vst [vmem:[%s705 + $0xe8] sm:$0xff] %v764
                  %v766 = vld [vmem:[%s704 + $0xf0] sm:$0xff]
                  %767 = vst [vmem:[%s705 + $0xf0] sm:$0xff] %v766
                  %v768 = vld [vmem:[%s704 + $0xf8] sm:$0xff]
                  %769 = vst [vmem:[%s705 + $0xf8] sm:$0xff] %v768
                  %s770 = sadd.s32 1, %s703
                  %p771 = scmp.ge.s32.totalorder %s770, %s696
                  %s772 = scalar_select %p771, 0, %s770
                  %s773 = smul.u32 %s772, 256
                  %s774 = smul.u32 %s772, 256
                  %s775 = scalar_lea.vmem %s656, %s773 [#allocation4]
                  %s776 = scalar_lea.vmem %s667, %s774
                $region138: #{forward.9} parent=132 // loop_footer
                  %s700 = sadd.s32 %s698, 1
                $region139: #{forward.9} parent=132 // loop_footer_branch
                  %697 = sbr.rel target = $region135
                $region140: #{forward.9} parent=132 // loop_exit
                  _
                %s777 = sshrl.u32 %s695, 5
                %s778 = sand.u32 %s695, 31
                %s779 = smul.u32 %s777, 32
                %s780 = smul.u32 8, %s779
                %s781 = scalar_lea.vmem %s656, %s780 [#allocation4]
                %s782 = smul.u32 8, %s779
                %s783 = scalar_lea.vmem %s667, %s782
                // While loop
                $region141: #{forward.9} parent=132 // loop_pre_header
                  _
                $region142: #{forward.9} parent=132 // loop_header
                  %s785 = sphi 0, %s787
                  %p786 = scmp.ge.s32.totalorder %s785, %s778
                  %s790 = sphi 0, %s797
                  %s791 = sphi %s781, %s800
                  %s792 = sphi %s783, %s801
                $region143: #{forward.9} parent=132 // loop_header_branch
                  %789 = sbr.rel (%p786) target = $region147
                $region144: #{forward.9} parent=132 // loop_body
                  %v793 = vld [vmem:[%s791] sm:$0xff]
                  %794 = vst [vmem:[%s792] sm:$0xff] %v793
                  %s795 = sadd.s32 1, %s790
                  %p796 = scmp.ge.s32.totalorder %s795, %s778
                  %s797 = scalar_select %p796, 0, %s795
                  %s798 = smul.u32 %s797, 8
                  %s799 = smul.u32 %s797, 8
                  %s800 = scalar_lea.vmem %s781, %s798 [#allocation4]
                  %s801 = scalar_lea.vmem %s783, %s799
                $region145: #{forward.9} parent=132 // loop_footer
                  %s787 = sadd.s32 %s785, 1
                $region146: #{forward.9} parent=132 // loop_footer_branch
                  %784 = sbr.rel target = $region142
                $region147: #{forward.9} parent=132 // loop_exit
                  _
              $region133: #{forward.9} parent=117 // pred_fallthru
                _
              %p802 = pneg %p691
              // Predicated region
              $region148: #{forward.9} parent=117 // pred_check
                _
              $region149: #{forward.9} parent=117 // pred_check_branch
                %804 = sbr.rel (%p691) target = $region151
              $region150: #{forward.9} parent=117 // pred_region
                %s805 = sand.u32 %s663, 7
                %s806 = ssub.s32 %s663, %s805
                %s807 = scalar_lea.vmem %s656, %s806 [#allocation4]
                %s808 = ssub.s32 %s663, %s805
                %s809 = scalar_lea.vmem %s667, %s808
                %s810 = sshrl.u32 %s663, 3
                %s811 = sshrl.u32 %s810, 5
                // While loop
                $region152: #{forward.9} parent=150 // loop_pre_header
                  _
                $region153: #{forward.9} parent=150 // loop_header
                  %s813 = sphi 0, %s815
                  %p814 = scmp.ge.s32.totalorder %s813, %s811
                  %s818 = sphi 0, %s887
                  %s819 = sphi %s656, %s890
                  %s820 = sphi %s667, %s891
                $region154: #{forward.9} parent=150 // loop_header_branch
                  %817 = sbr.rel (%p814) target = $region158
                $region155: #{forward.9} parent=150 // loop_body
                  %v821 = vld [vmem:[%s819] sm:$0xff]
                  %822 = vst [vmem:[%s820] sm:$0xff] %v821
                  %v823 = vld [vmem:[%s819 + $0x8] sm:$0xff]
                  %824 = vst [vmem:[%s820 + $0x8] sm:$0xff] %v823
                  %v825 = vld [vmem:[%s819 + $0x10] sm:$0xff]
                  %826 = vst [vmem:[%s820 + $0x10] sm:$0xff] %v825
                  %v827 = vld [vmem:[%s819 + $0x18] sm:$0xff]
                  %828 = vst [vmem:[%s820 + $0x18] sm:$0xff] %v827
                  %v829 = vld [vmem:[%s819 + $0x20] sm:$0xff]
                  %830 = vst [vmem:[%s820 + $0x20] sm:$0xff] %v829
                  %v831 = vld [vmem:[%s819 + $0x28] sm:$0xff]
                  %832 = vst [vmem:[%s820 + $0x28] sm:$0xff] %v831
                  %v833 = vld [vmem:[%s819 + $0x30] sm:$0xff]
                  %834 = vst [vmem:[%s820 + $0x30] sm:$0xff] %v833
                  %v835 = vld [vmem:[%s819 + $0x38] sm:$0xff]
                  %836 = vst [vmem:[%s820 + $0x38] sm:$0xff] %v835
                  %v837 = vld [vmem:[%s819 + $0x40] sm:$0xff]
                  %838 = vst [vmem:[%s820 + $0x40] sm:$0xff] %v837
                  %v839 = vld [vmem:[%s819 + $0x48] sm:$0xff]
                  %840 = vst [vmem:[%s820 + $0x48] sm:$0xff] %v839
                  %v841 = vld [vmem:[%s819 + $0x50] sm:$0xff]
                  %842 = vst [vmem:[%s820 + $0x50] sm:$0xff] %v841
                  %v843 = vld [vmem:[%s819 + $0x58] sm:$0xff]
                  %844 = vst [vmem:[%s820 + $0x58] sm:$0xff] %v843
                  %v845 = vld [vmem:[%s819 + $0x60] sm:$0xff]
                  %846 = vst [vmem:[%s820 + $0x60] sm:$0xff] %v845
                  %v847 = vld [vmem:[%s819 + $0x68] sm:$0xff]
                  %848 = vst [vmem:[%s820 + $0x68] sm:$0xff] %v847
                  %v849 = vld [vmem:[%s819 + $0x70] sm:$0xff]
                  %850 = vst [vmem:[%s820 + $0x70] sm:$0xff] %v849
                  %v851 = vld [vmem:[%s819 + $0x78] sm:$0xff]
                  %852 = vst [vmem:[%s820 + $0x78] sm:$0xff] %v851
                  %v853 = vld [vmem:[%s819 + $0x80] sm:$0xff]
                  %854 = vst [vmem:[%s820 + $0x80] sm:$0xff] %v853
                  %v855 = vld [vmem:[%s819 + $0x88] sm:$0xff]
                  %856 = vst [vmem:[%s820 + $0x88] sm:$0xff] %v855
                  %v857 = vld [vmem:[%s819 + $0x90] sm:$0xff]
                  %858 = vst [vmem:[%s820 + $0x90] sm:$0xff] %v857
                  %v859 = vld [vmem:[%s819 + $0x98] sm:$0xff]
                  %860 = vst [vmem:[%s820 + $0x98] sm:$0xff] %v859
                  %v861 = vld [vmem:[%s819 + $0xa0] sm:$0xff]
                  %862 = vst [vmem:[%s820 + $0xa0] sm:$0xff] %v861
                  %v863 = vld [vmem:[%s819 + $0xa8] sm:$0xff]
                  %864 = vst [vmem:[%s820 + $0xa8] sm:$0xff] %v863
                  %v865 = vld [vmem:[%s819 + $0xb0] sm:$0xff]
                  %866 = vst [vmem:[%s820 + $0xb0] sm:$0xff] %v865
                  %v867 = vld [vmem:[%s819 + $0xb8] sm:$0xff]
                  %868 = vst [vmem:[%s820 + $0xb8] sm:$0xff] %v867
                  %v869 = vld [vmem:[%s819 + $0xc0] sm:$0xff]
                  %870 = vst [vmem:[%s820 + $0xc0] sm:$0xff] %v869
                  %v871 = vld [vmem:[%s819 + $0xc8] sm:$0xff]
                  %872 = vst [vmem:[%s820 + $0xc8] sm:$0xff] %v871
                  %v873 = vld [vmem:[%s819 + $0xd0] sm:$0xff]
                  %874 = vst [vmem:[%s820 + $0xd0] sm:$0xff] %v873
                  %v875 = vld [vmem:[%s819 + $0xd8] sm:$0xff]
                  %876 = vst [vmem:[%s820 + $0xd8] sm:$0xff] %v875
                  %v877 = vld [vmem:[%s819 + $0xe0] sm:$0xff]
                  %878 = vst [vmem:[%s820 + $0xe0] sm:$0xff] %v877
                  %v879 = vld [vmem:[%s819 + $0xe8] sm:$0xff]
                  %880 = vst [vmem:[%s820 + $0xe8] sm:$0xff] %v879
                  %v881 = vld [vmem:[%s819 + $0xf0] sm:$0xff]
                  %882 = vst [vmem:[%s820 + $0xf0] sm:$0xff] %v881
                  %v883 = vld [vmem:[%s819 + $0xf8] sm:$0xff]
                  %884 = vst [vmem:[%s820 + $0xf8] sm:$0xff] %v883
                  %s885 = sadd.s32 1, %s818
                  %p886 = scmp.ge.s32.totalorder %s885, %s811
                  %s887 = scalar_select %p886, 0, %s885
                  %s888 = smul.u32 %s887, 256
                  %s889 = smul.u32 %s887, 256
                  %s890 = scalar_lea.vmem %s656, %s888 [#allocation4]
                  %s891 = scalar_lea.vmem %s667, %s889
                $region156: #{forward.9} parent=150 // loop_footer
                  %s815 = sadd.s32 %s813, 1
                $region157: #{forward.9} parent=150 // loop_footer_branch
                  %812 = sbr.rel target = $region153
                $region158: #{forward.9} parent=150 // loop_exit
                  _
                %s892 = sshrl.u32 %s810, 5
                %s893 = sand.u32 %s810, 31
                %s894 = smul.u32 %s892, 32
                %s895 = smul.u32 8, %s894
                %s896 = scalar_lea.vmem %s656, %s895 [#allocation4]
                %s897 = smul.u32 8, %s894
                %s898 = scalar_lea.vmem %s667, %s897
                // While loop
                $region159: #{forward.9} parent=150 // loop_pre_header
                  _
                $region160: #{forward.9} parent=150 // loop_header
                  %s900 = sphi 0, %s902
                  %p901 = scmp.ge.s32.totalorder %s900, %s893
                  %s905 = sphi 0, %s912
                  %s906 = sphi %s896, %s915
                  %s907 = sphi %s898, %s916
                $region161: #{forward.9} parent=150 // loop_header_branch
                  %904 = sbr.rel (%p901) target = $region165
                $region162: #{forward.9} parent=150 // loop_body
                  %v908 = vld [vmem:[%s906] sm:$0xff]
                  %909 = vst [vmem:[%s907] sm:$0xff] %v908
                  %s910 = sadd.s32 1, %s905
                  %p911 = scmp.ge.s32.totalorder %s910, %s893
                  %s912 = scalar_select %p911, 0, %s910
                  %s913 = smul.u32 %s912, 8
                  %s914 = smul.u32 %s912, 8
                  %s915 = scalar_lea.vmem %s896, %s913 [#allocation4]
                  %s916 = scalar_lea.vmem %s898, %s914
                $region163: #{forward.9} parent=150 // loop_footer
                  %s902 = sadd.s32 %s900, 1
                $region164: #{forward.9} parent=150 // loop_footer_branch
                  %899 = sbr.rel target = $region160
                $region165: #{forward.9} parent=150 // loop_exit
                  _
                %s917 = sshll.u32 1, %s805
                %s918 = ssub.s32 %s917, 1
                loop: start=0, step=1, limit=1
                $region166: #{forward.9} parent=150 // loop_pre_header
                  _
                $region167: #{forward.9} parent=150 // loop_header
                  %s920 = sphi 0, %s924
                  %p921 = scmp.ge.s32.totalorder %s920, 1
                  %s925 = sphi %s807, %s807
                  %s926 = sphi %s809, %s809
                $region168: #{forward.9} parent=150 // loop_header_branch
                  %923 = sbr.rel (%p921) target = $region172
                $region169: #{forward.9} parent=150 // loop_body
                  %v927 = vld [vmem:[%s925] sm:%s918]
                  %928 = vst [vmem:[%s926] sm:%s918] %v927
                $region170: #{forward.9} parent=150 // loop_footer
                  %s924 = sadd.s32 1, %s920
                $region171: #{forward.9} parent=150 // loop_footer_branch
                  %919 = sbr.rel target = $region167
                $region172: #{forward.9} parent=150 // loop_exit
                  _
              $region151: #{forward.9} parent=117 // pred_fallthru
                _
            $region118: #{forward.9} parent=113 // pred_fallthru
              _
            // Predicated region
            $region119: #{forward.9} parent=113 // pred_check
              %p675 = pneg %p671
            $region120: #{forward.9} parent=113 // pred_check_branch
              %677 = sbr.rel (%p675) target = $region122
            $region121: #{forward.9} parent=113 // pred_region
              %s678 = sshll.u32 1, %s663
              %s679 = ssub.s32 %s678, 1
              loop: start=0, step=1, limit=1
              $region123: #{forward.9} parent=121 // loop_pre_header
                _
              $region124: #{forward.9} parent=121 // loop_header
                %s681 = sphi 0, %s685
                %p682 = scmp.ge.s32.totalorder %s681, 1
                %s686 = sphi %s656, %s656
                %s687 = sphi %s667, %s667
              $region125: #{forward.9} parent=121 // loop_header_branch
                %684 = sbr.rel (%p682) target = $region129
              $region126: #{forward.9} parent=121 // loop_body
                %v688 = vld [vmem:[%s686] sm:%s679]
                %689 = vst [vmem:[%s687] sm:%s679] %v688
              $region127: #{forward.9} parent=121 // loop_footer
                %s685 = sadd.s32 1, %s681
              $region128: #{forward.9} parent=121 // loop_footer_branch
                %680 = sbr.rel target = $region124
              $region129: #{forward.9} parent=121 // loop_exit
                _
            $region122: #{forward.9} parent=113 // pred_fallthru
              _
          $region114: #{forward.9} parent=109 // pred_fallthru
            _
          %929 = vnop
        $region110: #{forward.9} parent=93 // pred_fallthru
          _
      $region94: #{forward.9} parent=5 // pred_fallthru
        _
      %p930 = scmp.le.s32.totalorder 2, %s9
      // Predicated region
      $region173: #{forward.9} parent=5 // pred_check
        %p931 = pneg %p930
      $region174: #{forward.9} parent=5 // pred_check_branch
        %933 = sbr.rel (%p931) target = $region176
      $region175: #{forward.9} parent=5 // pred_region
        %s934 = ssub.s32 %s9, 2
        // Predicated region
        $region177: #{forward.9} parent=175 // pred_check
          %p935 = pneg %p141
        $region178: #{forward.9} parent=175 // pred_check_branch
          %937 = sbr.rel (%p935) target = $region180
        $region179: #{forward.9} parent=175 // pred_region
          %s938 = sand.u32 %s126, 1
          %s939 = sand.u32 %s126, 1
          %s940 = smul.addr %s939, 2
          %s941 = scalar_lea.vmem [#allocation4], %s940
        $region180: #{forward.9} parent=175 // pred_fallthru
          _
      $region176: #{forward.9} parent=5 // pred_fallthru
        _
    $region6: #{forward.9} parent=1 // loop_footer
      %s13 = sadd.s32 1, %s9
    $region7: #{forward.9} parent=1 // loop_footer_branch
      %8 = sbr.rel target = $region3
    $region8: #{forward.9} parent=1 // loop_exit
      _

// kernel: forward.8
$region0: #{forward.8}
  #allocation0 [shape = 'u32[]', space=smem, size = 0x4, offset = 0x4, fixed_abs, tag = 'smem constant byte address 0x4 - core index']
  #allocation1 [shape = 'u32[72,128]{1,0:T(1,128)}', space=vmem, size = 0x9000, scoped, tag = 'internal scratch']
  %s0 = inlined_call_operand.vmem [shape: bf16[2,800], index: 0, kind: input, shape index: {}]
  %s1 = inlined_call_operand.vmem [shape: bf16[800,32], index: 1, kind: input, shape index: {}]
  %s2 = inlined_call_operand.vmem [shape: f32[1,32], index: 2, kind: input, shape index: {}, may-alias: {2,4}]
  %s3 = inlined_call_operand.vmem [shape: f32[1,32], index: 3, kind: input, shape index: {}]
  %s4 = inlined_call_operand.vmem [shape: f32[1,32], index: 4, kind: input, shape index: {}, may-alias: {2,4}]
  %s5 = inlined_call_operand.vmem [shape: f32[2,32], index: 5, kind: output, shape index: {}]
  %s6 = sld [smem:[#allocation0]]
  $region30: #{forward.8} parent=0
    _
  %s8 = ssub.s32 1, %s6
  %s9 = scalar_select 0, %s8, %s6
  // Predicated region
  $region2: #{forward.8} parent=0 // pred_check
    _
  $region3: #{forward.8} parent=0 // pred_check_branch
    %11 = sbr.rel (0) target = $region5
  $region4: #{forward.8} parent=0 // pred_region
    _
  $region5: #{forward.8} parent=0 // pred_fallthru
    _
  // Predicated region
  $region6: #{forward.8} parent=0 // pred_check
    _
  $region7: #{forward.8} parent=0 // pred_check_branch
    %13 = sbr.rel (0) target = $region9
  $region8: #{forward.8} parent=0 // pred_region
    _
  $region9: #{forward.8} parent=0 // pred_fallthru
    _
  // Predicated region
  $region10: #{forward.8} parent=0 // pred_check
    _
  $region11: #{forward.8} parent=0 // pred_check_branch
    %15 = sbr.rel (0) target = $region13
  $region12: #{forward.8} parent=0 // pred_region
    _
  $region13: #{forward.8} parent=0 // pred_fallthru
    _
  // Predicated region
  $region14: #{forward.8} parent=0 // pred_check
    _
  $region15: #{forward.8} parent=0 // pred_check_branch
    %17 = sbr.rel (0) target = $region17
  $region16: #{forward.8} parent=0 // pred_region
    _
  $region17: #{forward.8} parent=0 // pred_fallthru
    _
  // Predicated region
  $region18: #{forward.8} parent=0 // pred_check
    _
  $region19: #{forward.8} parent=0 // pred_check_branch
    %19 = sbr.rel (0) target = $region21
  $region20: #{forward.8} parent=0 // pred_region
    _
  $region21: #{forward.8} parent=0 // pred_fallthru
    _
  %v21 = vld [vmem:[%s0] sm:$0x7f]
  %v22 = vld [vmem:[%s1] sm:$0xf]
  %v23 = vld [vmem:[%s1 + $0x4] sm:$0xf]
  %v24 = vld [vmem:[%s1 + $0x8] sm:$0xf]
  %v25 = vld [vmem:[%s1 + $0xc] sm:$0xf]
  %v26 = vld [vmem:[%s1 + $0x10] sm:$0xf]
  %v27 = vld [vmem:[%s1 + $0x14] sm:$0xf]
  %v28 = vld [vmem:[%s1 + $0x18] sm:$0xf]
  %v29 = vld [vmem:[%s1 + $0x1c] sm:$0xf]
  %v30 = vld [vmem:[%s1 + $0x20] sm:$0xf]
  %v31 = vld [vmem:[%s1 + $0x24] sm:$0xf]
  %v32 = vld [vmem:[%s1 + $0x28] sm:$0xf]
  %v33 = vld [vmem:[%s1 + $0x2c] sm:$0xf]
  %v34 = vld [vmem:[%s1 + $0x30] sm:$0xf]
  %v35 = vld [vmem:[%s1 + $0x34] sm:$0xf]
  %v36 = vld [vmem:[%s1 + $0x38] sm:$0xf]
  %v37 = vld [vmem:[%s1 + $0x3c] sm:$0xf]
  %v38 = vld [vmem:[%s1 + $0x40] sm:$0xf]
  %v39 = vld [vmem:[%s1 + $0x44] sm:$0xf]
  %v40 = vld [vmem:[%s1 + $0x48] sm:$0xf]
  %v41 = vld [vmem:[%s1 + $0x4c] sm:$0xf]
  %v42 = vld [vmem:[%s1 + $0x50] sm:$0xf]
  %v43 = vld [vmem:[%s1 + $0x54] sm:$0xf]
  %v44 = vld [vmem:[%s1 + $0x58] sm:$0xf]
  %v45 = vld [vmem:[%s1 + $0x5c] sm:$0xf]
  %v46 = vld [vmem:[%s1 + $0x60] sm:$0xf]
  %v47 = vld [vmem:[%s1 + $0x64] sm:$0xf]
  %v48 = vld [vmem:[%s1 + $0x68] sm:$0xf]
  %v49 = vld [vmem:[%s1 + $0x6c] sm:$0xf]
  %v50 = vld [vmem:[%s1 + $0x70] sm:$0xf]
  %v51 = vld [vmem:[%s1 + $0x74] sm:$0xf]
  %v52 = vld [vmem:[%s1 + $0x78] sm:$0xf]
  %v53 = vld [vmem:[%s1 + $0x7c] sm:$0xf]
  %v54 = vld [vmem:[%s1 + $0x80] sm:$0xf]
  %v55 = vld [vmem:[%s1 + $0x84] sm:$0xf]
  %v56 = vld [vmem:[%s1 + $0x88] sm:$0xf]
  %v57 = vld [vmem:[%s1 + $0x8c] sm:$0xf]
  %v58 = vld [vmem:[%s1 + $0x90] sm:$0xf]
  %v59 = vld [vmem:[%s1 + $0x94] sm:$0xf]
  %v60 = vld [vmem:[%s1 + $0x98] sm:$0xf]
  %v61 = vld [vmem:[%s1 + $0x9c] sm:$0xf]
  %v62 = vld [vmem:[%s1 + $0xa0] sm:$0xf]
  %v63 = vld [vmem:[%s1 + $0xa4] sm:$0xf]
  %v64 = vld [vmem:[%s1 + $0xa8] sm:$0xf]
  %v65 = vld [vmem:[%s1 + $0xac] sm:$0xf]
  %v66 = vld [vmem:[%s1 + $0xb0] sm:$0xf]
  %v67 = vld [vmem:[%s1 + $0xb4] sm:$0xf]
  %v68 = vld [vmem:[%s1 + $0xb8] sm:$0xf]
  %v69 = vld [vmem:[%s1 + $0xbc] sm:$0xf]
  %v70 = vld [vmem:[%s1 + $0xc0] sm:$0xf]
  %v71 = vld [vmem:[%s1 + $0xc4] sm:$0xf]
  %v72 = vld [vmem:[%s1 + $0xc8] sm:$0xf]
  %v73 = vld [vmem:[%s1 + $0xcc] sm:$0xf]
  %v74 = vld [vmem:[%s1 + $0xd0] sm:$0xf]
  %v75 = vld [vmem:[%s1 + $0xd4] sm:$0xf]
  %v76 = vld [vmem:[%s1 + $0xd8] sm:$0xf]
  %v77 = vld [vmem:[%s1 + $0xdc] sm:$0xf]
  %v78 = vld [vmem:[%s1 + $0xe0] sm:$0xf]
  %v79 = vld [vmem:[%s1 + $0xe4] sm:$0xf]
  %v80 = vld [vmem:[%s1 + $0xe8] sm:$0xf]
  %v81 = vld [vmem:[%s1 + $0xec] sm:$0xf]
  %v82 = vld [vmem:[%s1 + $0xf0] sm:$0xf]
  %v83 = vld [vmem:[%s1 + $0xf4] sm:$0xf]
  %v84 = vld [vmem:[%s1 + $0xf8] sm:$0xf]
  %v85 = vld [vmem:[%s1 + $0xfc] sm:$0xf]
  %v86 = vld [vmem:[%s1 + $0x100] sm:$0xf]
  %v87 = vld [vmem:[%s1 + $0x104] sm:$0xf]
  %v88 = vld [vmem:[%s1 + $0x108] sm:$0xf]
  %v89 = vld [vmem:[%s1 + $0x10c] sm:$0xf]
  %v90 = vld [vmem:[%s1 + $0x110] sm:$0xf]
  %v91 = vld [vmem:[%s1 + $0x114] sm:$0xf]
  %v92 = vld [vmem:[%s1 + $0x118] sm:$0xf]
  %v93 = vld [vmem:[%s1 + $0x11c] sm:$0xf]
  %v94 = vld [vmem:[%s1 + $0x120] sm:$0xf]
  %v95 = vld [vmem:[%s1 + $0x124] sm:$0xf]
  %v96 = vld [vmem:[%s1 + $0x128] sm:$0xf]
  %v97 = vld [vmem:[%s1 + $0x12c] sm:$0xf]
  %v98 = vld [vmem:[%s1 + $0x130] sm:$0xf]
  %v99 = vld [vmem:[%s1 + $0x134] sm:$0xf]
  %v100 = vld [vmem:[%s1 + $0x138] sm:$0xf]
  %v101 = vld [vmem:[%s1 + $0x13c] sm:$0xf]
  %v102 = vld [vmem:[%s1 + $0x140] sm:$0xf]
  %v103 = vld [vmem:[%s1 + $0x144] sm:$0xf]
  %v104 = vld [vmem:[%s1 + $0x148] sm:$0xf]
  %v105 = vld [vmem:[%s1 + $0x14c] sm:$0xf]
  %v106 = vld [vmem:[%s1 + $0x150] sm:$0xf]
  %v107 = vld [vmem:[%s1 + $0x154] sm:$0xf]
  %v108 = vld [vmem:[%s1 + $0x158] sm:$0xf]
  %v109 = vld [vmem:[%s1 + $0x15c] sm:$0xf]
  %v110 = vld [vmem:[%s1 + $0x160] sm:$0xf]
  %v111 = vld [vmem:[%s1 + $0x164] sm:$0xf]
  %v112 = vld [vmem:[%s1 + $0x168] sm:$0xf]
  %v113 = vld [vmem:[%s1 + $0x16c] sm:$0xf]
  %v114 = vld [vmem:[%s1 + $0x170] sm:$0xf]
  %v115 = vld [vmem:[%s1 + $0x174] sm:$0xf]
  %v116 = vld [vmem:[%s1 + $0x178] sm:$0xf]
  %v117 = vld [vmem:[%s1 + $0x17c] sm:$0xf]
  %v118 = vld [vmem:[%s1 + $0x180] sm:$0xf]
  %v119 = vld [vmem:[%s1 + $0x184] sm:$0xf]
  %v120 = vld [vmem:[%s1 + $0x188] sm:$0xf]
  %v121 = vld [vmem:[%s1 + $0x18c] sm:$0xf]
  %v122 = vld [vmem:[%s2] sm:$0x1]
  %v124 = vperm.slane %v122, 0
  %127 = vst [vmem:[#allocation1] ss:$9 sm:$0xff] %v21
  %v128 = vld [vmem:[#allocation1] sm:$0xff]
  %v129 = vld [vmem:[#allocation1 + $0x9] sm:$0xff]
  %v130 = vld [vmem:[#allocation1 + $0x12] sm:$0xff]
  %v131 = vld [vmem:[#allocation1 + $0x1b] sm:$0xff]
  %v132 = vld [vmem:[#allocation1 + $0x24] sm:$0xff]
  %v133 = vld [vmem:[#allocation1 + $0x2d] sm:$0xff]
  %v134 = vld [vmem:[#allocation1 + $0x36] sm:$0xff]
  %v241 = vunpack.c.l.b16 %v22
  %v242 = vunpack.c.l.b16 %v23
  %v243 = vunpack.c.l.b16 %v24
  %v244 = vunpack.c.l.b16 %v25
  %v245 = vunpack.c.l.b16 %v26
  %v246 = vunpack.c.l.b16 %v27
  %v247 = vunpack.c.l.b16 %v28
  %v248 = vunpack.c.l.b16 %v29
  %v249 = vunpack.c.l.b16 %v30
  %v250 = vunpack.c.l.b16 %v31
  %v251 = vunpack.c.l.b16 %v32
  %v252 = vunpack.c.l.b16 %v33
  %v253 = vunpack.c.l.b16 %v34
  %v254 = vunpack.c.l.b16 %v35
  %v255 = vunpack.c.l.b16 %v36
  %v256 = vunpack.c.l.b16 %v37
  %v257 = vunpack.c.l.b16 %v38
  %v258 = vunpack.c.l.b16 %v39
  %v259 = vunpack.c.l.b16 %v40
  %v260 = vunpack.c.l.b16 %v41
  %v261 = vunpack.c.l.b16 %v42
  %v262 = vunpack.c.l.b16 %v43
  %v263 = vunpack.c.l.b16 %v44
  %v264 = vunpack.c.l.b16 %v45
  %v265 = vunpack.c.l.b16 %v46
  %v266 = vunpack.c.l.b16 %v47
  %v267 = vunpack.c.l.b16 %v48
  %v268 = vunpack.c.l.b16 %v49
  %v269 = vunpack.c.l.b16 %v50
  %v270 = vunpack.c.l.b16 %v51
  %v271 = vunpack.c.l.b16 %v52
  %v272 = vunpack.c.l.b16 %v53
  %v273 = vunpack.c.l.b16 %v54
  %v274 = vunpack.c.l.b16 %v55
  %v275 = vunpack.c.l.b16 %v56
  %v276 = vunpack.c.l.b16 %v57
  %v277 = vunpack.c.l.b16 %v58
  %v278 = vunpack.c.l.b16 %v59
  %v279 = vunpack.c.l.b16 %v60
  %v280 = vunpack.c.l.b16 %v61
  %v281 = vunpack.c.l.b16 %v62
  %v282 = vunpack.c.l.b16 %v63
  %v283 = vunpack.c.l.b16 %v64
  %v284 = vunpack.c.l.b16 %v65
  %v285 = vunpack.c.l.b16 %v66
  %v286 = vunpack.c.l.b16 %v67
  %v287 = vunpack.c.l.b16 %v68
  %v288 = vunpack.c.l.b16 %v69
  %v289 = vunpack.c.l.b16 %v70
  %v290 = vunpack.c.l.b16 %v71
  %v291 = vunpack.c.l.b16 %v72
  %v292 = vunpack.c.l.b16 %v73
  %v293 = vunpack.c.l.b16 %v74
  %v294 = vunpack.c.l.b16 %v75
  %v295 = vunpack.c.l.b16 %v76
  %v296 = vunpack.c.l.b16 %v77
  %v297 = vunpack.c.l.b16 %v78
  %v298 = vunpack.c.l.b16 %v79
  %v299 = vunpack.c.l.b16 %v80
  %v300 = vunpack.c.l.b16 %v81
  %v301 = vunpack.c.l.b16 %v82
  %v302 = vunpack.c.l.b16 %v83
  %v303 = vunpack.c.l.b16 %v84
  %v304 = vunpack.c.l.b16 %v85
  %v305 = vunpack.c.l.b16 %v86
  %v306 = vunpack.c.l.b16 %v87
  %v307 = vunpack.c.l.b16 %v88
  %v308 = vunpack.c.l.b16 %v89
  %v309 = vunpack.c.l.b16 %v90
  %v310 = vunpack.c.l.b16 %v91
  %v311 = vunpack.c.l.b16 %v92
  %v312 = vunpack.c.l.b16 %v93
  %v313 = vunpack.c.l.b16 %v94
  %v314 = vunpack.c.l.b16 %v95
  %v315 = vunpack.c.l.b16 %v96
  %v316 = vunpack.c.l.b16 %v97
  %v317 = vunpack.c.l.b16 %v98
  %v318 = vunpack.c.l.b16 %v99
  %v319 = vunpack.c.l.b16 %v100
  %v320 = vunpack.c.l.b16 %v101
  %v321 = vunpack.c.l.b16 %v102
  %v322 = vunpack.c.l.b16 %v103
  %v323 = vunpack.c.l.b16 %v104
  %v324 = vunpack.c.l.b16 %v105
  %v325 = vunpack.c.l.b16 %v106
  %v326 = vunpack.c.l.b16 %v107
  %v327 = vunpack.c.l.b16 %v108
  %v328 = vunpack.c.l.b16 %v109
  %v329 = vunpack.c.l.b16 %v110
  %v330 = vunpack.c.l.b16 %v111
  %v331 = vunpack.c.l.b16 %v112
  %v332 = vunpack.c.l.b16 %v113
  %v333 = vunpack.c.l.b16 %v114
  %v334 = vunpack.c.l.b16 %v115
  %v335 = vunpack.c.l.b16 %v116
  %v336 = vunpack.c.l.b16 %v117
  %v337 = vunpack.c.l.b16 %v118
  %v338 = vunpack.c.l.b16 %v119
  %v339 = vunpack.c.l.b16 %v120
  %v340 = vunpack.c.l.b16 %v121
  %v341 = vpack.c.b16 %v242, %v241
  %v342 = vpack.c.b16 %v244, %v243
  %v343 = vpack.c.b16 %v246, %v245
  %v344 = vpack.c.b16 %v248, %v247
  %v345 = vpack.c.b16 %v250, %v249
  %v346 = vpack.c.b16 %v252, %v251
  %v347 = vpack.c.b16 %v254, %v253
  %v348 = vpack.c.b16 %v256, %v255
  %v349 = vpack.c.b16 %v258, %v257
  %v350 = vpack.c.b16 %v260, %v259
  %v351 = vpack.c.b16 %v262, %v261
  %v352 = vpack.c.b16 %v264, %v263
  %v353 = vpack.c.b16 %v266, %v265
  %v354 = vpack.c.b16 %v268, %v267
  %v355 = vpack.c.b16 %v270, %v269
  %v356 = vpack.c.b16 %v272, %v271
  %v357 = vpack.c.b16 %v274, %v273
  %v358 = vpack.c.b16 %v276, %v275
  %v359 = vpack.c.b16 %v278, %v277
  %v360 = vpack.c.b16 %v280, %v279
  %v361 = vpack.c.b16 %v282, %v281
  %v362 = vpack.c.b16 %v284, %v283
  %v363 = vpack.c.b16 %v286, %v285
  %v364 = vpack.c.b16 %v288, %v287
  %v365 = vpack.c.b16 %v290, %v289
  %v366 = vpack.c.b16 %v292, %v291
  %v367 = vpack.c.b16 %v294, %v293
  %v368 = vpack.c.b16 %v296, %v295
  %v369 = vpack.c.b16 %v298, %v297
  %v370 = vpack.c.b16 %v300, %v299
  %v371 = vpack.c.b16 %v302, %v301
  %v372 = vpack.c.b16 %v304, %v303
  %v373 = vpack.c.b16 %v306, %v305
  %v374 = vpack.c.b16 %v308, %v307
  %v375 = vpack.c.b16 %v310, %v309
  %v376 = vpack.c.b16 %v312, %v311
  %v377 = vpack.c.b16 %v314, %v313
  %v378 = vpack.c.b16 %v316, %v315
  %v379 = vpack.c.b16 %v318, %v317
  %v380 = vpack.c.b16 %v320, %v319
  %v381 = vpack.c.b16 %v322, %v321
  %v382 = vpack.c.b16 %v324, %v323
  %v383 = vpack.c.b16 %v326, %v325
  %v384 = vpack.c.b16 %v328, %v327
  %v385 = vpack.c.b16 %v330, %v329
  %v386 = vpack.c.b16 %v332, %v331
  %v387 = vpack.c.b16 %v334, %v333
  %v388 = vpack.c.b16 %v336, %v335
  %v389 = vpack.c.b16 %v338, %v337
  %v390 = vpack.c.b16 %v340, %v339
  %vm441 = vcmask 261120
  %v442 = vsel %vm441, %v134, 0
  %444 = vmatpush.bf16.msra.mxu0 %v348
  %445 = vmatpush.bf16.msra.mxu0 %v347
  %446 = vmatpush.bf16.msra.mxu0 %v346
  %447 = vmatpush.bf16.msra.mxu0 %v345
  %448 = vmatpush.bf16.msra.mxu0 %v344
  %449 = vmatpush.bf16.msra.mxu0 %v343
  %450 = vmatpush.bf16.msra.mxu0 %v342
  %451 = vmatpush.bf16.msra.mxu0 %v341
  %452 = vmatmul.bf16.gmra.mxu0 %v128
  %v453 = vpop.f32.mrf.mxu0
  %v454 = vadd.f32 %v124, %v453
  %v455 = vpop.f32.mrf.mxu0
  %456 = vdwg.mxu0
  %457 = vmatpush.bf16.msra.mxu0 %v356
  %458 = vmatpush.bf16.msra.mxu0 %v355
  %459 = vmatpush.bf16.msra.mxu0 %v354
  %460 = vmatpush.bf16.msra.mxu0 %v353
  %461 = vmatpush.bf16.msra.mxu0 %v352
  %462 = vmatpush.bf16.msra.mxu0 %v351
  %463 = vmatpush.bf16.msra.mxu0 %v350
  %464 = vmatpush.bf16.msra.mxu0 %v349
  %465 = vmatmul.bf16.gmra.mxu0 %v129
  %v466 = vpop.f32.mrf.mxu0
  %v467 = vadd.f32 %v454, %v466
  %v468 = vpop.f32.mrf.mxu0
  %469 = vdwg.mxu0
  %470 = vmatpush.bf16.msra.mxu0 %v364
  %471 = vmatpush.bf16.msra.mxu0 %v363
  %472 = vmatpush.bf16.msra.mxu0 %v362
  %473 = vmatpush.bf16.msra.mxu0 %v361
  %474 = vmatpush.bf16.msra.mxu0 %v360
  %475 = vmatpush.bf16.msra.mxu0 %v359
  %476 = vmatpush.bf16.msra.mxu0 %v358
  %477 = vmatpush.bf16.msra.mxu0 %v357
  %478 = vmatmul.bf16.gmra.mxu0 %v130
  %v479 = vpop.f32.mrf.mxu0
  %v480 = vadd.f32 %v467, %v479
  %v481 = vpop.f32.mrf.mxu0
  %482 = vdwg.mxu0
  %483 = vmatpush.bf16.msra.mxu0 %v372
  %484 = vmatpush.bf16.msra.mxu0 %v371
  %485 = vmatpush.bf16.msra.mxu0 %v370
  %486 = vmatpush.bf16.msra.mxu0 %v369
  %487 = vmatpush.bf16.msra.mxu0 %v368
  %488 = vmatpush.bf16.msra.mxu0 %v367
  %489 = vmatpush.bf16.msra.mxu0 %v366
  %490 = vmatpush.bf16.msra.mxu0 %v365
  %491 = vmatmul.bf16.gmra.mxu0 %v131
  %v492 = vpop.f32.mrf.mxu0
  %v493 = vadd.f32 %v480, %v492
  %v494 = vpop.f32.mrf.mxu0
  %495 = vdwg.mxu0
  %496 = vmatpush.bf16.msra.mxu0 %v380
  %497 = vmatpush.bf16.msra.mxu0 %v379
  %498 = vmatpush.bf16.msra.mxu0 %v378
  %499 = vmatpush.bf16.msra.mxu0 %v377
  %500 = vmatpush.bf16.msra.mxu0 %v376
  %501 = vmatpush.bf16.msra.mxu0 %v375
  %502 = vmatpush.bf16.msra.mxu0 %v374
  %503 = vmatpush.bf16.msra.mxu0 %v373
  %504 = vmatmul.bf16.gmra.mxu0 %v132
  %v505 = vpop.f32.mrf.mxu0
  %v506 = vadd.f32 %v493, %v505
  %v507 = vpop.f32.mrf.mxu0
  %508 = vdwg.mxu0
  %509 = vmatpush.bf16.msra.mxu0 %v388
  %510 = vmatpush.bf16.msra.mxu0 %v387
  %511 = vmatpush.bf16.msra.mxu0 %v386
  %512 = vmatpush.bf16.msra.mxu0 %v385
  %513 = vmatpush.bf16.msra.mxu0 %v384
  %514 = vmatpush.bf16.msra.mxu0 %v383
  %515 = vmatpush.bf16.msra.mxu0 %v382
  %516 = vmatpush.bf16.msra.mxu0 %v381
  %517 = vmatmul.bf16.gmra.mxu0 %v133
  %v518 = vpop.f32.mrf.mxu0
  %v519 = vadd.f32 %v506, %v518
  %v520 = vpop.f32.mrf.mxu0
  %521 = vdwg.mxu0
  %522 = vmatpush.bf16.msra.mxu0 0
  %523 = vmatpush.bf16.msra.mxu0 0
  %524 = vmatpush.bf16.msra.mxu0 0
  %525 = vmatpush.bf16.msra.mxu0 0
  %526 = vmatpush.bf16.msra.mxu0 0
  %527 = vmatpush.bf16.msra.mxu0 0
  %528 = vmatpush.bf16.msra.mxu0 %v390
  %529 = vmatpush.bf16.msra.mxu0 %v389
  %530 = vmatmul.bf16.gmra.mxu0 %v442
  %v531 = vpop.f32.mrf.mxu0
  %v532 = vadd.f32 %v519, %v531
  %v533 = vpop.f32.mrf.mxu0
  %534 = vdwg.mxu0
  %vm535 = vcmask 254976
  %v536 = vsel %vm535, %v532, 0.0
  %537 = vadd.xlane.f32.xlu0 %v536
  %v538 = vpop.xlane.xlu0 %537
  %v539 = vrcp.pop 32.0
  %v540 = vmul.f32 32.0, %v539
  %v541 = vsub.f32 1.0, %v540
  %v542 = vmul.f32 %v539, %v541
  %v543 = vadd.f32 %v539, %v542
  %vm544 = vweird.f32 %v539
  %v545 = vsel %vm544, %v539, %v543
  %v546 = vmul.f32 %v538, %v545
  %v547 = vsub.f32 %v532, %v546
  %v548 = vmul.f32 %v547, %v547
  %v549 = vsel %vm535, %v548, 0.0
  %550 = vadd.xlane.f32.xlu0 %v549
  %v551 = vpop.xlane.xlu0 %550
  %v552 = vmul.f32 %v551, %v545
  %v553 = vadd.f32 %v552, 1e-05
  %v554 = vrsqrt.pop %v553
  %v555 = vmul.f32 %v554, %v553
  %v556 = vmul.f32 %v555, %v554
  %v557 = vmul.f32 0.5, %v556
  %v558 = vsub.f32 1.5, %v557
  %v559 = vmul.f32 %v554, %v558
  %vm560 = vweird.f32 %v553
  %vm561 = vweird.f32 %v554
  %vm562 = vmor %vm560, %vm561
  %v563 = vsel %vm562, %v554, %v559
  %v564 = vmul.f32 %v547, %v563
  %v565 = vld [vmem:[%s3] sm:$0x1]
  %v567 = vperm.slane %v565, 0
  %v569 = vmul.f32 %v564, %v567
  %v570 = vld [vmem:[%s4] sm:$0x1]
  %v572 = vperm.slane %v570, 0
  %v574 = vadd.f32 %v569, %v572
  %v575 = vtanh.pop %v574
  %576 = vst.msk [vmem:[%s5] sm:$0x3] %vm535, %v575
  // Predicated region
  $region22: #{forward.8} parent=0 // pred_check
    _
  $region23: #{forward.8} parent=0 // pred_check_branch
    %578 = sbr.rel (0) target = $region25
  $region24: #{forward.8} parent=0 // pred_region
    _
  $region25: #{forward.8} parent=0 // pred_fallthru
    _
  // Predicated region
  $region26: #{forward.8} parent=0 // pred_check
    _
  $region27: #{forward.8} parent=0 // pred_check_branch
    %580 = sbr.rel (0) target = $region29
  $region28: #{forward.8} parent=0 // pred_region
    _
  $region29: #{forward.8} parent=0 // pred_fallthru
    _

// kernel: forward.10
$region0: #{forward.10}
  #allocation0 [shape = 'u32[]', space=smem, size = 0x4, offset = 0x4, fixed_abs, tag = 'smem constant byte address 0x4 - core index']
  #allocation1 [shape = 'u32[72,128]{1,0:T(1,128)}', space=vmem, size = 0x9000, scoped, tag = 'internal scratch']
  #allocation2 [shape = 'f32[98,32]{1,0:T(8,128)}', space=vmem, size = 0xd000, scoped, tag = 'scratch operand']
  %s0 = inlined_call_operand.vmem [shape: bf16[98,288], index: 0, kind: input, shape index: {}]
  %s1 = inlined_call_operand.vmem [shape: bf16[288,32], index: 1, kind: input, shape index: {}]
  %s2 = inlined_call_operand.vmem [shape: f32[1,32], index: 2, kind: input, shape index: {}]
  %s3 = inlined_call_operand.vmem [shape: bf16[98,32], index: 3, kind: output, shape index: {}]
  %s4 = sld [smem:[#allocation0]]
  $region30: #{forward.10} parent=0
    _
  %s6 = ssub.s32 1, %s4
  %s7 = scalar_select 0, %s6, %s4
  // Predicated region
  $region2: #{forward.10} parent=0 // pred_check
    _
  $region3: #{forward.10} parent=0 // pred_check_branch
    %9 = sbr.rel (0) target = $region5
  $region4: #{forward.10} parent=0 // pred_region
    _
  $region5: #{forward.10} parent=0 // pred_fallthru
    _
  // Predicated region
  $region6: #{forward.10} parent=0 // pred_check
    _
  $region7: #{forward.10} parent=0 // pred_check_branch
    %11 = sbr.rel (0) target = $region9
  $region8: #{forward.10} parent=0 // pred_region
    _
  $region9: #{forward.10} parent=0 // pred_fallthru
    _
  // Predicated region
  $region10: #{forward.10} parent=0 // pred_check
    _
  $region11: #{forward.10} parent=0 // pred_check_branch
    %13 = sbr.rel (0) target = $region13
  $region12: #{forward.10} parent=0 // pred_region
    _
  $region13: #{forward.10} parent=0 // pred_fallthru
    _
  %p15 = scmp.eq.s32.totalorder 0, 0
  // Predicated region
  $region14: #{forward.10} parent=0 // pred_check
    %p16 = pneg %p15
  $region15: #{forward.10} parent=0 // pred_check_branch
    %18 = sbr.rel (%p16) target = $region17
  $region16: #{forward.10} parent=0 // pred_region
    %vm19 = vcmask 261120
    %20 = vst.msk [vmem:[#allocation2] sm:$0xff] %vm19, 0.0
    %21 = vst.msk [vmem:[#allocation2 + $0x8] sm:$0xff] %vm19, 0.0
    %22 = vst.msk [vmem:[#allocation2 + $0x10] sm:$0xff] %vm19, 0.0
    %23 = vst.msk [vmem:[#allocation2 + $0x18] sm:$0xff] %vm19, 0.0
    %24 = vst.msk [vmem:[#allocation2 + $0x20] sm:$0xff] %vm19, 0.0
    %25 = vst.msk [vmem:[#allocation2 + $0x28] sm:$0xff] %vm19, 0.0
    %26 = vst.msk [vmem:[#allocation2 + $0x30] sm:$0xff] %vm19, 0.0
    %27 = vst.msk [vmem:[#allocation2 + $0x38] sm:$0xff] %vm19, 0.0
    %28 = vst.msk [vmem:[#allocation2 + $0x40] sm:$0xff] %vm19, 0.0
    %29 = vst.msk [vmem:[#allocation2 + $0x48] sm:$0xff] %vm19, 0.0
    %30 = vst.msk [vmem:[#allocation2 + $0x50] sm:$0xff] %vm19, 0.0
    %31 = vst.msk [vmem:[#allocation2 + $0x58] sm:$0xff] %vm19, 0.0
    %vm32 = vcmask 254976
    %33 = vst.msk [vmem:[#allocation2 + $0x60] sm:$0x3] %vm32, 0.0
  $region17: #{forward.10} parent=0 // pred_fallthru
    _
  %v34 = vld [vmem:[#allocation2] sm:$0xff]
  %v35 = vld [vmem:[#allocation2 + $0x8] sm:$0xff]
  %v36 = vld [vmem:[#allocation2 + $0x10] sm:$0xff]
  %v37 = vld [vmem:[#allocation2 + $0x18] sm:$0xff]
  %v38 = vld [vmem:[#allocation2 + $0x20] sm:$0xff]
  %v39 = vld [vmem:[#allocation2 + $0x28] sm:$0xff]
  %v40 = vld [vmem:[#allocation2 + $0x30] sm:$0xff]
  %v41 = vld [vmem:[#allocation2 + $0x38] sm:$0xff]
  %v42 = vld [vmem:[#allocation2 + $0x40] sm:$0xff]
  %v43 = vld [vmem:[#allocation2 + $0x48] sm:$0xff]
  %v44 = vld [vmem:[#allocation2 + $0x50] sm:$0xff]
  %v45 = vld [vmem:[#allocation2 + $0x58] sm:$0xff]
  %v46 = vld [vmem:[#allocation2 + $0x60] sm:$0x3]
  %v47 = vld [vmem:[%s0] sm:$0xff]
  %v48 = vld [vmem:[%s0 + $0x8] sm:$0xf]
  %v49 = vld [vmem:[%s0 + $0xc] sm:$0xff]
  %v50 = vld [vmem:[%s0 + $0x14] sm:$0xf]
  %v51 = vld [vmem:[%s0 + $0x18] sm:$0xff]
  %v52 = vld [vmem:[%s0 + $0x20] sm:$0xf]
  %v53 = vld [vmem:[%s0 + $0x24] sm:$0xff]
  %v54 = vld [vmem:[%s0 + $0x2c] sm:$0xf]
  %v55 = vld [vmem:[%s0 + $0x30] sm:$0xff]
  %v56 = vld [vmem:[%s0 + $0x38] sm:$0xf]
  %v57 = vld [vmem:[%s0 + $0x3c] sm:$0xff]
  %v58 = vld [vmem:[%s0 + $0x44] sm:$0xf]
  %v59 = vld [vmem:[%s0 + $0x48] sm:$0xff]
  %v60 = vld [vmem:[%s0 + $0x50] sm:$0xf]
  %v61 = vld [vmem:[%s0 + $0x54] sm:$0xff]
  %v62 = vld [vmem:[%s0 + $0x5c] sm:$0xf]
  %v63 = vld [vmem:[%s0 + $0x60] sm:$0xff]
  %v64 = vld [vmem:[%s0 + $0x68] sm:$0xf]
  %v65 = vld [vmem:[%s0 + $0x6c] sm:$0xff]
  %v66 = vld [vmem:[%s0 + $0x74] sm:$0xf]
  %v67 = vld [vmem:[%s0 + $0x78] sm:$0xff]
  %v68 = vld [vmem:[%s0 + $0x80] sm:$0xf]
  %v69 = vld [vmem:[%s0 + $0x84] sm:$0xff]
  %v70 = vld [vmem:[%s0 + $0x8c] sm:$0xf]
  %v71 = vld [vmem:[%s0 + $0x90] sm:$0x11]
  %v72 = vld [vmem:[%s0 + $0x98] sm:$0x1]
  %v73 = vld [vmem:[%s1] sm:$0xf]
  %v74 = vld [vmem:[%s1 + $0x4] sm:$0xf]
  %v75 = vld [vmem:[%s1 + $0x8] sm:$0xf]
  %v76 = vld [vmem:[%s1 + $0xc] sm:$0xf]
  %v77 = vld [vmem:[%s1 + $0x10] sm:$0xf]
  %v78 = vld [vmem:[%s1 + $0x14] sm:$0xf]
  %v79 = vld [vmem:[%s1 + $0x18] sm:$0xf]
  %v80 = vld [vmem:[%s1 + $0x1c] sm:$0xf]
  %v81 = vld [vmem:[%s1 + $0x20] sm:$0xf]
  %v82 = vld [vmem:[%s1 + $0x24] sm:$0xf]
  %v83 = vld [vmem:[%s1 + $0x28] sm:$0xf]
  %v84 = vld [vmem:[%s1 + $0x2c] sm:$0xf]
  %v85 = vld [vmem:[%s1 + $0x30] sm:$0xf]
  %v86 = vld [vmem:[%s1 + $0x34] sm:$0xf]
  %v87 = vld [vmem:[%s1 + $0x38] sm:$0xf]
  %v88 = vld [vmem:[%s1 + $0x3c] sm:$0xf]
  %v89 = vld [vmem:[%s1 + $0x40] sm:$0xf]
  %v90 = vld [vmem:[%s1 + $0x44] sm:$0xf]
  %v91 = vld [vmem:[%s1 + $0x48] sm:$0xf]
  %v92 = vld [vmem:[%s1 + $0x4c] sm:$0xf]
  %v93 = vld [vmem:[%s1 + $0x50] sm:$0xf]
  %v94 = vld [vmem:[%s1 + $0x54] sm:$0xf]
  %v95 = vld [vmem:[%s1 + $0x58] sm:$0xf]
  %v96 = vld [vmem:[%s1 + $0x5c] sm:$0xf]
  %v97 = vld [vmem:[%s1 + $0x60] sm:$0xf]
  %v98 = vld [vmem:[%s1 + $0x64] sm:$0xf]
  %v99 = vld [vmem:[%s1 + $0x68] sm:$0xf]
  %v100 = vld [vmem:[%s1 + $0x6c] sm:$0xf]
  %v101 = vld [vmem:[%s1 + $0x70] sm:$0xf]
  %v102 = vld [vmem:[%s1 + $0x74] sm:$0xf]
  %v103 = vld [vmem:[%s1 + $0x78] sm:$0xf]
  %v104 = vld [vmem:[%s1 + $0x7c] sm:$0xf]
  %v105 = vld [vmem:[%s1 + $0x80] sm:$0xf]
  %v106 = vld [vmem:[%s1 + $0x84] sm:$0xf]
  %v107 = vld [vmem:[%s1 + $0x88] sm:$0xf]
  %v108 = vld [vmem:[%s1 + $0x8c] sm:$0xf]
  %v135 = vunpack.c.l.b16 %v47
  %v136 = vunpack.c.h.b16 %v47
  %v137 = vunpack.c.l.b16 %v48
  %v138 = vunpack.c.l.b16 %v49
  %v139 = vunpack.c.h.b16 %v49
  %v140 = vunpack.c.l.b16 %v50
  %v141 = vunpack.c.l.b16 %v51
  %v142 = vunpack.c.h.b16 %v51
  %v143 = vunpack.c.l.b16 %v52
  %v144 = vunpack.c.l.b16 %v53
  %v145 = vunpack.c.h.b16 %v53
  %v146 = vunpack.c.l.b16 %v54
  %v147 = vunpack.c.l.b16 %v55
  %v148 = vunpack.c.h.b16 %v55
  %v149 = vunpack.c.l.b16 %v56
  %v150 = vunpack.c.l.b16 %v57
  %v151 = vunpack.c.h.b16 %v57
  %v152 = vunpack.c.l.b16 %v58
  %v153 = vunpack.c.l.b16 %v59
  %v154 = vunpack.c.h.b16 %v59
  %v155 = vunpack.c.l.b16 %v60
  %v156 = vunpack.c.l.b16 %v61
  %v157 = vunpack.c.h.b16 %v61
  %v158 = vunpack.c.l.b16 %v62
  %v159 = vunpack.c.l.b16 %v63
  %v160 = vunpack.c.h.b16 %v63
  %v161 = vunpack.c.l.b16 %v64
  %v162 = vunpack.c.l.b16 %v65
  %v163 = vunpack.c.h.b16 %v65
  %v164 = vunpack.c.l.b16 %v66
  %v165 = vunpack.c.l.b16 %v67
  %v166 = vunpack.c.h.b16 %v67
  %v167 = vunpack.c.l.b16 %v68
  %v168 = vunpack.c.l.b16 %v69
  %v169 = vunpack.c.h.b16 %v69
  %v170 = vunpack.c.l.b16 %v70
  %v171 = vunpack.c.l.b16 %v71
  %v172 = vunpack.c.h.b16 %v71
  %v173 = vunpack.c.l.b16 %v72
  %v174 = vpack.c.b16 %v138, %v135
  %v175 = vpack.c.b16 %v139, %v136
  %v176 = vpack.c.b16 %v140, %v137
  %v177 = vpack.c.b16 %v144, %v141
  %v178 = vpack.c.b16 %v145, %v142
  %v179 = vpack.c.b16 %v146, %v143
  %v180 = vpack.c.b16 %v150, %v147
  %v181 = vpack.c.b16 %v151, %v148
  %v182 = vpack.c.b16 %v152, %v149
  %v183 = vpack.c.b16 %v156, %v153
  %v184 = vpack.c.b16 %v157, %v154
  %v185 = vpack.c.b16 %v158, %v155
  %v186 = vpack.c.b16 %v162, %v159
  %v187 = vpack.c.b16 %v163, %v160
  %v188 = vpack.c.b16 %v164, %v161
  %v189 = vpack.c.b16 %v168, %v165
  %v190 = vpack.c.b16 %v169, %v166
  %v191 = vpack.c.b16 %v170, %v167
  %v192 = vpack.c.b16 %v171, %v171
  %v193 = vpack.c.b16 %v172, %v172
  %v194 = vpack.c.b16 %v173, %v173
  %v245 = vunpack.c.l.b16 %v73
  %v246 = vunpack.c.l.b16 %v74
  %v247 = vunpack.c.l.b16 %v75
  %v248 = vunpack.c.l.b16 %v76
  %v249 = vunpack.c.l.b16 %v77
  %v250 = vunpack.c.l.b16 %v78
  %v251 = vunpack.c.l.b16 %v79
  %v252 = vunpack.c.l.b16 %v80
  %v253 = vunpack.c.l.b16 %v81
  %v254 = vunpack.c.l.b16 %v82
  %v255 = vunpack.c.l.b16 %v83
  %v256 = vunpack.c.l.b16 %v84
  %v257 = vunpack.c.l.b16 %v85
  %v258 = vunpack.c.l.b16 %v86
  %v259 = vunpack.c.l.b16 %v87
  %v260 = vunpack.c.l.b16 %v88
  %v261 = vunpack.c.l.b16 %v89
  %v262 = vunpack.c.l.b16 %v90
  %v263 = vunpack.c.l.b16 %v91
  %v264 = vunpack.c.l.b16 %v92
  %v265 = vunpack.c.l.b16 %v93
  %v266 = vunpack.c.l.b16 %v94
  %v267 = vunpack.c.l.b16 %v95
  %v268 = vunpack.c.l.b16 %v96
  %v269 = vunpack.c.l.b16 %v97
  %v270 = vunpack.c.l.b16 %v98
  %v271 = vunpack.c.l.b16 %v99
  %v272 = vunpack.c.l.b16 %v100
  %v273 = vunpack.c.l.b16 %v101
  %v274 = vunpack.c.l.b16 %v102
  %v275 = vunpack.c.l.b16 %v103
  %v276 = vunpack.c.l.b16 %v104
  %v277 = vunpack.c.l.b16 %v105
  %v278 = vunpack.c.l.b16 %v106
  %v279 = vunpack.c.l.b16 %v107
  %v280 = vunpack.c.l.b16 %v108
  %v281 = vpack.c.b16 %v246, %v245
  %v282 = vpack.c.b16 %v248, %v247
  %v283 = vpack.c.b16 %v250, %v249
  %v284 = vpack.c.b16 %v252, %v251
  %v285 = vpack.c.b16 %v254, %v253
  %v286 = vpack.c.b16 %v256, %v255
  %v287 = vpack.c.b16 %v258, %v257
  %v288 = vpack.c.b16 %v260, %v259
  %v289 = vpack.c.b16 %v262, %v261
  %v290 = vpack.c.b16 %v264, %v263
  %v291 = vpack.c.b16 %v266, %v265
  %v292 = vpack.c.b16 %v268, %v267
  %v293 = vpack.c.b16 %v270, %v269
  %v294 = vpack.c.b16 %v272, %v271
  %v295 = vpack.c.b16 %v274, %v273
  %v296 = vpack.c.b16 %v276, %v275
  %v297 = vpack.c.b16 %v278, %v277
  %v298 = vpack.c.b16 %v280, %v279
  %vm317 = vcmask 261120
  %v319 = vsel %vm317, %v176, 0
  %v322 = vsel %vm317, %v179, 0
  %v325 = vsel %vm317, %v182, 0
  %v328 = vsel %vm317, %v185, 0
  %v331 = vsel %vm317, %v188, 0
  %v334 = vsel %vm317, %v191, 0
  %v337 = vsel %vm317, %v194, 0
  %339 = vmatpush.bf16.msra.mxu0 %v288
  %340 = vmatpush.bf16.msra.mxu0 %v287
  %341 = vmatpush.bf16.msra.mxu0 %v286
  %342 = vmatpush.bf16.msra.mxu0 %v285
  %343 = vmatpush.bf16.msra.mxu0 %v284
  %344 = vmatpush.bf16.msra.mxu0 %v283
  %345 = vmatpush.bf16.msra.mxu0 %v282
  %346 = vmatpush.bf16.msra.mxu0 %v281
  %347 = vmatmul.bf16.gmra.mxu0 %v174
  %v348 = vpop.f32.mrf.mxu0
  %v349 = vadd.f32 0.0, %v348
  %v350 = vpop.f32.mrf.mxu0
  %v351 = vadd.f32 0.0, %v350
  %352 = vmatmul.bf16.gmra.mxu0 %v177
  %v353 = vpop.f32.mrf.mxu0
  %v354 = vadd.f32 0.0, %v353
  %v355 = vpop.f32.mrf.mxu0
  %v356 = vadd.f32 0.0, %v355
  %357 = vmatmul.bf16.gmra.mxu0 %v180
  %v358 = vpop.f32.mrf.mxu0
  %v359 = vadd.f32 0.0, %v358
  %v360 = vpop.f32.mrf.mxu0
  %v361 = vadd.f32 0.0, %v360
  %362 = vmatmul.bf16.gmra.mxu0 %v183
  %v363 = vpop.f32.mrf.mxu0
  %v364 = vadd.f32 0.0, %v363
  %v365 = vpop.f32.mrf.mxu0
  %v366 = vadd.f32 0.0, %v365
  %367 = vmatmul.bf16.gmra.mxu0 %v186
  %v368 = vpop.f32.mrf.mxu0
  %v369 = vadd.f32 0.0, %v368
  %v370 = vpop.f32.mrf.mxu0
  %v371 = vadd.f32 0.0, %v370
  %372 = vmatmul.bf16.gmra.mxu0 %v189
  %v373 = vpop.f32.mrf.mxu0
  %v374 = vadd.f32 0.0, %v373
  %v375 = vpop.f32.mrf.mxu0
  %v376 = vadd.f32 0.0, %v375
  %377 = vmatmul.bf16.gmra.mxu0 %v192
  %v378 = vpop.f32.mrf.mxu0
  %v379 = vadd.f32 0.0, %v378
  %v380 = vpop.f32.mrf.mxu0
  %381 = vdwg.mxu0
  %382 = vmatpush.bf16.msra.mxu0 %v296
  %383 = vmatpush.bf16.msra.mxu0 %v295
  %384 = vmatpush.bf16.msra.mxu0 %v294
  %385 = vmatpush.bf16.msra.mxu0 %v293
  %386 = vmatpush.bf16.msra.mxu0 %v292
  %387 = vmatpush.bf16.msra.mxu0 %v291
  %388 = vmatpush.bf16.msra.mxu0 %v290
  %389 = vmatpush.bf16.msra.mxu0 %v289
  %390 = vmatmul.bf16.gmra.mxu0 %v175
  %v391 = vpop.f32.mrf.mxu0
  %v392 = vadd.f32 %v349, %v391
  %v393 = vpop.f32.mrf.mxu0
  %v394 = vadd.f32 %v351, %v393
  %395 = vmatmul.bf16.gmra.mxu0 %v178
  %v396 = vpop.f32.mrf.mxu0
  %v397 = vadd.f32 %v354, %v396
  %v398 = vpop.f32.mrf.mxu0
  %v399 = vadd.f32 %v356, %v398
  %400 = vmatmul.bf16.gmra.mxu0 %v181
  %v401 = vpop.f32.mrf.mxu0
  %v402 = vadd.f32 %v359, %v401
  %v403 = vpop.f32.mrf.mxu0
  %v404 = vadd.f32 %v361, %v403
  %405 = vmatmul.bf16.gmra.mxu0 %v184
  %v406 = vpop.f32.mrf.mxu0
  %v407 = vadd.f32 %v364, %v406
  %v408 = vpop.f32.mrf.mxu0
  %v409 = vadd.f32 %v366, %v408
  %410 = vmatmul.bf16.gmra.mxu0 %v187
  %v411 = vpop.f32.mrf.mxu0
  %v412 = vadd.f32 %v369, %v411
  %v413 = vpop.f32.mrf.mxu0
  %v414 = vadd.f32 %v371, %v413
  %415 = vmatmul.bf16.gmra.mxu0 %v190
  %v416 = vpop.f32.mrf.mxu0
  %v417 = vadd.f32 %v374, %v416
  %v418 = vpop.f32.mrf.mxu0
  %v419 = vadd.f32 %v376, %v418
  %420 = vmatmul.bf16.gmra.mxu0 %v193
  %v421 = vpop.f32.mrf.mxu0
  %v422 = vadd.f32 %v379, %v421
  %v423 = vpop.f32.mrf.mxu0
  %424 = vdwg.mxu0
  %425 = vmatpush.bf16.msra.mxu0 0
  %426 = vmatpush.bf16.msra.mxu0 0
  %427 = vmatpush.bf16.msra.mxu0 0
  %428 = vmatpush.bf16.msra.mxu0 0
  %429 = vmatpush.bf16.msra.mxu0 0
  %430 = vmatpush.bf16.msra.mxu0 0
  %431 = vmatpush.bf16.msra.mxu0 %v298
  %432 = vmatpush.bf16.msra.mxu0 %v297
  %433 = vmatmul.bf16.gmra.mxu0 %v319
  %v434 = vpop.f32.mrf.mxu0
  %v435 = vadd.f32 %v392, %v434
  %v436 = vpop.f32.mrf.mxu0
  %v437 = vadd.f32 %v394, %v436
  %438 = vmatmul.bf16.gmra.mxu0 %v322
  %v439 = vpop.f32.mrf.mxu0
  %v440 = vadd.f32 %v397, %v439
  %v441 = vpop.f32.mrf.mxu0
  %v442 = vadd.f32 %v399, %v441
  %443 = vmatmul.bf16.gmra.mxu0 %v325
  %v444 = vpop.f32.mrf.mxu0
  %v445 = vadd.f32 %v402, %v444
  %v446 = vpop.f32.mrf.mxu0
  %v447 = vadd.f32 %v404, %v446
  %448 = vmatmul.bf16.gmra.mxu0 %v328
  %v449 = vpop.f32.mrf.mxu0
  %v450 = vadd.f32 %v407, %v449
  %v451 = vpop.f32.mrf.mxu0
  %v452 = vadd.f32 %v409, %v451
  %453 = vmatmul.bf16.gmra.mxu0 %v331
  %v454 = vpop.f32.mrf.mxu0
  %v455 = vadd.f32 %v412, %v454
  %v456 = vpop.f32.mrf.mxu0
  %v457 = vadd.f32 %v414, %v456
  %458 = vmatmul.bf16.gmra.mxu0 %v334
  %v459 = vpop.f32.mrf.mxu0
  %v460 = vadd.f32 %v417, %v459
  %v461 = vpop.f32.mrf.mxu0
  %v462 = vadd.f32 %v419, %v461
  %463 = vmatmul.bf16.gmra.mxu0 %v337
  %v464 = vpop.f32.mrf.mxu0
  %v465 = vadd.f32 %v422, %v464
  %v466 = vpop.f32.mrf.mxu0
  %467 = vdwg.mxu0
  %v468 = vadd.f32 %v34, %v435
  %v469 = vadd.f32 %v35, %v437
  %v470 = vadd.f32 %v36, %v440
  %v471 = vadd.f32 %v37, %v442
  %v472 = vadd.f32 %v38, %v445
  %v473 = vadd.f32 %v39, %v447
  %v474 = vadd.f32 %v40, %v450
  %v475 = vadd.f32 %v41, %v452
  %v476 = vadd.f32 %v42, %v455
  %v477 = vadd.f32 %v43, %v457
  %v478 = vadd.f32 %v44, %v460
  %v479 = vadd.f32 %v45, %v462
  %v480 = vadd.f32 %v46, %v465
  %481 = vst.msk [vmem:[#allocation2] sm:$0xff] %vm317, %v468
  %482 = vst.msk [vmem:[#allocation2 + $0x8] sm:$0xff] %vm317, %v469
  %483 = vst.msk [vmem:[#allocation2 + $0x10] sm:$0xff] %vm317, %v470
  %484 = vst.msk [vmem:[#allocation2 + $0x18] sm:$0xff] %vm317, %v471
  %485 = vst.msk [vmem:[#allocation2 + $0x20] sm:$0xff] %vm317, %v472
  %486 = vst.msk [vmem:[#allocation2 + $0x28] sm:$0xff] %vm317, %v473
  %487 = vst.msk [vmem:[#allocation2 + $0x30] sm:$0xff] %vm317, %v474
  %488 = vst.msk [vmem:[#allocation2 + $0x38] sm:$0xff] %vm317, %v475
  %489 = vst.msk [vmem:[#allocation2 + $0x40] sm:$0xff] %vm317, %v476
  %490 = vst.msk [vmem:[#allocation2 + $0x48] sm:$0xff] %vm317, %v477
  %491 = vst.msk [vmem:[#allocation2 + $0x50] sm:$0xff] %vm317, %v478
  %492 = vst.msk [vmem:[#allocation2 + $0x58] sm:$0xff] %vm317, %v479
  %vm493 = vcmask 254976
  %494 = vst.msk [vmem:[#allocation2 + $0x60] sm:$0x3] %vm493, %v480
  // Predicated region
  $region18: #{forward.10} parent=0 // pred_check
    %p495 = pneg %p15
  $region19: #{forward.10} parent=0 // pred_check_branch
    %497 = sbr.rel (%p495) target = $region21
  $region20: #{forward.10} parent=0 // pred_region
    %v498 = vld [vmem:[#allocation2] sm:$0xff]
    %v499 = vld [vmem:[#allocation2 + $0x8] sm:$0xff]
    %v500 = vld [vmem:[#allocation2 + $0x10] sm:$0xff]
    %v501 = vld [vmem:[#allocation2 + $0x18] sm:$0xff]
    %v502 = vld [vmem:[#allocation2 + $0x20] sm:$0xff]
    %v503 = vld [vmem:[#allocation2 + $0x28] sm:$0xff]
    %v504 = vld [vmem:[#allocation2 + $0x30] sm:$0xff]
    %v505 = vld [vmem:[#allocation2 + $0x38] sm:$0xff]
    %v506 = vld [vmem:[#allocation2 + $0x40] sm:$0xff]
    %v507 = vld [vmem:[#allocation2 + $0x48] sm:$0xff]
    %v508 = vld [vmem:[#allocation2 + $0x50] sm:$0xff]
    %v509 = vld [vmem:[#allocation2 + $0x58] sm:$0xff]
    %v510 = vld [vmem:[#allocation2 + $0x60] sm:$0x3]
    %v511 = vld [vmem:[%s2] sm:$0x1]
    %v513 = vperm.slane %v511, 0
    %v515 = vadd.f32 %v498, %v513
    %v516 = vadd.f32 %v499, %v513
    %v517 = vadd.f32 %v500, %v513
    %v518 = vadd.f32 %v501, %v513
    %v519 = vadd.f32 %v502, %v513
    %v520 = vadd.f32 %v503, %v513
    %v521 = vadd.f32 %v504, %v513
    %v522 = vadd.f32 %v505, %v513
    %v523 = vadd.f32 %v506, %v513
    %v524 = vadd.f32 %v507, %v513
    %v525 = vadd.f32 %v508, %v513
    %v526 = vadd.f32 %v509, %v513
    %v527 = vadd.f32 %v510, %v513
    %v528 = vmax.f32 %v515, 0.0
    %v529 = vmax.f32 %v516, 0.0
    %v530 = vmax.f32 %v517, 0.0
    %v531 = vmax.f32 %v518, 0.0
    %v532 = vmax.f32 %v519, 0.0
    %v533 = vmax.f32 %v520, 0.0
    %v534 = vmax.f32 %v521, 0.0
    %v535 = vmax.f32 %v522, 0.0
    %v536 = vmax.f32 %v523, 0.0
    %v537 = vmax.f32 %v524, 0.0
    %v538 = vmax.f32 %v525, 0.0
    %v539 = vmax.f32 %v526, 0.0
    %v540 = vmax.f32 %v527, 0.0
    %v541 = vpack.c.bf16 %v528, %v528
    %v542 = vpack.c.bf16 %v529, %v529
    %v543 = vpack.c.bf16 %v530, %v530
    %v544 = vpack.c.bf16 %v531, %v531
    %v545 = vpack.c.bf16 %v532, %v532
    %v546 = vpack.c.bf16 %v533, %v533
    %v547 = vpack.c.bf16 %v534, %v534
    %v548 = vpack.c.bf16 %v535, %v535
    %v549 = vpack.c.bf16 %v536, %v536
    %v550 = vpack.c.bf16 %v537, %v537
    %v551 = vpack.c.bf16 %v538, %v538
    %v552 = vpack.c.bf16 %v539, %v539
    %v553 = vpack.c.bf16 %v540, %v540
    %vm554 = vcmask 257024
    %555 = vst.msk [vmem:[%s3] sm:$0xf] %vm554, %v541
    %556 = vst.msk [vmem:[%s3 + $0x4] sm:$0xf] %vm554, %v542
    %557 = vst.msk [vmem:[%s3 + $0x8] sm:$0xf] %vm554, %v543
    %558 = vst.msk [vmem:[%s3 + $0xc] sm:$0xf] %vm554, %v544
    %559 = vst.msk [vmem:[%s3 + $0x10] sm:$0xf] %vm554, %v545
    %560 = vst.msk [vmem:[%s3 + $0x14] sm:$0xf] %vm554, %v546
    %561 = vst.msk [vmem:[%s3 + $0x18] sm:$0xf] %vm554, %v547
    %562 = vst.msk [vmem:[%s3 + $0x1c] sm:$0xf] %vm554, %v548
    %563 = vst.msk [vmem:[%s3 + $0x20] sm:$0xf] %vm554, %v549
    %564 = vst.msk [vmem:[%s3 + $0x24] sm:$0xf] %vm554, %v550
    %565 = vst.msk [vmem:[%s3 + $0x28] sm:$0xf] %vm554, %v551
    %566 = vst.msk [vmem:[%s3 + $0x2c] sm:$0xf] %vm554, %v552
    %vm567 = vcmask 253952
    %568 = vst.msk [vmem:[%s3 + $0x30] sm:$0x1] %vm567, %v553
  $region21: #{forward.10} parent=0 // pred_fallthru
    _
  // Predicated region
  $region22: #{forward.10} parent=0 // pred_check
    _
  $region23: #{forward.10} parent=0 // pred_check_branch
    %570 = sbr.rel (0) target = $region25
  $region24: #{forward.10} parent=0 // pred_region
    _
  $region25: #{forward.10} parent=0 // pred_fallthru
    _
  // Predicated region
  $region26: #{forward.10} parent=0 // pred_check
    _
  $region27: #{forward.10} parent=0 // pred_check_branch
    %572 = sbr.rel (0) target = $region29
  $region28: #{forward.10} parent=0 // pred_region
    _
  $region29: #{forward.10} parent=0 // pred_fallthru
    _

// kernel: forward.11
$region0: #{forward.11}
  #allocation0 [shape = 'u32[]', space=smem, size = 0x4, offset = 0x4, fixed_abs, tag = 'smem constant byte address 0x4 - core index']
  #allocation1 [shape = 'u32[72,128]{1,0:T(1,128)}', space=vmem, size = 0x9000, scoped, tag = 'internal scratch']
  #allocation2 [shape = 'f32[128,16]{1,0:T(8,128)}', space=vmem, size = 0x10000, scoped, tag = 'scratch operand']
  %s0 = inlined_call_operand.vmem [shape: bf16[128,128], index: 0, kind: input, shape index: {}]
  %s1 = inlined_call_operand.vmem [shape: bf16[128,16], index: 1, kind: input, shape index: {}]
  %s2 = inlined_call_operand.vmem [shape: f32[1,16], index: 2, kind: input, shape index: {}]
  %s3 = inlined_call_operand.vmem [shape: f32[128,16], index: 3, kind: output, shape index: {}]
  %s4 = sld [smem:[#allocation0]]
  $region30: #{forward.11} parent=0
    _
  %s6 = ssub.s32 1, %s4
  %s7 = scalar_select 0, %s6, %s4
  // Predicated region
  $region2: #{forward.11} parent=0 // pred_check
    _
  $region3: #{forward.11} parent=0 // pred_check_branch
    %9 = sbr.rel (0) target = $region5
  $region4: #{forward.11} parent=0 // pred_region
    _
  $region5: #{forward.11} parent=0 // pred_fallthru
    _
  // Predicated region
  $region6: #{forward.11} parent=0 // pred_check
    _
  $region7: #{forward.11} parent=0 // pred_check_branch
    %11 = sbr.rel (0) target = $region9
  $region8: #{forward.11} parent=0 // pred_region
    _
  $region9: #{forward.11} parent=0 // pred_fallthru
    _
  // Predicated region
  $region10: #{forward.11} parent=0 // pred_check
    _
  $region11: #{forward.11} parent=0 // pred_check_branch
    %13 = sbr.rel (0) target = $region13
  $region12: #{forward.11} parent=0 // pred_region
    _
  $region13: #{forward.11} parent=0 // pred_fallthru
    _
  %p14 = scmp.eq.s32.totalorder 0, 0
  // Predicated region
  $region14: #{forward.11} parent=0 // pred_check
    %p15 = pneg %p14
  $region15: #{forward.11} parent=0 // pred_check_branch
    %17 = sbr.rel (%p15) target = $region17
  $region16: #{forward.11} parent=0 // pred_region
    %vm18 = vcmask 130048
    %19 = vst.msk [vmem:[#allocation2] sm:$0xff] %vm18, 0.0
    %20 = vst.msk [vmem:[#allocation2 + $0x8] sm:$0xff] %vm18, 0.0
    %21 = vst.msk [vmem:[#allocation2 + $0x10] sm:$0xff] %vm18, 0.0
    %22 = vst.msk [vmem:[#allocation2 + $0x18] sm:$0xff] %vm18, 0.0
    %23 = vst.msk [vmem:[#allocation2 + $0x20] sm:$0xff] %vm18, 0.0
    %24 = vst.msk [vmem:[#allocation2 + $0x28] sm:$0xff] %vm18, 0.0
    %25 = vst.msk [vmem:[#allocation2 + $0x30] sm:$0xff] %vm18, 0.0
    %26 = vst.msk [vmem:[#allocation2 + $0x38] sm:$0xff] %vm18, 0.0
    %27 = vst.msk [vmem:[#allocation2 + $0x40] sm:$0xff] %vm18, 0.0
    %28 = vst.msk [vmem:[#allocation2 + $0x48] sm:$0xff] %vm18, 0.0
    %29 = vst.msk [vmem:[#allocation2 + $0x50] sm:$0xff] %vm18, 0.0
    %30 = vst.msk [vmem:[#allocation2 + $0x58] sm:$0xff] %vm18, 0.0
    %31 = vst.msk [vmem:[#allocation2 + $0x60] sm:$0xff] %vm18, 0.0
    %32 = vst.msk [vmem:[#allocation2 + $0x68] sm:$0xff] %vm18, 0.0
    %33 = vst.msk [vmem:[#allocation2 + $0x70] sm:$0xff] %vm18, 0.0
    %34 = vst.msk [vmem:[#allocation2 + $0x78] sm:$0xff] %vm18, 0.0
  $region17: #{forward.11} parent=0 // pred_fallthru
    _
  %v35 = vld [vmem:[#allocation2] sm:$0xff]
  %v36 = vld [vmem:[#allocation2 + $0x8] sm:$0xff]
  %v37 = vld [vmem:[#allocation2 + $0x10] sm:$0xff]
  %v38 = vld [vmem:[#allocation2 + $0x18] sm:$0xff]
  %v39 = vld [vmem:[#allocation2 + $0x20] sm:$0xff]
  %v40 = vld [vmem:[#allocation2 + $0x28] sm:$0xff]
  %v41 = vld [vmem:[#allocation2 + $0x30] sm:$0xff]
  %v42 = vld [vmem:[#allocation2 + $0x38] sm:$0xff]
  %v43 = vld [vmem:[#allocation2 + $0x40] sm:$0xff]
  %v44 = vld [vmem:[#allocation2 + $0x48] sm:$0xff]
  %v45 = vld [vmem:[#allocation2 + $0x50] sm:$0xff]
  %v46 = vld [vmem:[#allocation2 + $0x58] sm:$0xff]
  %v47 = vld [vmem:[#allocation2 + $0x60] sm:$0xff]
  %v48 = vld [vmem:[#allocation2 + $0x68] sm:$0xff]
  %v49 = vld [vmem:[#allocation2 + $0x70] sm:$0xff]
  %v50 = vld [vmem:[#allocation2 + $0x78] sm:$0xff]
  %v51 = vld [vmem:[%s0] sm:$0xf]
  %v52 = vld [vmem:[%s0 + $0x4] sm:$0xf]
  %v53 = vld [vmem:[%s0 + $0x8] sm:$0xf]
  %v54 = vld [vmem:[%s0 + $0xc] sm:$0xf]
  %v55 = vld [vmem:[%s0 + $0x10] sm:$0xf]
  %v56 = vld [vmem:[%s0 + $0x14] sm:$0xf]
  %v57 = vld [vmem:[%s0 + $0x18] sm:$0xf]
  %v58 = vld [vmem:[%s0 + $0x1c] sm:$0xf]
  %v59 = vld [vmem:[%s0 + $0x20] sm:$0xf]
  %v60 = vld [vmem:[%s0 + $0x24] sm:$0xf]
  %v61 = vld [vmem:[%s0 + $0x28] sm:$0xf]
  %v62 = vld [vmem:[%s0 + $0x2c] sm:$0xf]
  %v63 = vld [vmem:[%s0 + $0x30] sm:$0xf]
  %v64 = vld [vmem:[%s0 + $0x34] sm:$0xf]
  %v65 = vld [vmem:[%s0 + $0x38] sm:$0xf]
  %v66 = vld [vmem:[%s0 + $0x3c] sm:$0xf]
  %v67 = vld [vmem:[%s1] sm:$0xf]
  %v68 = vld [vmem:[%s1 + $0x4] sm:$0xf]
  %v69 = vld [vmem:[%s1 + $0x8] sm:$0xf]
  %v70 = vld [vmem:[%s1 + $0xc] sm:$0xf]
  %v71 = vld [vmem:[%s1 + $0x10] sm:$0xf]
  %v72 = vld [vmem:[%s1 + $0x14] sm:$0xf]
  %v73 = vld [vmem:[%s1 + $0x18] sm:$0xf]
  %v74 = vld [vmem:[%s1 + $0x1c] sm:$0xf]
  %v75 = vld [vmem:[%s1 + $0x20] sm:$0xf]
  %v76 = vld [vmem:[%s1 + $0x24] sm:$0xf]
  %v77 = vld [vmem:[%s1 + $0x28] sm:$0xf]
  %v78 = vld [vmem:[%s1 + $0x2c] sm:$0xf]
  %v79 = vld [vmem:[%s1 + $0x30] sm:$0xf]
  %v80 = vld [vmem:[%s1 + $0x34] sm:$0xf]
  %v81 = vld [vmem:[%s1 + $0x38] sm:$0xf]
  %v82 = vld [vmem:[%s1 + $0x3c] sm:$0xf]
  %v99 = vunpack.c.l.b16 %v51
  %v100 = vunpack.c.l.b16 %v52
  %v101 = vunpack.c.l.b16 %v53
  %v102 = vunpack.c.l.b16 %v54
  %v103 = vunpack.c.l.b16 %v55
  %v104 = vunpack.c.l.b16 %v56
  %v105 = vunpack.c.l.b16 %v57
  %v106 = vunpack.c.l.b16 %v58
  %v107 = vunpack.c.l.b16 %v59
  %v108 = vunpack.c.l.b16 %v60
  %v109 = vunpack.c.l.b16 %v61
  %v110 = vunpack.c.l.b16 %v62
  %v111 = vunpack.c.l.b16 %v63
  %v112 = vunpack.c.l.b16 %v64
  %v113 = vunpack.c.l.b16 %v65
  %v114 = vunpack.c.l.b16 %v66
  %v115 = vpack.c.b16 %v100, %v99
  %v116 = vpack.c.b16 %v102, %v101
  %v117 = vpack.c.b16 %v104, %v103
  %v118 = vpack.c.b16 %v106, %v105
  %v119 = vpack.c.b16 %v108, %v107
  %v120 = vpack.c.b16 %v110, %v109
  %v121 = vpack.c.b16 %v112, %v111
  %v122 = vpack.c.b16 %v114, %v113
  %v147 = vunpack.c.l.b16 %v67
  %v148 = vunpack.c.l.b16 %v68
  %v149 = vunpack.c.l.b16 %v69
  %v150 = vunpack.c.l.b16 %v70
  %v151 = vunpack.c.l.b16 %v71
  %v152 = vunpack.c.l.b16 %v72
  %v153 = vunpack.c.l.b16 %v73
  %v154 = vunpack.c.l.b16 %v74
  %v155 = vunpack.c.l.b16 %v75
  %v156 = vunpack.c.l.b16 %v76
  %v157 = vunpack.c.l.b16 %v77
  %v158 = vunpack.c.l.b16 %v78
  %v159 = vunpack.c.l.b16 %v79
  %v160 = vunpack.c.l.b16 %v80
  %v161 = vunpack.c.l.b16 %v81
  %v162 = vunpack.c.l.b16 %v82
  %v163 = vpack.c.b16 %v148, %v147
  %v164 = vpack.c.b16 %v150, %v149
  %v165 = vpack.c.b16 %v152, %v151
  %v166 = vpack.c.b16 %v154, %v153
  %v167 = vpack.c.b16 %v156, %v155
  %v168 = vpack.c.b16 %v158, %v157
  %v169 = vpack.c.b16 %v160, %v159
  %v170 = vpack.c.b16 %v162, %v161
  %179 = vmatpush.bf16.msra.mxu0 %v170
  %180 = vmatpush.bf16.msra.mxu0 %v169
  %181 = vmatpush.bf16.msra.mxu0 %v168
  %182 = vmatpush.bf16.msra.mxu0 %v167
  %183 = vmatpush.bf16.msra.mxu0 %v166
  %184 = vmatpush.bf16.msra.mxu0 %v165
  %185 = vmatpush.bf16.msra.mxu0 %v164
  %186 = vmatpush.bf16.msra.mxu0 %v163
  %187 = vmatmul.bf16.gmra.mxu0 %v115
  %v188 = vpop.f32.mrf.mxu0
  %v189 = vadd.f32 0.0, %v188
  %v190 = vpop.f32.mrf.mxu0
  %v191 = vadd.f32 0.0, %v190
  %192 = vmatmul.bf16.gmra.mxu0 %v116
  %v193 = vpop.f32.mrf.mxu0
  %v194 = vadd.f32 0.0, %v193
  %v195 = vpop.f32.mrf.mxu0
  %v196 = vadd.f32 0.0, %v195
  %197 = vmatmul.bf16.gmra.mxu0 %v117
  %v198 = vpop.f32.mrf.mxu0
  %v199 = vadd.f32 0.0, %v198
  %v200 = vpop.f32.mrf.mxu0
  %v201 = vadd.f32 0.0, %v200
  %202 = vmatmul.bf16.gmra.mxu0 %v118
  %v203 = vpop.f32.mrf.mxu0
  %v204 = vadd.f32 0.0, %v203
  %v205 = vpop.f32.mrf.mxu0
  %v206 = vadd.f32 0.0, %v205
  %207 = vmatmul.bf16.gmra.mxu0 %v119
  %v208 = vpop.f32.mrf.mxu0
  %v209 = vadd.f32 0.0, %v208
  %v210 = vpop.f32.mrf.mxu0
  %v211 = vadd.f32 0.0, %v210
  %212 = vmatmul.bf16.gmra.mxu0 %v120
  %v213 = vpop.f32.mrf.mxu0
  %v214 = vadd.f32 0.0, %v213
  %v215 = vpop.f32.mrf.mxu0
  %v216 = vadd.f32 0.0, %v215
  %217 = vmatmul.bf16.gmra.mxu0 %v121
  %v218 = vpop.f32.mrf.mxu0
  %v219 = vadd.f32 0.0, %v218
  %v220 = vpop.f32.mrf.mxu0
  %v221 = vadd.f32 0.0, %v220
  %222 = vmatmul.bf16.gmra.mxu0 %v122
  %v223 = vpop.f32.mrf.mxu0
  %v224 = vadd.f32 0.0, %v223
  %v225 = vpop.f32.mrf.mxu0
  %v226 = vadd.f32 0.0, %v225
  %227 = vdwg.mxu0
  %v228 = vadd.f32 %v35, %v189
  %v229 = vadd.f32 %v36, %v191
  %v230 = vadd.f32 %v37, %v194
  %v231 = vadd.f32 %v38, %v196
  %v232 = vadd.f32 %v39, %v199
  %v233 = vadd.f32 %v40, %v201
  %v234 = vadd.f32 %v41, %v204
  %v235 = vadd.f32 %v42, %v206
  %v236 = vadd.f32 %v43, %v209
  %v237 = vadd.f32 %v44, %v211
  %v238 = vadd.f32 %v45, %v214
  %v239 = vadd.f32 %v46, %v216
  %v240 = vadd.f32 %v47, %v219
  %v241 = vadd.f32 %v48, %v221
  %v242 = vadd.f32 %v49, %v224
  %v243 = vadd.f32 %v50, %v226
  %vm244 = vcmask 130048
  %245 = vst.msk [vmem:[#allocation2] sm:$0xff] %vm244, %v228
  %246 = vst.msk [vmem:[#allocation2 + $0x8] sm:$0xff] %vm244, %v229
  %247 = vst.msk [vmem:[#allocation2 + $0x10] sm:$0xff] %vm244, %v230
  %248 = vst.msk [vmem:[#allocation2 + $0x18] sm:$0xff] %vm244, %v231
  %249 = vst.msk [vmem:[#allocation2 + $0x20] sm:$0xff] %vm244, %v232
  %250 = vst.msk [vmem:[#allocation2 + $0x28] sm:$0xff] %vm244, %v233
  %251 = vst.msk [vmem:[#allocation2 + $0x30] sm:$0xff] %vm244, %v234
  %252 = vst.msk [vmem:[#allocation2 + $0x38] sm:$0xff] %vm244, %v235
  %253 = vst.msk [vmem:[#allocation2 + $0x40] sm:$0xff] %vm244, %v236
  %254 = vst.msk [vmem:[#allocation2 + $0x48] sm:$0xff] %vm244, %v237
  %255 = vst.msk [vmem:[#allocation2 + $0x50] sm:$0xff] %vm244, %v238
  %256 = vst.msk [vmem:[#allocation2 + $0x58] sm:$0xff] %vm244, %v239
  %257 = vst.msk [vmem:[#allocation2 + $0x60] sm:$0xff] %vm244, %v240
  %258 = vst.msk [vmem:[#allocation2 + $0x68] sm:$0xff] %vm244, %v241
  %259 = vst.msk [vmem:[#allocation2 + $0x70] sm:$0xff] %vm244, %v242
  %260 = vst.msk [vmem:[#allocation2 + $0x78] sm:$0xff] %vm244, %v243
  // Predicated region
  $region18: #{forward.11} parent=0 // pred_check
    %p261 = pneg %p14
  $region19: #{forward.11} parent=0 // pred_check_branch
    %263 = sbr.rel (%p261) target = $region21
  $region20: #{forward.11} parent=0 // pred_region
    %v264 = vld [vmem:[#allocation2] sm:$0xff]
    %v265 = vld [vmem:[#allocation2 + $0x8] sm:$0xff]
    %v266 = vld [vmem:[#allocation2 + $0x10] sm:$0xff]
    %v267 = vld [vmem:[#allocation2 + $0x18] sm:$0xff]
    %v268 = vld [vmem:[#allocation2 + $0x20] sm:$0xff]
    %v269 = vld [vmem:[#allocation2 + $0x28] sm:$0xff]
    %v270 = vld [vmem:[#allocation2 + $0x30] sm:$0xff]
    %v271 = vld [vmem:[#allocation2 + $0x38] sm:$0xff]
    %v272 = vld [vmem:[#allocation2 + $0x40] sm:$0xff]
    %v273 = vld [vmem:[#allocation2 + $0x48] sm:$0xff]
    %v274 = vld [vmem:[#allocation2 + $0x50] sm:$0xff]
    %v275 = vld [vmem:[#allocation2 + $0x58] sm:$0xff]
    %v276 = vld [vmem:[#allocation2 + $0x60] sm:$0xff]
    %v277 = vld [vmem:[#allocation2 + $0x68] sm:$0xff]
    %v278 = vld [vmem:[#allocation2 + $0x70] sm:$0xff]
    %v279 = vld [vmem:[#allocation2 + $0x78] sm:$0xff]
    %v280 = vld [vmem:[%s2] sm:$0x1]
    %v282 = vperm.slane %v280, 0
    %v284 = vadd.f32 %v264, %v282
    %v285 = vadd.f32 %v265, %v282
    %v286 = vadd.f32 %v266, %v282
    %v287 = vadd.f32 %v267, %v282
    %v288 = vadd.f32 %v268, %v282
    %v289 = vadd.f32 %v269, %v282
    %v290 = vadd.f32 %v270, %v282
    %v291 = vadd.f32 %v271, %v282
    %v292 = vadd.f32 %v272, %v282
    %v293 = vadd.f32 %v273, %v282
    %v294 = vadd.f32 %v274, %v282
    %v295 = vadd.f32 %v275, %v282
    %v296 = vadd.f32 %v276, %v282
    %v297 = vadd.f32 %v277, %v282
    %v298 = vadd.f32 %v278, %v282
    %v299 = vadd.f32 %v279, %v282
    %300 = vst.msk [vmem:[%s3] sm:$0xff] %vm244, %v284
    %301 = vst.msk [vmem:[%s3 + $0x8] sm:$0xff] %vm244, %v285
    %302 = vst.msk [vmem:[%s3 + $0x10] sm:$0xff] %vm244, %v286
    %303 = vst.msk [vmem:[%s3 + $0x18] sm:$0xff] %vm244, %v287
    %304 = vst.msk [vmem:[%s3 + $0x20] sm:$0xff] %vm244, %v288
    %305 = vst.msk [vmem:[%s3 + $0x28] sm:$0xff] %vm244, %v289
    %306 = vst.msk [vmem:[%s3 + $0x30] sm:$0xff] %vm244, %v290
    %307 = vst.msk [vmem:[%s3 + $0x38] sm:$0xff] %vm244, %v291
    %308 = vst.msk [vmem:[%s3 + $0x40] sm:$0xff] %vm244, %v292
    %309 = vst.msk [vmem:[%s3 + $0x48] sm:$0xff] %vm244, %v293
    %310 = vst.msk [vmem:[%s3 + $0x50] sm:$0xff] %vm244, %v294
    %311 = vst.msk [vmem:[%s3 + $0x58] sm:$0xff] %vm244, %v295
    %312 = vst.msk [vmem:[%s3 + $0x60] sm:$0xff] %vm244, %v296
    %313 = vst.msk [vmem:[%s3 + $0x68] sm:$0xff] %vm244, %v297
    %314 = vst.msk [vmem:[%s3 + $0x70] sm:$0xff] %vm244, %v298
    %315 = vst.msk [vmem:[%s3 + $0x78] sm:$0xff] %vm244, %v299
  $region21: #{forward.11} parent=0 // pred_fallthru
    _
  // Predicated region
  $region22: #{forward.11} parent=0 // pred_check
    _
  $region23: #{forward.11} parent=0 // pred_check_branch
    %317 = sbr.rel (0) target = $region25
  $region24: #{forward.11} parent=0 // pred_region
    _
  $region25: #{forward.11} parent=0 // pred_fallthru
    _
  // Predicated region
  $region26: #{forward.11} parent=0 // pred_check
    _
  $region27: #{forward.11} parent=0 // pred_check_branch
    %319 = sbr.rel (0) target = $region29
  $region28: #{forward.11} parent=0 // pred_region
    _
  $region29: #{forward.11} parent=0 // pred_fallthru
    _

</llo_original>
